<compile_context>
chip_gen: v7x
topology: tpu7x:2x2x1
jax: 0.10.0
libtpu: 0.0.40
codegen_flags: <defaults>
</compile_context>

<pallas_src>
import functools

import jax
import jax.numpy as jnp
from jax import lax
from jax.experimental import pallas as pl
from jax.experimental.pallas import tpu as pltpu


def _round_up(x, m):
  return ((x + m - 1) // m) * m


def _gated_pixelcnn_kernel(
    vin_ref, hin_ref, cond_v_ref, cond_h_ref,
    wv_ref, wh_ref, wv2h_ref, wres_ref, bv2h_ref, bres_ref,
    vout_ref, hout_ref,
    vps_ref, hps_ref,
    *, row_tile, height, width, channels, pad, padded_width,
    v_taps, h_taps, compute_dtype, fuse_taps, skip_connection):
  TH, H, W, C, Wa = row_tile, height, width, channels, padded_width
  C2 = 2 * C
  n = TH * W
  t = pl.program_id(1)
  cdt = compute_dtype
  sdt = vps_ref.dtype

  # ---- in-VMEM causal padding (replaces wrapper-side jnp.pad HBM passes) ---
  # The vertical plane is assembled once per batch element: its input block
  # index is constant across t, so Pallas DMAs the image once and we build the
  # (top/left/right zero) halo locally.  The horizontal pad columns are zeroed
  # at the same time and stay zero for the whole image.
  @pl.when(t == 0)
  def _():
    if pad > 0:
      vps_ref[0:pad, :, :] = jnp.zeros((pad, Wa, C), sdt)              # top
      vps_ref[pad:, 0:pad, :] = jnp.zeros((H, pad, C), sdt)            # left
      vps_ref[pad:, pad + W:, :] = jnp.zeros((H, Wa - pad - W, C), sdt)
      hps_ref[:, 0:pad, :] = jnp.zeros((TH, pad, C), sdt)
      hps_ref[:, pad + W:, :] = jnp.zeros((TH, Wa - pad - W, C), sdt)
    vps_ref[pad:, pad:pad + W, :] = vin_ref[0]

  # Horizontal tile: data columns refreshed every step (halo stays zero).
  hps_ref[:, pad:pad + W, :] = hin_ref[0]

  # Rows [t*TH, t*TH + TH + pad) of the padded vertical plane (VMEM-local
  # dynamic slice along the major dim, aligned because Wa % 8 == 0).  Cast the
  # whole window to the MXU compute dtype ONCE; all tap slices reuse it.
  row0 = pl.multiple_of(t * TH, TH)
  vwin = vps_ref[pl.ds(row0, TH + pad), :, :].astype(cdt)  # (TH+pad, Wa, C)
  hwin = hps_ref[...].astype(cdt)                          # (TH,     Wa, C)

  def masked_conv(win, taps, w_ref):
    # Each tap is a (n, C) slice of the padded window; the row stride Wa is a
    # multiple of 8, so the compaction is sublane-aligned.
    parts = [win[dy:dy + TH, dx:dx + W, :].reshape(n, C) for dy, dx in taps]
    if not parts:
      return jnp.zeros((n, C2), jnp.float32)
    if fuse_taps and len(parts) > 1:
      # One deep im2col matmul (n, taps*C) @ (taps*C, 2C): best on the
      # 256-deep MXUs of v6e/v7x.
      patch = jnp.concatenate(parts, axis=1)
      return jnp.dot(patch, w_ref[...], preferred_element_type=jnp.float32)
    # Per-tap accumulation (fuse_taps=False): preferable on v5e, whose
    # 128-deep MXU gains nothing from the concatenated patch.
    acc = None
    for i, p in enumerate(parts):
      d = jnp.dot(p, w_ref[i * C:(i + 1) * C, :],
                  preferred_element_type=jnp.float32)
      acc = d if acc is None else acc + d
    return acc

  v_lin = masked_conv(vwin, v_taps, wv_ref)                # (n, 2C) f32
  h_lin = masked_conv(hwin, h_taps, wh_ref)                # (n, 2C) f32

  # Class condition (+ folded conv bias): (1, 2C) rows broadcast over the tile.
  cond_v = cond_v_ref[0]                                   # (1, 2C)
  cond_h = cond_h_ref[0]                                   # (1, 2C)

  def gate(x):
    # torch.chunk(2, dim=channel): tanh(first half) * sigmoid(second half).
    # sigmoid(b) == 0.5*tanh(0.5*b) + 0.5 exactly -> one EUP push per element
    # instead of exp + divide.
    # TODO(synk): for C not a multiple of 128 the lane slice at offset C costs
    # a per-vreg lane rotate; splitting the 2C logits into separate
    # tanh/sigmoid C-wide matmuls would avoid it (not worth it for C >= 128).
    a = x[:, :C]
    b = x[:, C:]
    return jnp.tanh(a) * (0.5 * jnp.tanh(0.5 * b) + 0.5)

  # vertical stack output
  v_out = gate(v_lin + cond_v)                             # (n, C) f32

  # 1x1 conv vertical -> horizontal (vertical conv bias folded into bv2h_ref).
  v2h = jnp.dot(v_lin.astype(cdt), wv2h_ref[...],
                preferred_element_type=jnp.float32) + bv2h_ref[...]

  # horizontal stack gate + 1x1 residual conv (+ skip from the raw f32 input).
  h_act = gate(v2h + h_lin + cond_h)                       # (n, C) f32
  h_out = jnp.dot(h_act.astype(cdt), wres_ref[...],
                  preferred_element_type=jnp.float32) + bres_ref[...]
  if skip_connection:
    h_out = h_out + hin_ref[0].reshape(n, C)

  vout_ref[0] = v_out.reshape(TH, W, C).astype(vout_ref.dtype)
  hout_ref[0] = h_out.reshape(TH, W, C).astype(hout_ref.dtype)


def _pick_row_tile(H, W, C, taps_total, cdt_bytes):
  """Smallest row tile whose matmul M (= TH*W) reaches ~512 rows, bounded by a
  per-step VMEM budget for the live im2col / logit intermediates."""
  divisors = [d for d in range(1, H + 1) if H % d == 0]
  cands = [d for d in divisors if d % 8 == 0] or divisors
  budget = 16 << 20

  def live_bytes(d):
    nn = d * W
    return nn * (max(taps_total, 1) * C * cdt_bytes + 12 * C * 4)

  pick = cands[0]
  for d in cands:
    if live_bytes(d) > budget:
      break
    pick = d
    if d * W >= 512:
      break
  return pick


def cond_gated_masked_conv2d(v_in, h_in, condition, params, *, kernel_size,
                             mask_type, skip_connection=True,
                             compute_dtype=jnp.bfloat16, out_dtype=None,
                             row_tile=None, fuse_taps=True,
                             data_format="NCHW"):
  """Forward pass of CondGatedMaskedConv2d.

  v_in, h_in: activations (NCHW by default, or NHWC with data_format="NHWC" to
  skip the layout-conversion HBM pass entirely).  condition: (B,) int32 class
  ids.  Returns (vertical_output, horizontal_output) in the same data_format.
  """
  assert mask_type in ("A", "B")
  assert kernel_size % 2 == 1
  assert data_format in ("NCHW", "NHWC")

  if data_format == "NCHW":
    B, C, H, W = v_in.shape
    # TODO(synk): this transpose is still one HBM pass per activation; pass
    # NHWC tensors (data_format="NHWC") to skip it.
    v_nhwc = jnp.transpose(v_in, (0, 2, 3, 1))
    h_nhwc = jnp.transpose(h_in, (0, 2, 3, 1))
  else:
    B, H, W, C = v_in.shape
    v_nhwc, h_nhwc = v_in, h_in
  assert H == W, "module's slicing convention assumes square inputs"

  pad = kernel_size // 2
  K = kernel_size
  C2 = 2 * C
  out_dtype = v_nhwc.dtype if out_dtype is None else out_dtype

  # Static tap lists.  Mask 'A' zeroes the last vertical kernel row and the
  # last horizontal kernel column -> skip those taps entirely.
  kh = pad + 1
  n_vrows = kh - 1 if mask_type == "A" else kh
  n_hcols = pad if mask_type == "A" else pad + 1
  v_taps = tuple((dy, dx) for dy in range(n_vrows) for dx in range(K))
  h_taps = tuple((0, dx) for dx in range(n_hcols))
  taps_total = len(v_taps) + len(h_taps)

  cdt_bytes = jnp.dtype(compute_dtype).itemsize
  in_bytes = jnp.dtype(v_nhwc.dtype).itemsize
  out_bytes = jnp.dtype(out_dtype).itemsize

  # Row tile: big enough that TH*W rows feed the MXU per step.
  if row_tile is None:
    TH = _pick_row_tile(H, W, C, taps_total, cdt_bytes)
  else:
    TH = row_tile if (row_tile <= H and H % row_tile == 0) else H
  n_ht = H // TH

  # Sublane-aligned padded width shared by both stacks (vertical needs
  # W + 2*pad, horizontal W + pad; extra columns stay zero).
  Wa = _round_up(W + 2 * pad, 8)

  # Fused (im2col) conv weights in tap order, cast to the MXU input dtype.
  wv, wh = params["wv"], params["wh"]              # (kh,K,C,2C), (kw,C,2C)
  if v_taps:
    wv_f = jnp.concatenate([wv[dy, dx] for dy, dx in v_taps], axis=0)
  else:
    wv_f = jnp.zeros((C, C2), wv.dtype)
  if h_taps:
    wh_f = jnp.concatenate([wh[dx] for _, dx in h_taps], axis=0)
  else:
    wh_f = jnp.zeros((C, C2), wh.dtype)
  wv_f = wv_f.astype(compute_dtype)
  wh_f = wh_f.astype(compute_dtype)
  wv2h = params["wv2h"].astype(compute_dtype)
  wres = params["wres"].astype(compute_dtype)

  # Fold the vertical conv bias into the 1x1 v->h bias:
  #   (v_lin + bv) @ wv2h + bv2h == v_lin @ wv2h + (bv @ wv2h + bv2h)
  bv2h_eff = jnp.dot(params["bv"], params["wv2h"]) + params["bv2h"]  # (1,2C)
  bres = params["bres"]                                              # (1, C)

  # TODO(synk): nn.Embedding lookup kept as a plain-JAX gather outside kernel.
  cond_emb = params["emb"][condition]                                # (B, 2C)
  cond_v = (cond_emb + params["bv"])[:, None, :]                     # (B,1,2C)
  cond_h = (cond_emb + params["bh"])[:, None, :]                     # (B,1,2C)

  kernel = functools.partial(
      _gated_pixelcnn_kernel,
      row_tile=TH, height=H, width=W, channels=C, pad=pad, padded_width=Wa,
      v_taps=v_taps, h_taps=h_taps,
      compute_dtype=compute_dtype, fuse_taps=fuse_taps,
      skip_connection=skip_connection)

  grid = (B, n_ht)
  in_specs = [
      # Vertical stack input: resident across all row tiles of a batch element
      # (same block index for every t) -> DMA'd once per image.
      pl.BlockSpec((1, H, W, C), lambda b, t: (b, 0, 0, 0)),
      # Horizontal stack input: one row tile per grid step.
      pl.BlockSpec((1, TH, W, C), lambda b, t: (b, t, 0, 0)),
      pl.BlockSpec((1, 1, C2), lambda b, t: (b, 0, 0)),   # cond (+ bv)
      pl.BlockSpec((1, 1, C2), lambda b, t: (b, 0, 0)),   # cond (+ bh)
      pl.BlockSpec(wv_f.shape, lambda b, t: (0, 0)),      # fused vertical W
      pl.BlockSpec(wh_f.shape, lambda b, t: (0, 0)),      # fused horizontal W
      pl.BlockSpec((C2, C2), lambda b, t: (0, 0)),        # wv2h
      pl.BlockSpec((C, C), lambda b, t: (0, 0)),          # wres
      pl.BlockSpec((1, C2), lambda b, t: (0, 0)),         # bv2h (+ bv folded)
      pl.BlockSpec((1, C), lambda b, t: (0, 0)),          # bres
  ]
  out_specs = (
      pl.BlockSpec((1, TH, W, C), lambda b, t: (b, t, 0, 0)),
      pl.BlockSpec((1, TH, W, C), lambda b, t: (b, t, 0, 0)),
  )
  scratch_shapes = [
      # Causally padded, sublane-aligned planes assembled in VMEM.  Scratch
      # dtype == input dtype so the halo writes are plain masked stores; the
      # compute-dtype cast happens once per window inside the kernel.
      pltpu.VMEM((H + pad, Wa, C), v_nhwc.dtype),   # vertical plane (per b)
      pltpu.VMEM((TH, Wa, C), v_nhwc.dtype),        # horizontal row tile
  ]

  # VMEM budget computed from the actual block / scratch shapes (+ margin for
  # compiler temporaries) instead of a hard-coded constant.
  n = TH * W
  w_bytes = 2 * (taps_total * C * C2 + C2 * C2 + C * C + C2 + C) * 4
  est = (2 * H * W * C * in_bytes                    # resident v block x2 bufs
         + 2 * TH * W * C * in_bytes                 # h tile x2 bufs
         + 4 * TH * W * C * out_bytes                # 2 outputs x2 bufs
         + (H + pad + TH) * Wa * C * in_bytes        # padded-plane scratch
         + n * (max(taps_total, 1) * C * cdt_bytes + 12 * C * 4)  # live values
         + w_bytes)
  vmem_limit = int(min(max(est + (8 << 20), 32 << 20), 64 << 20))

  v_out, h_out = pl.pallas_call(
      kernel,
      out_shape=(jax.ShapeDtypeStruct((B, H, W, C), out_dtype),
                 jax.ShapeDtypeStruct((B, H, W, C), out_dtype)),
      grid=grid,
      in_specs=in_specs,
      out_specs=out_specs,
      scratch_shapes=scratch_shapes,
      compiler_params=pltpu.CompilerParams(
          # Megacore split on the batch axis only: splitting the row-tile axis
          # across cores would re-DMA the resident vertical plane (v7x).
          dimension_semantics=("parallel", "arbitrary"),
          vmem_limit_bytes=vmem_limit),
  )(v_nhwc, h_nhwc, cond_v, cond_h, wv_f, wh_f, wv2h, wres, bv2h_eff, bres)

  if data_format == "NCHW":
    return (jnp.transpose(v_out, (0, 3, 1, 2)),
            jnp.transpose(h_out, (0, 3, 1, 2)))
  return v_out, h_out


def init_params(key, num_channels, kernel_size, num_classes):
  C, K = num_channels, kernel_size
  C2 = 2 * C
  pad = K // 2
  kh = pad + 1
  kw = pad + 1
  keys = jax.random.split(key, 10)
  s = 0.1
  return {
      "emb":  s * jax.random.normal(keys[0], (num_classes, C2), jnp.float32),
      "wv":   s * jax.random.normal(keys[1], (kh, K, C, C2), jnp.float32),
      "bv":   s * jax.random.normal(keys[2], (1, C2), jnp.float32),
      "wh":   s * jax.random.normal(keys[3], (kw, C, C2), jnp.float32),
      "bh":   s * jax.random.normal(keys[4], (1, C2), jnp.float32),
      "wv2h": s * jax.random.normal(keys[5], (C2, C2), jnp.float32),
      "bv2h": s * jax.random.normal(keys[6], (1, C2), jnp.float32),
      "wres": s * jax.random.normal(keys[7], (C, C), jnp.float32),
      "bres": s * jax.random.normal(keys[8], (1, C), jnp.float32),
  }


def _masked_weights(params, mask_type):
  # enable_mask_a(): zero the last kernel row of the vertical conv and the
  # last kernel column of the horizontal conv (reference path only; the
  # Pallas kernel skips those taps statically).
  wv, wh = params["wv"], params["wh"]
  if mask_type == "A":
    wv = wv.at[-1].set(0.0)
    wh = wh.at[-1].set(0.0)
  return wv, wh


def reference(v_in, h_in, condition, params, *, kernel_size, mask_type,
              skip_connection=True):
  """Pure-JAX reference mirroring the PyTorch forward (NCHW in/out, f32)."""
  B, C, H, W = v_in.shape
  pad = kernel_size // 2
  C2 = 2 * C
  wv, wh = _masked_weights(params, mask_type)

  v_nhwc = jnp.transpose(v_in, (0, 2, 3, 1))
  h_nhwc = jnp.transpose(h_in, (0, 2, 3, 1))
  dn = ("NHWC", "HWIO", "NHWC")

  cond = params["emb"][condition][:, None, None, :]               # (B,1,1,2C)

  v_logit = lax.conv_general_dilated(
      v_nhwc, wv, (1, 1), ((pad, pad), (pad, pad)),
      dimension_numbers=dn) + params["bv"].reshape(1, 1, 1, C2)
  v_logit = v_logit[:, :W, :, :]                                  # crop height

  h_logit = lax.conv_general_dilated(
      h_nhwc, wh[None], (1, 1), ((0, 0), (pad, pad)),
      dimension_numbers=dn) + params["bh"].reshape(1, 1, 1, C2)
  h_logit = h_logit[:, :, :H, :]                                  # crop width

  def gate4(x):
    return jnp.tanh(x[..., :C]) * jax.nn.sigmoid(x[..., C:])

  v_out = gate4(v_logit + cond)
  v2h = jnp.einsum("bhwc,cd->bhwd", v_logit, params["wv2h"]) \
      + params["bv2h"].reshape(1, 1, 1, C2)
  h_gated = gate4(v2h + h_logit + cond)
  h_out = jnp.einsum("bhwc,cd->bhwd", h_gated, params["wres"]) \
      + params["bres"].reshape(1, 1, 1, C)
  if skip_connection:
    h_out = h_out + h_nhwc
  return (jnp.transpose(v_out, (0, 3, 1, 2)),
          jnp.transpose(h_out, (0, 3, 1, 2)))


if __name__ == "__main__":
  B, C, H, W = 2, 4, 16, 16
  K = 3
  num_classes = 10

  key = jax.random.PRNGKey(0)
  k_params, k_v, k_h, k_c = jax.random.split(key, 4)
  params = init_params(k_params, C, K, num_classes)

  v_in = jax.random.normal(k_v, (B, C, H, W), jnp.float32)
  h_in = jax.random.normal(k_h, (B, C, H, W), jnp.float32)
  condition = jax.random.randint(k_c, (B,), 0, num_classes, jnp.int32)

  for mask_type in ("A", "B"):
    v_ref, h_ref = reference(
        v_in, h_in, condition, params,
        kernel_size=K, mask_type=mask_type, skip_connection=True)
    jax.block_until_ready((v_ref, h_ref))

    # f32 path: exact semantics (tight tolerance).
    # bf16 path: MXU operands in bf16 with f32 accumulation (loose tolerance).
    for compute_dtype, tol in ((jnp.float32, 1e-3), (jnp.bfloat16, 3e-2)):
      v_out, h_out = cond_gated_masked_conv2d(
          v_in, h_in, condition, params,
          kernel_size=K, mask_type=mask_type, skip_connection=True,
          compute_dtype=compute_dtype)
      jax.block_until_ready((v_out, h_out))

      assert v_out.shape == (B, C, H, W) and h_out.shape == (B, C, H, W)
      assert jnp.allclose(v_out, v_ref, atol=tol, rtol=tol), (
          f"vertical mismatch ({mask_type}, {compute_dtype.__name__})")
      assert jnp.allclose(h_out, h_ref, atol=tol, rtol=tol), (
          f"horizontal mismatch ({mask_type}, {compute_dtype.__name__})")

  print("KERNEL_OK")
</pallas_src>

<mosaic_0001>
module attributes {stable_mosaic.version = 11 : i64} {
  func.func @_gated_pixelcnn_kernel(%arg0: i32, %arg1: i32, %arg2: memref<1x16x16x4xf32, #tpu.memory_space<vmem>>, %arg3: memref<1x16x16x4xf32, #tpu.memory_space<vmem>>, %arg4: memref<1x1x8xf32, #tpu.memory_space<vmem>>, %arg5: memref<1x1x8xf32, #tpu.memory_space<vmem>>, %arg6: memref<12x8xf32, #tpu.memory_space<vmem>>, %arg7: memref<4x8xf32, #tpu.memory_space<vmem>>, %arg8: memref<8x8xf32, #tpu.memory_space<vmem>>, %arg9: memref<4x4xf32, #tpu.memory_space<vmem>>, %arg10: memref<1x8xf32, #tpu.memory_space<vmem>>, %arg11: memref<1x4xf32, #tpu.memory_space<vmem>>, %arg12: memref<1x16x16x4xf32, #tpu.memory_space<vmem>>, %arg13: memref<1x16x16x4xf32, #tpu.memory_space<vmem>>, %arg14: memref<17x24x4xf32, #tpu.memory_space<vmem>>, %arg15: memref<16x24x4xf32, #tpu.memory_space<vmem>>) attributes {dimension_semantics = [#tpu.dimension_semantics<parallel>, #tpu.dimension_semantics<arbitrary>], iteration_bounds = array<i64: 2, 1>, scalar_prefetch = 0 : i64, scratch_operands = 2 : i64, tpu.core_type = #tpu.core_type<tc>, window_params = [{transform_indices = @transform_0, window_bounds = array<i64: 1, 16, 16, 4>}, {transform_indices = @transform_1, window_bounds = array<i64: 1, 16, 16, 4>}, {transform_indices = @transform_2, window_bounds = array<i64: 1, 1, 8>}, {transform_indices = @transform_3, window_bounds = array<i64: 1, 1, 8>}, {pipeline_mode = #tpu.pipeline_mode<synchronous>, transform_indices = @transform_4, window_bounds = array<i64: 12, 8>}, {pipeline_mode = #tpu.pipeline_mode<synchronous>, transform_indices = @transform_5, window_bounds = array<i64: 4, 8>}, {pipeline_mode = #tpu.pipeline_mode<synchronous>, transform_indices = @transform_6, window_bounds = array<i64: 8, 8>}, {pipeline_mode = #tpu.pipeline_mode<synchronous>, transform_indices = @transform_7, window_bounds = array<i64: 4, 4>}, {pipeline_mode = #tpu.pipeline_mode<synchronous>, transform_indices = @transform_8, window_bounds = array<i64: 1, 8>}, {pipeline_mode = #tpu.pipeline_mode<synchronous>, transform_indices = @transform_9, window_bounds = array<i64: 1, 4>}, {transform_indices = @transform_10, window_bounds = array<i64: 1, 16, 16, 4>}, {transform_indices = @transform_11, window_bounds = array<i64: 1, 16, 16, 4>}]} {
    %c0_i32 = arith.constant 0 : i32
    %0 = arith.cmpi eq, %arg1, %c0_i32 : i32
    %1 = arith.extui %0 : i1 to i32
    %c0_i32_0 = arith.constant 0 : i32
    %2 = arith.cmpi ne, %1, %c0_i32_0 : i32
    scf.if %2 {
      %cst_50 = arith.constant 0.000000e+00 : f32
      %77 = vector.broadcast %cst_50 : f32 to vector<1x24x4xf32>
      %c0_51 = arith.constant 0 : index
      %c0_52 = arith.constant 0 : index
      %c0_53 = arith.constant 0 : index
      %78 = vector.load %arg14[%c0_51, %c0_52, %c0_53] : memref<17x24x4xf32, #tpu.memory_space<vmem>>, vector<1x24x4xf32>
      tpu.vector_store %arg14[%c0_51, %c0_52, %c0_53], %77 {strides = array<i32>} : memref<17x24x4xf32, #tpu.memory_space<vmem>>, vector<1x24x4xf32>,
      %cst_54 = arith.constant 0.000000e+00 : f32
      %79 = vector.broadcast %cst_54 : f32 to vector<16x1x4xf32>
      %c1_55 = arith.constant 1 : index
      %c0_56 = arith.constant 0 : index
      %c0_57 = arith.constant 0 : index
      %80 = vector.load %arg14[%c1_55, %c0_56, %c0_57] : memref<17x24x4xf32, #tpu.memory_space<vmem>>, vector<16x1x4xf32>
      tpu.vector_store %arg14[%c1_55, %c0_56, %c0_57], %79 {strides = array<i32>} : memref<17x24x4xf32, #tpu.memory_space<vmem>>, vector<16x1x4xf32>,
      %cst_58 = arith.constant 0.000000e+00 : f32
      %81 = vector.broadcast %cst_58 : f32 to vector<16x7x4xf32>
      %c1_59 = arith.constant 1 : index
      %c17 = arith.constant 17 : index
      %c0_60 = arith.constant 0 : index
      %82 = vector.load %arg14[%c1_59, %c17, %c0_60] : memref<17x24x4xf32, #tpu.memory_space<vmem>>, vector<16x7x4xf32>
      tpu.vector_store %arg14[%c1_59, %c17, %c0_60], %81 {strides = array<i32>} : memref<17x24x4xf32, #tpu.memory_space<vmem>>, vector<16x7x4xf32>,
      %cst_61 = arith.constant 0.000000e+00 : f32
      %83 = vector.broadcast %cst_61 : f32 to vector<16x1x4xf32>
      %c0_62 = arith.constant 0 : index
      %c0_63 = arith.constant 0 : index
      %c0_64 = arith.constant 0 : index
      %84 = vector.load %arg15[%c0_62, %c0_63, %c0_64] : memref<16x24x4xf32, #tpu.memory_space<vmem>>, vector<16x1x4xf32>
      tpu.vector_store %arg15[%c0_62, %c0_63, %c0_64], %83 {strides = array<i32>} : memref<16x24x4xf32, #tpu.memory_space<vmem>>, vector<16x1x4xf32>,
      %cst_65 = arith.constant 0.000000e+00 : f32
      %85 = vector.broadcast %cst_65 : f32 to vector<16x7x4xf32>
      %c0_66 = arith.constant 0 : index
      %c17_67 = arith.constant 17 : index
      %c0_68 = arith.constant 0 : index
      %86 = vector.load %arg15[%c0_66, %c17_67, %c0_68] : memref<16x24x4xf32, #tpu.memory_space<vmem>>, vector<16x7x4xf32>
      tpu.vector_store %arg15[%c0_66, %c17_67, %c0_68], %85 {strides = array<i32>} : memref<16x24x4xf32, #tpu.memory_space<vmem>>, vector<16x7x4xf32>,
      %c0_69 = arith.constant 0 : index
      %c0_70 = arith.constant 0 : index
      %c0_71 = arith.constant 0 : index
      %c0_72 = arith.constant 0 : index
      %87 = vector.load %arg2[%c0_69, %c0_70, %c0_71, %c0_72] : memref<1x16x16x4xf32, #tpu.memory_space<vmem>>, vector<1x16x16x4xf32>
      %88 = vector.shape_cast %87 : vector<1x16x16x4xf32> to vector<16x16x4xf32>
      %c1_73 = arith.constant 1 : index
      %c1_74 = arith.constant 1 : index
      %c0_75 = arith.constant 0 : index
      %89 = vector.load %arg14[%c1_73, %c1_74, %c0_75] : memref<17x24x4xf32, #tpu.memory_space<vmem>>, vector<16x16x4xf32>
      tpu.vector_store %arg14[%c1_73, %c1_74, %c0_75], %88 {strides = array<i32>} : memref<17x24x4xf32, #tpu.memory_space<vmem>>, vector<16x16x4xf32>,
    } else {
    }
    %c0 = arith.constant 0 : index
    %c0_1 = arith.constant 0 : index
    %c0_2 = arith.constant 0 : index
    %c0_3 = arith.constant 0 : index
    %3 = vector.load %arg3[%c0, %c0_1, %c0_2, %c0_3] : memref<1x16x16x4xf32, #tpu.memory_space<vmem>>, vector<1x16x16x4xf32>
    %4 = vector.shape_cast %3 : vector<1x16x16x4xf32> to vector<16x16x4xf32>
    %c0_4 = arith.constant 0 : index
    %c1 = arith.constant 1 : index
    %c0_5 = arith.constant 0 : index
    %5 = vector.load %arg15[%c0_4, %c1, %c0_5] : memref<16x24x4xf32, #tpu.memory_space<vmem>>, vector<16x16x4xf32>
    tpu.vector_store %arg15[%c0_4, %c1, %c0_5], %4 {strides = array<i32>} : memref<16x24x4xf32, #tpu.memory_space<vmem>>, vector<16x16x4xf32>,
    %c16_i32 = arith.constant 16 : i32
    %6 = arith.muli %arg1, %c16_i32 : i32
    %7 = tpu.assume_multiple %6, 16 : i32
    %8 = arith.index_cast %7 : i32 to index
    %c0_6 = arith.constant 0 : index
    %c0_7 = arith.constant 0 : index
    %9 = vector.load %arg14[%8, %c0_6, %c0_7] : memref<17x24x4xf32, #tpu.memory_space<vmem>>, vector<17x24x4xf32>
    %c0_8 = arith.constant 0 : index
    %c0_9 = arith.constant 0 : index
    %c0_10 = arith.constant 0 : index
    %10 = vector.load %arg15[%c0_8, %c0_9, %c0_10] : memref<16x24x4xf32, #tpu.memory_space<vmem>>, vector<16x24x4xf32>
    %11 = vector.extract_strided_slice %9 {offsets = [0, 0, 0], sizes = [16, 16, 4], strides = [1, 1, 1]} : vector<17x24x4xf32> to vector<16x16x4xf32>
    %12 = vector.shape_cast %11 : vector<16x16x4xf32> to vector<256x4xf32>
    %13 = vector.extract_strided_slice %9 {offsets = [0, 1, 0], sizes = [16, 16, 4], strides = [1, 1, 1]} : vector<17x24x4xf32> to vector<16x16x4xf32>
    %14 = vector.shape_cast %13 : vector<16x16x4xf32> to vector<256x4xf32>
    %15 = vector.extract_strided_slice %9 {offsets = [0, 2, 0], sizes = [16, 16, 4], strides = [1, 1, 1]} : vector<17x24x4xf32> to vector<16x16x4xf32>
    %16 = vector.shape_cast %15 : vector<16x16x4xf32> to vector<256x4xf32>
    %17 = tpu.concatenate %12, %14, %16 in 1 : vector<256x4xf32>, vector<256x4xf32>, vector<256x4xf32> -> vector<256x12xf32>
    %c0_11 = arith.constant 0 : index
    %c0_12 = arith.constant 0 : index
    %18 = vector.load %arg6[%c0_11, %c0_12] : memref<12x8xf32, #tpu.memory_space<vmem>>, vector<12x8xf32>
    %cst = arith.constant dense<0.000000e+00> : vector<256x8xf32>
    %19 = tpu.matmul %17, %18, %cst {dimension_numbers = #tpu.dot_dimension_numbers<[1], [0], [0], [1], [0, 0, 1, 1], [], []>} : vector<256x12xf32>, vector<12x8xf32>, vector<256x8xf32> -> vector<256x8xf32>
    %20 = vector.extract_strided_slice %10 {offsets = [0, 0, 0], sizes = [16, 16, 4], strides = [1, 1, 1]} : vector<16x24x4xf32> to vector<16x16x4xf32>
    %21 = vector.shape_cast %20 : vector<16x16x4xf32> to vector<256x4xf32>
    %c0_13 = arith.constant 0 : index
    %c0_14 = arith.constant 0 : index
    %22 = vector.load %arg7[%c0_13, %c0_14] : memref<4x8xf32, #tpu.memory_space<vmem>>, vector<4x8xf32>
    %cst_15 = arith.constant dense<0.000000e+00> : vector<256x8xf32>
    %23 = tpu.matmul %21, %22, %cst_15 {dimension_numbers = #tpu.dot_dimension_numbers<[1], [0], [0], [1], [0, 0, 1, 1], [], []>} : vector<256x4xf32>, vector<4x8xf32>, vector<256x8xf32> -> vector<256x8xf32>
    %c0_16 = arith.constant 0 : index
    %c0_17 = arith.constant 0 : index
    %c0_18 = arith.constant 0 : index
    %24 = vector.load %arg4[%c0_16, %c0_17, %c0_18] : memref<1x1x8xf32, #tpu.memory_space<vmem>>, vector<1x1x8xf32>
    %25 = vector.shape_cast %24 : vector<1x1x8xf32> to vector<1x8xf32>
    %c0_19 = arith.constant 0 : index
    %c0_20 = arith.constant 0 : index
    %c0_21 = arith.constant 0 : index
    %26 = vector.load %arg5[%c0_19, %c0_20, %c0_21] : memref<1x1x8xf32, #tpu.memory_space<vmem>>, vector<1x1x8xf32>
    %27 = vector.shape_cast %26 : vector<1x1x8xf32> to vector<1x8xf32>
    %28 = vector.broadcast %25 : vector<1x8xf32> to vector<256x8xf32>
    %29 = arith.addf %19, %28 : vector<256x8xf32>
    %30 = vector.extract_strided_slice %29 {offsets = [0, 0], sizes = [256, 4], strides = [1, 1]} : vector<256x8xf32> to vector<256x4xf32>
    %31 = vector.extract_strided_slice %29 {offsets = [0, 4], sizes = [256, 4], strides = [1, 1]} : vector<256x8xf32> to vector<256x4xf32>
    %32 = math.tanh %30 : vector<256x4xf32>
    %cst_22 = arith.constant 5.000000e-01 : f32
    %33 = vector.broadcast %cst_22 : f32 to vector<256x4xf32>
    %34 = arith.mulf %33, %31 : vector<256x4xf32>
    %35 = math.tanh %34 : vector<256x4xf32>
    %cst_23 = arith.constant 5.000000e-01 : f32
    %36 = vector.broadcast %cst_23 : f32 to vector<256x4xf32>
    %37 = arith.mulf %36, %35 : vector<256x4xf32>
    %cst_24 = arith.constant 5.000000e-01 : f32
    %38 = vector.broadcast %cst_24 : f32 to vector<256x4xf32>
    %39 = arith.addf %37, %38 : vector<256x4xf32>
    %40 = arith.mulf %32, %39 : vector<256x4xf32>
    %c0_25 = arith.constant 0 : index
    %c0_26 = arith.constant 0 : index
    %41 = vector.load %arg8[%c0_25, %c0_26] : memref<8x8xf32, #tpu.memory_space<vmem>>, vector<8x8xf32>
    %cst_27 = arith.constant dense<0.000000e+00> : vector<256x8xf32>
    %42 = tpu.matmul %19, %41, %cst_27 {dimension_numbers = #tpu.dot_dimension_numbers<[1], [0], [0], [1], [0, 0, 1, 1], [], []>} : vector<256x8xf32>, vector<8x8xf32>, vector<256x8xf32> -> vector<256x8xf32>
    %c0_28 = arith.constant 0 : index
    %c0_29 = arith.constant 0 : index
    %43 = vector.load %arg10[%c0_28, %c0_29] : memref<1x8xf32, #tpu.memory_space<vmem>>, vector<1x8xf32>
    %44 = vector.broadcast %43 : vector<1x8xf32> to vector<256x8xf32>
    %45 = arith.addf %42, %44 : vector<256x8xf32>
    %46 = arith.addf %45, %23 : vector<256x8xf32>
    %47 = vector.broadcast %27 : vector<1x8xf32> to vector<256x8xf32>
    %48 = arith.addf %46, %47 : vector<256x8xf32>
    %49 = vector.extract_strided_slice %48 {offsets = [0, 0], sizes = [256, 4], strides = [1, 1]} : vector<256x8xf32> to vector<256x4xf32>
    %50 = vector.extract_strided_slice %48 {offsets = [0, 4], sizes = [256, 4], strides = [1, 1]} : vector<256x8xf32> to vector<256x4xf32>
    %51 = math.tanh %49 : vector<256x4xf32>
    %cst_30 = arith.constant 5.000000e-01 : f32
    %52 = vector.broadcast %cst_30 : f32 to vector<256x4xf32>
    %53 = arith.mulf %52, %50 : vector<256x4xf32>
    %54 = math.tanh %53 : vector<256x4xf32>
    %cst_31 = arith.constant 5.000000e-01 : f32
    %55 = vector.broadcast %cst_31 : f32 to vector<256x4xf32>
    %56 = arith.mulf %55, %54 : vector<256x4xf32>
    %cst_32 = arith.constant 5.000000e-01 : f32
    %57 = vector.broadcast %cst_32 : f32 to vector<256x4xf32>
    %58 = arith.addf %56, %57 : vector<256x4xf32>
    %59 = arith.mulf %51, %58 : vector<256x4xf32>
    %c0_33 = arith.constant 0 : index
    %c0_34 = arith.constant 0 : index
    %60 = vector.load %arg9[%c0_33, %c0_34] : memref<4x4xf32, #tpu.memory_space<vmem>>, vector<4x4xf32>
    %cst_35 = arith.constant dense<0.000000e+00> : vector<256x4xf32>
    %61 = tpu.matmul %59, %60, %cst_35 {dimension_numbers = #tpu.dot_dimension_numbers<[1], [0], [0], [1], [0, 0, 1, 1], [], []>} : vector<256x4xf32>, vector<4x4xf32>, vector<256x4xf32> -> vector<256x4xf32>
    %c0_36 = arith.constant 0 : index
    %c0_37 = arith.constant 0 : index
    %62 = vector.load %arg11[%c0_36, %c0_37] : memref<1x4xf32, #tpu.memory_space<vmem>>, vector<1x4xf32>
    %63 = vector.broadcast %62 : vector<1x4xf32> to vector<256x4xf32>
    %64 = arith.addf %61, %63 : vector<256x4xf32>
    %c0_38 = arith.constant 0 : index
    %c0_39 = arith.constant 0 : index
    %c0_40 = arith.constant 0 : index
    %c0_41 = arith.constant 0 : index
    %65 = vector.load %arg3[%c0_38, %c0_39, %c0_40, %c0_41] : memref<1x16x16x4xf32, #tpu.memory_space<vmem>>, vector<1x16x16x4xf32>
    %66 = vector.shape_cast %65 : vector<1x16x16x4xf32> to vector<16x16x4xf32>
    %67 = vector.shape_cast %66 : vector<16x16x4xf32> to vector<256x4xf32>
    %68 = arith.addf %64, %67 : vector<256x4xf32>
    %69 = vector.shape_cast %40 : vector<256x4xf32> to vector<16x16x4xf32>
    %c0_42 = arith.constant 0 : index
    %c0_43 = arith.constant 0 : index
    %c0_44 = arith.constant 0 : index
    %c0_45 = arith.constant 0 : index
    %70 = vector.load %arg12[%c0_42, %c0_43, %c0_44, %c0_45] : memref<1x16x16x4xf32, #tpu.memory_space<vmem>>, vector<1x16x16x4xf32>
    %71 = vector.shape_cast %70 : vector<1x16x16x4xf32> to vector<16x16x4xf32>
    %72 = vector.shape_cast %69 : vector<16x16x4xf32> to vector<1x16x16x4xf32>
    tpu.vector_store %arg12[%c0_42, %c0_43, %c0_44, %c0_45], %72 {strides = array<i32>} : memref<1x16x16x4xf32, #tpu.memory_space<vmem>>, vector<1x16x16x4xf32>,
    %73 = vector.shape_cast %68 : vector<256x4xf32> to vector<16x16x4xf32>
    %c0_46 = arith.constant 0 : index
    %c0_47 = arith.constant 0 : index
    %c0_48 = arith.constant 0 : index
    %c0_49 = arith.constant 0 : index
    %74 = vector.load %arg13[%c0_46, %c0_47, %c0_48, %c0_49] : memref<1x16x16x4xf32, #tpu.memory_space<vmem>>, vector<1x16x16x4xf32>
    %75 = vector.shape_cast %74 : vector<1x16x16x4xf32> to vector<16x16x4xf32>
    %76 = vector.shape_cast %73 : vector<16x16x4xf32> to vector<1x16x16x4xf32>
    tpu.vector_store %arg13[%c0_46, %c0_47, %c0_48, %c0_49], %76 {strides = array<i32>} : memref<1x16x16x4xf32, #tpu.memory_space<vmem>>, vector<1x16x16x4xf32>,
    return
  }
  func.func @transform_0(%arg0: i32, %arg1: i32) -> (i32, i32, i32, i32) {
    %c0_i32 = arith.constant 0 : i32
    %c0_i32_0 = arith.constant 0 : i32
    %c0_i32_1 = arith.constant 0 : i32
    %c0_i32_2 = arith.constant 0 : i32
    return %arg0, %c0_i32, %c0_i32_0, %c0_i32_1 : i32, i32, i32, i32
  }
  func.func @transform_1(%arg0: i32, %arg1: i32) -> (i32, i32, i32, i32) {
    %c0_i32 = arith.constant 0 : i32
    %c0_i32_0 = arith.constant 0 : i32
    %c0_i32_1 = arith.constant 0 : i32
    return %arg0, %arg1, %c0_i32, %c0_i32_0 : i32, i32, i32, i32
  }
  func.func @transform_2(%arg0: i32, %arg1: i32) -> (i32, i32, i32) {
    %c0_i32 = arith.constant 0 : i32
    %c0_i32_0 = arith.constant 0 : i32
    %c0_i32_1 = arith.constant 0 : i32
    return %arg0, %c0_i32, %c0_i32_0 : i32, i32, i32
  }
  func.func @transform_3(%arg0: i32, %arg1: i32) -> (i32, i32, i32) {
    %c0_i32 = arith.constant 0 : i32
    %c0_i32_0 = arith.constant 0 : i32
    %c0_i32_1 = arith.constant 0 : i32
    return %arg0, %c0_i32, %c0_i32_0 : i32, i32, i32
  }
  func.func @transform_4(%arg0: i32, %arg1: i32) -> (i32, i32) {
    %c0_i32 = arith.constant 0 : i32
    %c0_i32_0 = arith.constant 0 : i32
    %c0_i32_1 = arith.constant 0 : i32
    return %c0_i32, %c0_i32_0 : i32, i32
  }
  func.func @transform_5(%arg0: i32, %arg1: i32) -> (i32, i32) {
    %c0_i32 = arith.constant 0 : i32
    %c0_i32_0 = arith.constant 0 : i32
    %c0_i32_1 = arith.constant 0 : i32
    return %c0_i32, %c0_i32_0 : i32, i32
  }
  func.func @transform_6(%arg0: i32, %arg1: i32) -> (i32, i32) {
    %c0_i32 = arith.constant 0 : i32
    %c0_i32_0 = arith.constant 0 : i32
    %c0_i32_1 = arith.constant 0 : i32
    return %c0_i32, %c0_i32_0 : i32, i32
  }
  func.func @transform_7(%arg0: i32, %arg1: i32) -> (i32, i32) {
    %c0_i32 = arith.constant 0 : i32
    %c0_i32_0 = arith.constant 0 : i32
    %c0_i32_1 = arith.constant 0 : i32
    return %c0_i32, %c0_i32_0 : i32, i32
  }
  func.func @transform_8(%arg0: i32, %arg1: i32) -> (i32, i32) {
    %c0_i32 = arith.constant 0 : i32
    %c0_i32_0 = arith.constant 0 : i32
    %c0_i32_1 = arith.constant 0 : i32
    return %c0_i32, %c0_i32_0 : i32, i32
  }
  func.func @transform_9(%arg0: i32, %arg1: i32) -> (i32, i32) {
    %c0_i32 = arith.constant 0 : i32
    %c0_i32_0 = arith.constant 0 : i32
    %c0_i32_1 = arith.constant 0 : i32
    return %c0_i32, %c0_i32_0 : i32, i32
  }
  func.func @transform_10(%arg0: i32, %arg1: i32) -> (i32, i32, i32, i32) {
    %c0_i32 = arith.constant 0 : i32
    %c0_i32_0 = arith.constant 0 : i32
    %c0_i32_1 = arith.constant 0 : i32
    return %arg0, %arg1, %c0_i32, %c0_i32_0 : i32, i32, i32, i32
  }
  func.func @transform_11(%arg0: i32, %arg1: i32) -> (i32, i32, i32, i32) {
    %c0_i32 = arith.constant 0 : i32
    %c0_i32_0 = arith.constant 0 : i32
    %c0_i32_1 = arith.constant 0 : i32
    return %arg0, %arg1, %c0_i32, %c0_i32_0 : i32, i32, i32, i32
  }
}

</mosaic_0001>

<llo_original>
// kernel: tpu_custom_call.1
$region0: #{tpu_custom_call.1}
  #allocation0 [shape = 'u32[]', space=smem, size = 0x4, offset = 0x4, fixed_abs, tag = 'smem constant byte address 0x4 - core index']
  #allocation1 [shape = 'u32[144,128]{1,0:T(1,128)}', space=vmem, size = 0x12000, scoped, tag = 'internal scratch']
  #allocation2 [shape = 'f32[17,24,4]{2,1,0:T(8,128)}', space=vmem, size = 0x33000, scoped, tag = 'scratch operand']
  #allocation3 [shape = 'f32[16,24,4]{2,1,0:T(8,128)}', space=vmem, size = 0x30000, scoped, tag = 'scratch operand']
  %s0 = inlined_call_operand.vmem [shape: f32[2,16,16,4], index: 0, kind: input, shape index: {}]
  %s1 = inlined_call_operand.vmem [shape: f32[2,16,16,4], index: 1, kind: input, shape index: {}]
  %s2 = inlined_call_operand.vmem [shape: f32[2,1,8], index: 2, kind: input, shape index: {}]
  %s3 = inlined_call_operand.vmem [shape: f32[2,1,8], index: 3, kind: input, shape index: {}]
  %s4 = inlined_call_operand.vmem [shape: f32[12,8], index: 4, kind: input, shape index: {}]
  %s5 = inlined_call_operand.vmem [shape: f32[4,8], index: 5, kind: input, shape index: {}]
  %s6 = inlined_call_operand.vmem [shape: f32[8,8], index: 6, kind: input, shape index: {}]
  %s7 = inlined_call_operand.vmem [shape: f32[4,4], index: 7, kind: input, shape index: {}]
  %s8 = inlined_call_operand.vmem [shape: f32[1,8], index: 8, kind: input, shape index: {}]
  %s9 = inlined_call_operand.vmem [shape: f32[1,4], index: 9, kind: input, shape index: {}]
  %s10 = inlined_call_operand.vmem [shape: f32[2,16,16,4], index: 10, kind: output, shape index: {0}]
  %s11 = inlined_call_operand.vmem [shape: f32[2,16,16,4], index: 11, kind: output, shape index: {1}]
  %12 = xla_tuple %s10, %s11
  %s13 = sld [smem:[#allocation0]]
  $region85: #{tpu_custom_call.1} parent=0
    _
  %s15 = ssub.s32 1, %s13
  %s16 = scalar_select 0, %s15, %s13
  loop: start=0, step=1, limit=4
  $region2: #{tpu_custom_call.1} parent=0 // loop_pre_header
    _
  $region3: #{tpu_custom_call.1} parent=0 // loop_header
    %s18 = sphi 0, %s22
    %p19 = scmp.ge.s32.totalorder %s18, 4
    %s25 = sphi 0, %s37
    %s26 = sphi 0, %s33
    %s27 = sphi 0, %s25
    %s28 = sphi 0, %s26
    %s29 = sphi 0, %s27
    %s30 = sphi 0, %s28
    %s40 = sphi 0, %s42
    %s43 = sphi 0, %s40
    %s44 = sphi 0, %s43
    %s60 = sphi 0, %s44
    %s68 = sphi 0, %s70
    %s71 = sphi 0, %s68
    %s72 = sphi 0, %s71
    %s88 = sphi 0, %s72
    %s94 = sphi 0, %s96
    %s97 = sphi 0, %s94
    %s98 = sphi 0, %s97
    %s114 = sphi 0, %s98
    %s120 = sphi 0, %s122
    %s123 = sphi 0, %s120
    %s124 = sphi 0, %s123
    %s140 = sphi 0, %s124
    %s144 = sphi 0, %s144
    %s146 = sphi 0, %s144
    %s147 = sphi 0, %s146
    %s161 = sphi 0, %s147
    %s165 = sphi 0, %s165
    %s167 = sphi 0, %s165
    %s168 = sphi 0, %s167
    %s182 = sphi 0, %s168
    %s186 = sphi 0, %s186
    %s188 = sphi 0, %s186
    %s189 = sphi 0, %s188
    %s203 = sphi 0, %s189
    %s207 = sphi 0, %s207
    %s209 = sphi 0, %s207
    %s210 = sphi 0, %s209
    %s224 = sphi 0, %s210
    %s228 = sphi 0, %s228
    %s230 = sphi 0, %s228
    %s231 = sphi 0, %s230
    %s245 = sphi 0, %s231
    %s249 = sphi 0, %s249
    %s251 = sphi 0, %s249
    %s252 = sphi 0, %s251
    %s266 = sphi 0, %s252
    %s274 = sphi 0, %s276
    %s277 = sphi 0, %s274
    %s278 = sphi 0, %s277
    %s294 = sphi 0, %s278
    %s302 = sphi 0, %s304
    %s305 = sphi 0, %s302
    %s306 = sphi 0, %s305
    %s322 = sphi 0, %s306
  $region4: #{tpu_custom_call.1} parent=0 // loop_header_branch
    %21 = sbr.rel (%p19) target = $region8
  $region5: #{tpu_custom_call.1} parent=0 // loop_body
    %s23 = ssub.s32 %s18, 1
    %s24 = ssub.s32 %s18, 2
    %s31 = sadd.s32 1, %s26
    %p32 = scmp.ge.s32.totalorder %s31, 1
    %s33 = scalar_select %p32, 0, %s31
    %s34 = sadd.s32 1, %s25
    %s35 = scalar_select %p32, %s34, %s25
    %p36 = scmp.ge.s32.totalorder %s35, 2
    %s37 = scalar_select %p36, 0, %s35
    %s38 = ssub.s32 %s25, %s37
    %p39 = scmp.eq.s32.totalorder %s38, 0
    %s41 = sadd.s32 %s40, 1
    %s42 = scalar_select %p39, %s40, %s41
    %p45 = pneg %p39
    %p46 = scmp.eq.s32.totalorder %s18, 1
    %p47 = por %p45, %p46
    %p48 = scmp.ne.s32.totalorder %s40, %s43
    %p49 = scmp.eq.s32.totalorder %s18, 0
    %p50 = por %p48, %p49
    %p51 = scmp.ne.s32.totalorder %s40, %s43
    %p52 = scmp.eq.s32.totalorder %s23, 1
    %p53 = por %p51, %p52
    %p54 = scmp.ne.s32.totalorder %s43, %s44
    %p55 = scmp.eq.s32.totalorder %s23, 0
    %p56 = por %p54, %p55
    %p57 = scmp.ne.s32.totalorder %s43, %s44
    %p58 = scmp.eq.s32.totalorder %s24, 1
    %p59 = por %p57, %p58
    %p61 = scmp.ne.s32.totalorder %s44, %s60
    %p62 = scmp.eq.s32.totalorder %s24, 0
    %p63 = por %p61, %p62
    %s64 = ssub.s32 %s25, %s37
    %s65 = ssub.s32 %s26, %s33
    %s66 = sor.u32 %s64, %s65
    %p67 = scmp.eq.s32.totalorder %s66, 0
    %s69 = sadd.s32 %s68, 1
    %s70 = scalar_select %p67, %s68, %s69
    %p73 = pneg %p67
    %p74 = scmp.eq.s32.totalorder %s18, 1
    %p75 = por %p73, %p74
    %p76 = scmp.ne.s32.totalorder %s68, %s71
    %p77 = scmp.eq.s32.totalorder %s18, 0
    %p78 = por %p76, %p77
    %p79 = scmp.ne.s32.totalorder %s68, %s71
    %p80 = scmp.eq.s32.totalorder %s23, 1
    %p81 = por %p79, %p80
    %p82 = scmp.ne.s32.totalorder %s71, %s72
    %p83 = scmp.eq.s32.totalorder %s23, 0
    %p84 = por %p82, %p83
    %p85 = scmp.ne.s32.totalorder %s71, %s72
    %p86 = scmp.eq.s32.totalorder %s24, 1
    %p87 = por %p85, %p86
    %p89 = scmp.ne.s32.totalorder %s72, %s88
    %p90 = scmp.eq.s32.totalorder %s24, 0
    %p91 = por %p89, %p90
    %s92 = ssub.s32 %s25, %s37
    %p93 = scmp.eq.s32.totalorder %s92, 0
    %s95 = sadd.s32 %s94, 1
    %s96 = scalar_select %p93, %s94, %s95
    %p99 = pneg %p93
    %p100 = scmp.eq.s32.totalorder %s18, 1
    %p101 = por %p99, %p100
    %p102 = scmp.ne.s32.totalorder %s94, %s97
    %p103 = scmp.eq.s32.totalorder %s18, 0
    %p104 = por %p102, %p103
    %p105 = scmp.ne.s32.totalorder %s94, %s97
    %p106 = scmp.eq.s32.totalorder %s23, 1
    %p107 = por %p105, %p106
    %p108 = scmp.ne.s32.totalorder %s97, %s98
    %p109 = scmp.eq.s32.totalorder %s23, 0
    %p110 = por %p108, %p109
    %p111 = scmp.ne.s32.totalorder %s97, %s98
    %p112 = scmp.eq.s32.totalorder %s24, 1
    %p113 = por %p111, %p112
    %p115 = scmp.ne.s32.totalorder %s98, %s114
    %p116 = scmp.eq.s32.totalorder %s24, 0
    %p117 = por %p115, %p116
    %s118 = ssub.s32 %s25, %s37
    %p119 = scmp.eq.s32.totalorder %s118, 0
    %s121 = sadd.s32 %s120, 1
    %s122 = scalar_select %p119, %s120, %s121
    %p125 = pneg %p119
    %p126 = scmp.eq.s32.totalorder %s18, 1
    %p127 = por %p125, %p126
    %p128 = scmp.ne.s32.totalorder %s120, %s123
    %p129 = scmp.eq.s32.totalorder %s18, 0
    %p130 = por %p128, %p129
    %p131 = scmp.ne.s32.totalorder %s120, %s123
    %p132 = scmp.eq.s32.totalorder %s23, 1
    %p133 = por %p131, %p132
    %p134 = scmp.ne.s32.totalorder %s123, %s124
    %p135 = scmp.eq.s32.totalorder %s23, 0
    %p136 = por %p134, %p135
    %p137 = scmp.ne.s32.totalorder %s123, %s124
    %p138 = scmp.eq.s32.totalorder %s24, 1
    %p139 = por %p137, %p138
    %p141 = scmp.ne.s32.totalorder %s124, %s140
    %p142 = scmp.eq.s32.totalorder %s24, 0
    %p143 = por %p141, %p142
    %s145 = sadd.s32 %s144, 1
    %p148 = scmp.eq.s32.totalorder %s18, 1
    %p149 = scmp.ne.s32.totalorder %s144, %s146
    %p150 = scmp.eq.s32.totalorder %s18, 0
    %p151 = por %p149, %p150
    %p152 = scmp.ne.s32.totalorder %s144, %s146
    %p153 = scmp.eq.s32.totalorder %s23, 1
    %p154 = por %p152, %p153
    %p155 = scmp.ne.s32.totalorder %s146, %s147
    %p156 = scmp.eq.s32.totalorder %s23, 0
    %p157 = por %p155, %p156
    %p158 = scmp.ne.s32.totalorder %s146, %s147
    %p159 = scmp.eq.s32.totalorder %s24, 1
    %p160 = por %p158, %p159
    %p162 = scmp.ne.s32.totalorder %s147, %s161
    %p163 = scmp.eq.s32.totalorder %s24, 0
    %p164 = por %p162, %p163
    %s166 = sadd.s32 %s165, 1
    %p169 = scmp.eq.s32.totalorder %s18, 1
    %p170 = scmp.ne.s32.totalorder %s165, %s167
    %p171 = scmp.eq.s32.totalorder %s18, 0
    %p172 = por %p170, %p171
    %p173 = scmp.ne.s32.totalorder %s165, %s167
    %p174 = scmp.eq.s32.totalorder %s23, 1
    %p175 = por %p173, %p174
    %p176 = scmp.ne.s32.totalorder %s167, %s168
    %p177 = scmp.eq.s32.totalorder %s23, 0
    %p178 = por %p176, %p177
    %p179 = scmp.ne.s32.totalorder %s167, %s168
    %p180 = scmp.eq.s32.totalorder %s24, 1
    %p181 = por %p179, %p180
    %p183 = scmp.ne.s32.totalorder %s168, %s182
    %p184 = scmp.eq.s32.totalorder %s24, 0
    %p185 = por %p183, %p184
    %s187 = sadd.s32 %s186, 1
    %p190 = scmp.eq.s32.totalorder %s18, 1
    %p191 = scmp.ne.s32.totalorder %s186, %s188
    %p192 = scmp.eq.s32.totalorder %s18, 0
    %p193 = por %p191, %p192
    %p194 = scmp.ne.s32.totalorder %s186, %s188
    %p195 = scmp.eq.s32.totalorder %s23, 1
    %p196 = por %p194, %p195
    %p197 = scmp.ne.s32.totalorder %s188, %s189
    %p198 = scmp.eq.s32.totalorder %s23, 0
    %p199 = por %p197, %p198
    %p200 = scmp.ne.s32.totalorder %s188, %s189
    %p201 = scmp.eq.s32.totalorder %s24, 1
    %p202 = por %p200, %p201
    %p204 = scmp.ne.s32.totalorder %s189, %s203
    %p205 = scmp.eq.s32.totalorder %s24, 0
    %p206 = por %p204, %p205
    %s208 = sadd.s32 %s207, 1
    %p211 = scmp.eq.s32.totalorder %s18, 1
    %p212 = scmp.ne.s32.totalorder %s207, %s209
    %p213 = scmp.eq.s32.totalorder %s18, 0
    %p214 = por %p212, %p213
    %p215 = scmp.ne.s32.totalorder %s207, %s209
    %p216 = scmp.eq.s32.totalorder %s23, 1
    %p217 = por %p215, %p216
    %p218 = scmp.ne.s32.totalorder %s209, %s210
    %p219 = scmp.eq.s32.totalorder %s23, 0
    %p220 = por %p218, %p219
    %p221 = scmp.ne.s32.totalorder %s209, %s210
    %p222 = scmp.eq.s32.totalorder %s24, 1
    %p223 = por %p221, %p222
    %p225 = scmp.ne.s32.totalorder %s210, %s224
    %p226 = scmp.eq.s32.totalorder %s24, 0
    %p227 = por %p225, %p226
    %s229 = sadd.s32 %s228, 1
    %p232 = scmp.eq.s32.totalorder %s18, 1
    %p233 = scmp.ne.s32.totalorder %s228, %s230
    %p234 = scmp.eq.s32.totalorder %s18, 0
    %p235 = por %p233, %p234
    %p236 = scmp.ne.s32.totalorder %s228, %s230
    %p237 = scmp.eq.s32.totalorder %s23, 1
    %p238 = por %p236, %p237
    %p239 = scmp.ne.s32.totalorder %s230, %s231
    %p240 = scmp.eq.s32.totalorder %s23, 0
    %p241 = por %p239, %p240
    %p242 = scmp.ne.s32.totalorder %s230, %s231
    %p243 = scmp.eq.s32.totalorder %s24, 1
    %p244 = por %p242, %p243
    %p246 = scmp.ne.s32.totalorder %s231, %s245
    %p247 = scmp.eq.s32.totalorder %s24, 0
    %p248 = por %p246, %p247
    %s250 = sadd.s32 %s249, 1
    %p253 = scmp.eq.s32.totalorder %s18, 1
    %p254 = scmp.ne.s32.totalorder %s249, %s251
    %p255 = scmp.eq.s32.totalorder %s18, 0
    %p256 = por %p254, %p255
    %p257 = scmp.ne.s32.totalorder %s249, %s251
    %p258 = scmp.eq.s32.totalorder %s23, 1
    %p259 = por %p257, %p258
    %p260 = scmp.ne.s32.totalorder %s251, %s252
    %p261 = scmp.eq.s32.totalorder %s23, 0
    %p262 = por %p260, %p261
    %p263 = scmp.ne.s32.totalorder %s251, %s252
    %p264 = scmp.eq.s32.totalorder %s24, 1
    %p265 = por %p263, %p264
    %p267 = scmp.ne.s32.totalorder %s252, %s266
    %p268 = scmp.eq.s32.totalorder %s24, 0
    %p269 = por %p267, %p268
    %s270 = ssub.s32 %s25, %s37
    %s271 = ssub.s32 %s26, %s33
    %s272 = sor.u32 %s270, %s271
    %p273 = scmp.eq.s32.totalorder %s272, 0
    %s275 = sadd.s32 %s274, 1
    %s276 = scalar_select %p273, %s274, %s275
    %p279 = pneg %p273
    %p280 = scmp.eq.s32.totalorder %s18, 1
    %p281 = por %p279, %p280
    %p282 = scmp.ne.s32.totalorder %s274, %s277
    %p283 = scmp.eq.s32.totalorder %s18, 0
    %p284 = por %p282, %p283
    %p285 = scmp.ne.s32.totalorder %s274, %s277
    %p286 = scmp.eq.s32.totalorder %s23, 1
    %p287 = por %p285, %p286
    %p288 = scmp.ne.s32.totalorder %s277, %s278
    %p289 = scmp.eq.s32.totalorder %s23, 0
    %p290 = por %p288, %p289
    %p291 = scmp.ne.s32.totalorder %s277, %s278
    %p292 = scmp.eq.s32.totalorder %s24, 1
    %p293 = por %p291, %p292
    %p295 = scmp.ne.s32.totalorder %s278, %s294
    %p296 = scmp.eq.s32.totalorder %s24, 0
    %p297 = por %p295, %p296
    %s298 = ssub.s32 %s25, %s37
    %s299 = ssub.s32 %s26, %s33
    %s300 = sor.u32 %s298, %s299
    %p301 = scmp.eq.s32.totalorder %s300, 0
    %s303 = sadd.s32 %s302, 1
    %s304 = scalar_select %p301, %s302, %s303
    %p307 = pneg %p301
    %p308 = scmp.eq.s32.totalorder %s18, 1
    %p309 = por %p307, %p308
    %p310 = scmp.ne.s32.totalorder %s302, %s305
    %p311 = scmp.eq.s32.totalorder %s18, 0
    %p312 = por %p310, %p311
    %p313 = scmp.ne.s32.totalorder %s302, %s305
    %p314 = scmp.eq.s32.totalorder %s23, 1
    %p315 = por %p313, %p314
    %p316 = scmp.ne.s32.totalorder %s305, %s306
    %p317 = scmp.eq.s32.totalorder %s23, 0
    %p318 = por %p316, %p317
    %p319 = scmp.ne.s32.totalorder %s305, %s306
    %p320 = scmp.eq.s32.totalorder %s24, 1
    %p321 = por %p319, %p320
    %p323 = scmp.ne.s32.totalorder %s306, %s322
    %p324 = scmp.eq.s32.totalorder %s24, 0
    %p325 = por %p323, %p324
    %p326 = scmp.le.s32.totalorder 1, %s18
    %p327 = scmp.lt.s32.totalorder %s18, 3
    %p328 = pnand %p326, %p327
    %p329 = pneg %p328
    // Predicated region
    $region9: #{tpu_custom_call.1} parent=5 // pred_check
      _
    $region10: #{tpu_custom_call.1} parent=5 // pred_check_branch
      %331 = sbr.rel (%p328) target = $region12
    $region11: #{tpu_custom_call.1} parent=5 // pred_region
      %s332 = ssub.s32 %s18, 1
      // Predicated region
      $region13: #{tpu_custom_call.1} parent=11 // pred_check
        %p333 = pneg %p157
      $region14: #{tpu_custom_call.1} parent=11 // pred_check_branch
        %335 = sbr.rel (%p333) target = $region16
      $region15: #{tpu_custom_call.1} parent=11 // pred_region
        _
      $region16: #{tpu_custom_call.1} parent=11 // pred_fallthru
        _
      // Predicated region
      $region17: #{tpu_custom_call.1} parent=11 // pred_check
        %p336 = pneg %p178
      $region18: #{tpu_custom_call.1} parent=11 // pred_check_branch
        %338 = sbr.rel (%p336) target = $region20
      $region19: #{tpu_custom_call.1} parent=11 // pred_region
        _
      $region20: #{tpu_custom_call.1} parent=11 // pred_fallthru
        _
      // Predicated region
      $region21: #{tpu_custom_call.1} parent=11 // pred_check
        %p339 = pneg %p199
      $region22: #{tpu_custom_call.1} parent=11 // pred_check_branch
        %341 = sbr.rel (%p339) target = $region24
      $region23: #{tpu_custom_call.1} parent=11 // pred_region
        _
      $region24: #{tpu_custom_call.1} parent=11 // pred_fallthru
        _
      // Predicated region
      $region25: #{tpu_custom_call.1} parent=11 // pred_check
        %p342 = pneg %p220
      $region26: #{tpu_custom_call.1} parent=11 // pred_check_branch
        %344 = sbr.rel (%p342) target = $region28
      $region27: #{tpu_custom_call.1} parent=11 // pred_region
        _
      $region28: #{tpu_custom_call.1} parent=11 // pred_fallthru
        _
      // Predicated region
      $region29: #{tpu_custom_call.1} parent=11 // pred_check
        %p345 = pneg %p241
      $region30: #{tpu_custom_call.1} parent=11 // pred_check_branch
        %347 = sbr.rel (%p345) target = $region32
      $region31: #{tpu_custom_call.1} parent=11 // pred_region
        _
      $region32: #{tpu_custom_call.1} parent=11 // pred_fallthru
        _
      // Predicated region
      $region33: #{tpu_custom_call.1} parent=11 // pred_check
        %p348 = pneg %p262
      $region34: #{tpu_custom_call.1} parent=11 // pred_check_branch
        %350 = sbr.rel (%p348) target = $region36
      $region35: #{tpu_custom_call.1} parent=11 // pred_region
        _
      $region36: #{tpu_custom_call.1} parent=11 // pred_fallthru
        _
    $region12: #{tpu_custom_call.1} parent=5 // pred_fallthru
      _
    %p351 = scmp.lt.s32.totalorder %s18, 2
    // Predicated region
    $region37: #{tpu_custom_call.1} parent=5 // pred_check
      %p352 = pneg %p351
    $region38: #{tpu_custom_call.1} parent=5 // pred_check_branch
      %354 = sbr.rel (%p352) target = $region40
    $region39: #{tpu_custom_call.1} parent=5 // pred_region
      // Predicated region
      $region41: #{tpu_custom_call.1} parent=39 // pred_check
        %p355 = pneg %p50
      $region42: #{tpu_custom_call.1} parent=39 // pred_check_branch
        %357 = sbr.rel (%p355) target = $region44
      $region43: #{tpu_custom_call.1} parent=39 // pred_region
        %p358 = scmp.lt.s32.totalorder %s25, 1
        %s359 = scalar_select %p358, %s25, 1
        %s360 = smul.addr %s359, 32
        %s361 = smul.addr %s360, 8
        %s362 = scalar_lea.vmem %s0, %s361
      $region44: #{tpu_custom_call.1} parent=39 // pred_fallthru
        _
      // Predicated region
      $region45: #{tpu_custom_call.1} parent=39 // pred_check
        %p363 = pneg %p78
      $region46: #{tpu_custom_call.1} parent=39 // pred_check_branch
        %365 = sbr.rel (%p363) target = $region48
      $region47: #{tpu_custom_call.1} parent=39 // pred_region
        %s366 = smul.u32 16, %s26
        %p367 = scmp.lt.s32.totalorder %s25, 1
        %s368 = scalar_select %p367, %s25, 1
        %p369 = scmp.lt.s32.totalorder %s366, 15
        %s370 = scalar_select %p369, %s366, 15
        %s371 = smul.addr %s370, 2
        %s372 = smul.addr %s368, 32
        %s373 = sadd.s32 %s371, %s372
        %s374 = smul.addr %s373, 8
        %s375 = scalar_lea.vmem %s1, %s374
        %s376 = smul.u32 16, %s26
      $region48: #{tpu_custom_call.1} parent=39 // pred_fallthru
        _
      // Predicated region
      $region49: #{tpu_custom_call.1} parent=39 // pred_check
        %p377 = pneg %p104
      $region50: #{tpu_custom_call.1} parent=39 // pred_check_branch
        %379 = sbr.rel (%p377) target = $region52
      $region51: #{tpu_custom_call.1} parent=39 // pred_region
        %p380 = scmp.lt.s32.totalorder %s25, 1
        %s381 = scalar_select %p380, %s25, 1
        %s382 = scalar_lea.vmem %s2, %s381
      $region52: #{tpu_custom_call.1} parent=39 // pred_fallthru
        _
      // Predicated region
      $region53: #{tpu_custom_call.1} parent=39 // pred_check
        %p383 = pneg %p130
      $region54: #{tpu_custom_call.1} parent=39 // pred_check_branch
        %385 = sbr.rel (%p383) target = $region56
      $region55: #{tpu_custom_call.1} parent=39 // pred_region
        %p386 = scmp.lt.s32.totalorder %s25, 1
        %s387 = scalar_select %p386, %s25, 1
        %s388 = scalar_lea.vmem %s3, %s387
      $region56: #{tpu_custom_call.1} parent=39 // pred_fallthru
        _
    $region40: #{tpu_custom_call.1} parent=5 // pred_fallthru
      _
    %p389 = scmp.le.s32.totalorder 1, %s18
    %p390 = scmp.lt.s32.totalorder %s18, 3
    %p391 = pnand %p389, %p390
    %p392 = pneg %p391
    // Predicated region
    $region57: #{tpu_custom_call.1} parent=5 // pred_check
      _
    $region58: #{tpu_custom_call.1} parent=5 // pred_check_branch
      %394 = sbr.rel (%p391) target = $region60
    $region59: #{tpu_custom_call.1} parent=5 // pred_region
      %s395 = ssub.s32 %s18, 1
      %p396 = scmp.lt.s32.totalorder %s27, 1
      %s397 = scalar_select %p396, %s27, 1
      %s398 = smul.addr %s397, 32
      %s399 = smul.addr %s398, 8
      %s400 = scalar_lea.vmem %s0, %s399
      %p401 = pneg %p56
      %p402 = pneg %p53
      %s403 = smul.u32 16, %s28
      %p404 = scmp.lt.s32.totalorder %s27, 1
      %s405 = scalar_select %p404, %s27, 1
      %p406 = scmp.lt.s32.totalorder %s403, 15
      %s407 = scalar_select %p406, %s403, 15
      %s408 = smul.addr %s407, 2
      %s409 = smul.addr %s405, 32
      %s410 = sadd.s32 %s408, %s409
      %s411 = smul.addr %s410, 8
      %s412 = scalar_lea.vmem %s1, %s411
      %p413 = pneg %p84
      %p414 = pneg %p81
      %p415 = scmp.lt.s32.totalorder %s27, 1
      %s416 = scalar_select %p415, %s27, 1
      %s417 = scalar_lea.vmem %s2, %s416
      %p418 = pneg %p110
      %p419 = pneg %p107
      %p420 = scmp.lt.s32.totalorder %s27, 1
      %s421 = scalar_select %p420, %s27, 1
      %s422 = scalar_lea.vmem %s3, %s421
      %p423 = pneg %p136
      %p424 = pneg %p133
      %p425 = pneg %p157
      %p426 = pneg %p154
      %p427 = pneg %p178
      %p428 = pneg %p175
      %p429 = pneg %p199
      %p430 = pneg %p196
      %p431 = pneg %p220
      %p432 = pneg %p217
      %p433 = pneg %p241
      %p434 = pneg %p238
      %p435 = pneg %p262
      %p436 = pneg %p259
      %p437 = pneg %p290
      %p438 = pneg %p287
      %s439 = smul.u32 16, %s28
      %p440 = scmp.lt.s32.totalorder %s27, 1
      %s441 = scalar_select %p440, %s27, 1
      %p442 = scmp.lt.s32.totalorder %s439, 15
      %s443 = scalar_select %p442, %s439, 15
      %s444 = smul.addr %s443, 2
      %s445 = smul.addr %s441, 32
      %s446 = sadd.s32 %s444, %s445
      %s447 = smul.addr %s446, 8
      %s448 = scalar_lea.vmem %s10, %s447
      %p449 = pneg %p318
      %p450 = pneg %p315
      %s451 = smul.u32 16, %s28
      %p452 = scmp.lt.s32.totalorder %s27, 1
      %s453 = scalar_select %p452, %s27, 1
      %p454 = scmp.lt.s32.totalorder %s451, 15
      %s455 = scalar_select %p454, %s451, 15
      %s456 = smul.addr %s455, 2
      %s457 = smul.addr %s453, 32
      %s458 = sadd.s32 %s456, %s457
      %s459 = smul.addr %s458, 8
      %s460 = scalar_lea.vmem %s11, %s459
      %p461 = scmp.lt.s32.totalorder %s27, 1
      %s462 = scalar_select %p461, %s27, 1
      %s463 = smul.addr %s462, 32
      %s464 = smul.addr %s463, 8
      %s465 = scalar_lea.vmem %s0, %s464
      %s466 = smul.u32 16, %s28
      %p467 = scmp.lt.s32.totalorder %s27, 1
      %s468 = scalar_select %p467, %s27, 1
      %p469 = scmp.lt.s32.totalorder %s466, 15
      %s470 = scalar_select %p469, %s466, 15
      %s471 = smul.addr %s470, 2
      %s472 = smul.addr %s468, 32
      %s473 = sadd.s32 %s471, %s472
      %s474 = smul.addr %s473, 8
      %s475 = scalar_lea.vmem %s1, %s474
      %s476 = smul.u32 16, %s28
      %p477 = scmp.lt.s32.totalorder %s27, 1
      %s478 = scalar_select %p477, %s27, 1
      %s479 = scalar_lea.vmem %s2, %s478
      %p480 = scmp.lt.s32.totalorder %s27, 1
      %s481 = scalar_select %p480, %s27, 1
      %s482 = scalar_lea.vmem %s3, %s481
      %s483 = smul.u32 16, %s28
      %p484 = scmp.lt.s32.totalorder %s27, 1
      %s485 = scalar_select %p484, %s27, 1
      %p486 = scmp.lt.s32.totalorder %s483, 15
      %s487 = scalar_select %p486, %s483, 15
      %s488 = smul.addr %s487, 2
      %s489 = smul.addr %s485, 32
      %s490 = sadd.s32 %s488, %s489
      %s491 = smul.addr %s490, 8
      %s492 = scalar_lea.vmem %s10, %s491
      %s493 = smul.u32 16, %s28
      %s494 = smul.u32 16, %s28
      %p495 = scmp.lt.s32.totalorder %s27, 1
      %s496 = scalar_select %p495, %s27, 1
      %p497 = scmp.lt.s32.totalorder %s494, 15
      %s498 = scalar_select %p497, %s494, 15
      %s499 = smul.addr %s498, 2
      %s500 = smul.addr %s496, 32
      %s501 = sadd.s32 %s499, %s500
      %s502 = smul.addr %s501, 8
      %s503 = scalar_lea.vmem %s11, %s502
      %s504 = smul.u32 16, %s28
      %p505 = scmp.eq.s32.totalorder %s28, 0
      // Predicated region
      $region61: #{tpu_custom_call.1} parent=59 // pred_check
        %p506 = pneg %p505
      $region62: #{tpu_custom_call.1} parent=59 // pred_check_branch
        %508 = sbr.rel (%p506) target = $region64
      $region63: #{tpu_custom_call.1} parent=59 // pred_region
        %vm509 = vcmask 31744
        %510 = vst.msk [vmem:[#allocation2] sm:$0xff] %vm509, 0.0
        %511 = vst.msk [vmem:[#allocation2 + $0x8] sm:$0xff] %vm509, 0.0
        %512 = vst.msk [vmem:[#allocation2 + $0x10] sm:$0xff] %vm509, 0.0
        %s513 = scalar_lea.vmem [#allocation2], 24
        %vm514 = vcmask 24576
        %515 = vst.msk [vmem:[%s513] sm:$0x1] %vm514, 0.0
        %516 = vst.msk [vmem:[%s513 + $0x18] sm:$0x1] %vm514, 0.0
        %517 = vst.msk [vmem:[%s513 + $0x30] sm:$0x1] %vm514, 0.0
        %518 = vst.msk [vmem:[%s513 + $0x48] sm:$0x1] %vm514, 0.0
        %519 = vst.msk [vmem:[%s513 + $0x60] sm:$0x1] %vm514, 0.0
        %520 = vst.msk [vmem:[%s513 + $0x78] sm:$0x1] %vm514, 0.0
        %521 = vst.msk [vmem:[%s513 + $0x90] sm:$0x1] %vm514, 0.0
        %522 = vst.msk [vmem:[%s513 + $0xa8] sm:$0x1] %vm514, 0.0
        %523 = vst.msk [vmem:[%s513 + $0xc0] sm:$0x1] %vm514, 0.0
        %524 = vst.msk [vmem:[%s513 + $0xd8] sm:$0x1] %vm514, 0.0
        %525 = vst.msk [vmem:[%s513 + $0xf0] sm:$0x1] %vm514, 0.0
        %526 = vst.msk [vmem:[%s513 + $0x108] sm:$0x1] %vm514, 0.0
        %527 = vst.msk [vmem:[%s513 + $0x120] sm:$0x1] %vm514, 0.0
        %528 = vst.msk [vmem:[%s513 + $0x138] sm:$0x1] %vm514, 0.0
        %529 = vst.msk [vmem:[%s513 + $0x150] sm:$0x1] %vm514, 0.0
        %530 = vst.msk [vmem:[%s513 + $0x168] sm:$0x1] %vm514, 0.0
        %vm531 = vcmask 30720
        %532 = vst.msk [vmem:[%s513 + $0x11] sm:$0x7f] %vm531, 0.0
        %533 = vst.msk [vmem:[%s513 + $0x29] sm:$0x7f] %vm531, 0.0
        %534 = vst.msk [vmem:[%s513 + $0x41] sm:$0x7f] %vm531, 0.0
        %535 = vst.msk [vmem:[%s513 + $0x59] sm:$0x7f] %vm531, 0.0
        %536 = vst.msk [vmem:[%s513 + $0x71] sm:$0x7f] %vm531, 0.0
        %537 = vst.msk [vmem:[%s513 + $0x89] sm:$0x7f] %vm531, 0.0
        %538 = vst.msk [vmem:[%s513 + $0xa1] sm:$0x7f] %vm531, 0.0
        %539 = vst.msk [vmem:[%s513 + $0xb9] sm:$0x7f] %vm531, 0.0
        %540 = vst.msk [vmem:[%s513 + $0xd1] sm:$0x7f] %vm531, 0.0
        %541 = vst.msk [vmem:[%s513 + $0xe9] sm:$0x7f] %vm531, 0.0
        %542 = vst.msk [vmem:[%s513 + $0x101] sm:$0x7f] %vm531, 0.0
        %543 = vst.msk [vmem:[%s513 + $0x119] sm:$0x7f] %vm531, 0.0
        %544 = vst.msk [vmem:[%s513 + $0x131] sm:$0x7f] %vm531, 0.0
        %545 = vst.msk [vmem:[%s513 + $0x149] sm:$0x7f] %vm531, 0.0
        %546 = vst.msk [vmem:[%s513 + $0x161] sm:$0x7f] %vm531, 0.0
        %547 = vst.msk [vmem:[%s513 + $0x179] sm:$0x7f] %vm531, 0.0
        %548 = vst.msk [vmem:[#allocation3] sm:$0x1] %vm514, 0.0
        %549 = vst.msk [vmem:[#allocation3 + $0x18] sm:$0x1] %vm514, 0.0
        %550 = vst.msk [vmem:[#allocation3 + $0x30] sm:$0x1] %vm514, 0.0
        %551 = vst.msk [vmem:[#allocation3 + $0x48] sm:$0x1] %vm514, 0.0
        %552 = vst.msk [vmem:[#allocation3 + $0x60] sm:$0x1] %vm514, 0.0
        %553 = vst.msk [vmem:[#allocation3 + $0x78] sm:$0x1] %vm514, 0.0
        %554 = vst.msk [vmem:[#allocation3 + $0x90] sm:$0x1] %vm514, 0.0
        %555 = vst.msk [vmem:[#allocation3 + $0xa8] sm:$0x1] %vm514, 0.0
        %556 = vst.msk [vmem:[#allocation3 + $0xc0] sm:$0x1] %vm514, 0.0
        %557 = vst.msk [vmem:[#allocation3 + $0xd8] sm:$0x1] %vm514, 0.0
        %558 = vst.msk [vmem:[#allocation3 + $0xf0] sm:$0x1] %vm514, 0.0
        %559 = vst.msk [vmem:[#allocation3 + $0x108] sm:$0x1] %vm514, 0.0
        %560 = vst.msk [vmem:[#allocation3 + $0x120] sm:$0x1] %vm514, 0.0
        %561 = vst.msk [vmem:[#allocation3 + $0x138] sm:$0x1] %vm514, 0.0
        %562 = vst.msk [vmem:[#allocation3 + $0x150] sm:$0x1] %vm514, 0.0
        %563 = vst.msk [vmem:[#allocation3 + $0x168] sm:$0x1] %vm514, 0.0
        %564 = vst.msk [vmem:[#allocation3 + $0x11] sm:$0x7f] %vm531, 0.0
        %565 = vst.msk [vmem:[#allocation3 + $0x29] sm:$0x7f] %vm531, 0.0
        %566 = vst.msk [vmem:[#allocation3 + $0x41] sm:$0x7f] %vm531, 0.0
        %567 = vst.msk [vmem:[#allocation3 + $0x59] sm:$0x7f] %vm531, 0.0
        %568 = vst.msk [vmem:[#allocation3 + $0x71] sm:$0x7f] %vm531, 0.0
        %569 = vst.msk [vmem:[#allocation3 + $0x89] sm:$0x7f] %vm531, 0.0
        %570 = vst.msk [vmem:[#allocation3 + $0xa1] sm:$0x7f] %vm531, 0.0
        %571 = vst.msk [vmem:[#allocation3 + $0xb9] sm:$0x7f] %vm531, 0.0
        %572 = vst.msk [vmem:[#allocation3 + $0xd1] sm:$0x7f] %vm531, 0.0
        %573 = vst.msk [vmem:[#allocation3 + $0xe9] sm:$0x7f] %vm531, 0.0
        %574 = vst.msk [vmem:[#allocation3 + $0x101] sm:$0x7f] %vm531, 0.0
        %575 = vst.msk [vmem:[#allocation3 + $0x119] sm:$0x7f] %vm531, 0.0
        %576 = vst.msk [vmem:[#allocation3 + $0x131] sm:$0x7f] %vm531, 0.0
        %577 = vst.msk [vmem:[#allocation3 + $0x149] sm:$0x7f] %vm531, 0.0
        %578 = vst.msk [vmem:[#allocation3 + $0x161] sm:$0x7f] %vm531, 0.0
        %579 = vst.msk [vmem:[#allocation3 + $0x179] sm:$0x7f] %vm531, 0.0
        %v580 = vld [vmem:[%s465] sm:$0xff]
        %v581 = vld [vmem:[%s465 + $0x8] sm:$0xff]
        %v582 = vld [vmem:[%s465 + $0x10] sm:$0xff]
        %v583 = vld [vmem:[%s465 + $0x18] sm:$0xff]
        %v584 = vld [vmem:[%s465 + $0x20] sm:$0xff]
        %v585 = vld [vmem:[%s465 + $0x28] sm:$0xff]
        %v586 = vld [vmem:[%s465 + $0x30] sm:$0xff]
        %v587 = vld [vmem:[%s465 + $0x38] sm:$0xff]
        %v588 = vld [vmem:[%s465 + $0x40] sm:$0xff]
        %v589 = vld [vmem:[%s465 + $0x48] sm:$0xff]
        %v590 = vld [vmem:[%s465 + $0x50] sm:$0xff]
        %v591 = vld [vmem:[%s465 + $0x58] sm:$0xff]
        %v592 = vld [vmem:[%s465 + $0x60] sm:$0xff]
        %v593 = vld [vmem:[%s465 + $0x68] sm:$0xff]
        %v594 = vld [vmem:[%s465 + $0x70] sm:$0xff]
        %v595 = vld [vmem:[%s465 + $0x78] sm:$0xff]
        %v596 = vld [vmem:[%s465 + $0x80] sm:$0xff]
        %v597 = vld [vmem:[%s465 + $0x88] sm:$0xff]
        %v598 = vld [vmem:[%s465 + $0x90] sm:$0xff]
        %v599 = vld [vmem:[%s465 + $0x98] sm:$0xff]
        %v600 = vld [vmem:[%s465 + $0xa0] sm:$0xff]
        %v601 = vld [vmem:[%s465 + $0xa8] sm:$0xff]
        %v602 = vld [vmem:[%s465 + $0xb0] sm:$0xff]
        %v603 = vld [vmem:[%s465 + $0xb8] sm:$0xff]
        %v604 = vld [vmem:[%s465 + $0xc0] sm:$0xff]
        %v605 = vld [vmem:[%s465 + $0xc8] sm:$0xff]
        %v606 = vld [vmem:[%s465 + $0xd0] sm:$0xff]
        %v607 = vld [vmem:[%s465 + $0xd8] sm:$0xff]
        %v608 = vld [vmem:[%s465 + $0xe0] sm:$0xff]
        %v609 = vld [vmem:[%s465 + $0xe8] sm:$0xff]
        %v610 = vld [vmem:[%s465 + $0xf0] sm:$0xff]
        %v611 = vld [vmem:[%s465 + $0xf8] sm:$0xff]
        %612 = vst.msk [vmem:[%s513 + $0x1] sm:$0xff] %vm509, %v580
        %613 = vst.msk [vmem:[%s513 + $0x9] sm:$0xff] %vm509, %v581
        %614 = vst.msk [vmem:[%s513 + $0x19] sm:$0xff] %vm509, %v582
        %615 = vst.msk [vmem:[%s513 + $0x21] sm:$0xff] %vm509, %v583
        %616 = vst.msk [vmem:[%s513 + $0x31] sm:$0xff] %vm509, %v584
        %617 = vst.msk [vmem:[%s513 + $0x39] sm:$0xff] %vm509, %v585
        %618 = vst.msk [vmem:[%s513 + $0x49] sm:$0xff] %vm509, %v586
        %619 = vst.msk [vmem:[%s513 + $0x51] sm:$0xff] %vm509, %v587
        %620 = vst.msk [vmem:[%s513 + $0x61] sm:$0xff] %vm509, %v588
        %621 = vst.msk [vmem:[%s513 + $0x69] sm:$0xff] %vm509, %v589
        %622 = vst.msk [vmem:[%s513 + $0x79] sm:$0xff] %vm509, %v590
        %623 = vst.msk [vmem:[%s513 + $0x81] sm:$0xff] %vm509, %v591
        %624 = vst.msk [vmem:[%s513 + $0x91] sm:$0xff] %vm509, %v592
        %625 = vst.msk [vmem:[%s513 + $0x99] sm:$0xff] %vm509, %v593
        %626 = vst.msk [vmem:[%s513 + $0xa9] sm:$0xff] %vm509, %v594
        %627 = vst.msk [vmem:[%s513 + $0xb1] sm:$0xff] %vm509, %v595
        %628 = vst.msk [vmem:[%s513 + $0xc1] sm:$0xff] %vm509, %v596
        %629 = vst.msk [vmem:[%s513 + $0xc9] sm:$0xff] %vm509, %v597
        %630 = vst.msk [vmem:[%s513 + $0xd9] sm:$0xff] %vm509, %v598
        %631 = vst.msk [vmem:[%s513 + $0xe1] sm:$0xff] %vm509, %v599
        %632 = vst.msk [vmem:[%s513 + $0xf1] sm:$0xff] %vm509, %v600
        %633 = vst.msk [vmem:[%s513 + $0xf9] sm:$0xff] %vm509, %v601
        %634 = vst.msk [vmem:[%s513 + $0x109] sm:$0xff] %vm509, %v602
        %635 = vst.msk [vmem:[%s513 + $0x111] sm:$0xff] %vm509, %v603
        %636 = vst.msk [vmem:[%s513 + $0x121] sm:$0xff] %vm509, %v604
        %637 = vst.msk [vmem:[%s513 + $0x129] sm:$0xff] %vm509, %v605
        %638 = vst.msk [vmem:[%s513 + $0x139] sm:$0xff] %vm509, %v606
        %639 = vst.msk [vmem:[%s513 + $0x141] sm:$0xff] %vm509, %v607
        %640 = vst.msk [vmem:[%s513 + $0x151] sm:$0xff] %vm509, %v608
        %641 = vst.msk [vmem:[%s513 + $0x159] sm:$0xff] %vm509, %v609
        %642 = vst.msk [vmem:[%s513 + $0x169] sm:$0xff] %vm509, %v610
        %643 = vst.msk [vmem:[%s513 + $0x171] sm:$0xff] %vm509, %v611
      $region64: #{tpu_custom_call.1} parent=59 // pred_fallthru
        _
      %v644 = vld [vmem:[%s475] sm:$0xff]
      %v645 = vld [vmem:[%s475 + $0x8] sm:$0xff]
      %v646 = vld [vmem:[%s475 + $0x10] sm:$0xff]
      %v647 = vld [vmem:[%s475 + $0x18] sm:$0xff]
      %v648 = vld [vmem:[%s475 + $0x20] sm:$0xff]
      %v649 = vld [vmem:[%s475 + $0x28] sm:$0xff]
      %v650 = vld [vmem:[%s475 + $0x30] sm:$0xff]
      %v651 = vld [vmem:[%s475 + $0x38] sm:$0xff]
      %v652 = vld [vmem:[%s475 + $0x40] sm:$0xff]
      %v653 = vld [vmem:[%s475 + $0x48] sm:$0xff]
      %v654 = vld [vmem:[%s475 + $0x50] sm:$0xff]
      %v655 = vld [vmem:[%s475 + $0x58] sm:$0xff]
      %v656 = vld [vmem:[%s475 + $0x60] sm:$0xff]
      %v657 = vld [vmem:[%s475 + $0x68] sm:$0xff]
      %v658 = vld [vmem:[%s475 + $0x70] sm:$0xff]
      %v659 = vld [vmem:[%s475 + $0x78] sm:$0xff]
      %v660 = vld [vmem:[%s475 + $0x80] sm:$0xff]
      %v661 = vld [vmem:[%s475 + $0x88] sm:$0xff]
      %v662 = vld [vmem:[%s475 + $0x90] sm:$0xff]
      %v663 = vld [vmem:[%s475 + $0x98] sm:$0xff]
      %v664 = vld [vmem:[%s475 + $0xa0] sm:$0xff]
      %v665 = vld [vmem:[%s475 + $0xa8] sm:$0xff]
      %v666 = vld [vmem:[%s475 + $0xb0] sm:$0xff]
      %v667 = vld [vmem:[%s475 + $0xb8] sm:$0xff]
      %v668 = vld [vmem:[%s475 + $0xc0] sm:$0xff]
      %v669 = vld [vmem:[%s475 + $0xc8] sm:$0xff]
      %v670 = vld [vmem:[%s475 + $0xd0] sm:$0xff]
      %v671 = vld [vmem:[%s475 + $0xd8] sm:$0xff]
      %v672 = vld [vmem:[%s475 + $0xe0] sm:$0xff]
      %v673 = vld [vmem:[%s475 + $0xe8] sm:$0xff]
      %v674 = vld [vmem:[%s475 + $0xf0] sm:$0xff]
      %v675 = vld [vmem:[%s475 + $0xf8] sm:$0xff]
      %vm676 = vcmask 31744
      %677 = vst.msk [vmem:[#allocation3 + $0x1] sm:$0xff] %vm676, %v644
      %678 = vst.msk [vmem:[#allocation3 + $0x9] sm:$0xff] %vm676, %v645
      %679 = vst.msk [vmem:[#allocation3 + $0x19] sm:$0xff] %vm676, %v646
      %680 = vst.msk [vmem:[#allocation3 + $0x21] sm:$0xff] %vm676, %v647
      %681 = vst.msk [vmem:[#allocation3 + $0x31] sm:$0xff] %vm676, %v648
      %682 = vst.msk [vmem:[#allocation3 + $0x39] sm:$0xff] %vm676, %v649
      %683 = vst.msk [vmem:[#allocation3 + $0x49] sm:$0xff] %vm676, %v650
      %684 = vst.msk [vmem:[#allocation3 + $0x51] sm:$0xff] %vm676, %v651
      %685 = vst.msk [vmem:[#allocation3 + $0x61] sm:$0xff] %vm676, %v652
      %686 = vst.msk [vmem:[#allocation3 + $0x69] sm:$0xff] %vm676, %v653
      %687 = vst.msk [vmem:[#allocation3 + $0x79] sm:$0xff] %vm676, %v654
      %688 = vst.msk [vmem:[#allocation3 + $0x81] sm:$0xff] %vm676, %v655
      %689 = vst.msk [vmem:[#allocation3 + $0x91] sm:$0xff] %vm676, %v656
      %690 = vst.msk [vmem:[#allocation3 + $0x99] sm:$0xff] %vm676, %v657
      %691 = vst.msk [vmem:[#allocation3 + $0xa9] sm:$0xff] %vm676, %v658
      %692 = vst.msk [vmem:[#allocation3 + $0xb1] sm:$0xff] %vm676, %v659
      %693 = vst.msk [vmem:[#allocation3 + $0xc1] sm:$0xff] %vm676, %v660
      %694 = vst.msk [vmem:[#allocation3 + $0xc9] sm:$0xff] %vm676, %v661
      %695 = vst.msk [vmem:[#allocation3 + $0xd9] sm:$0xff] %vm676, %v662
      %696 = vst.msk [vmem:[#allocation3 + $0xe1] sm:$0xff] %vm676, %v663
      %697 = vst.msk [vmem:[#allocation3 + $0xf1] sm:$0xff] %vm676, %v664
      %698 = vst.msk [vmem:[#allocation3 + $0xf9] sm:$0xff] %vm676, %v665
      %699 = vst.msk [vmem:[#allocation3 + $0x109] sm:$0xff] %vm676, %v666
      %700 = vst.msk [vmem:[#allocation3 + $0x111] sm:$0xff] %vm676, %v667
      %701 = vst.msk [vmem:[#allocation3 + $0x121] sm:$0xff] %vm676, %v668
      %702 = vst.msk [vmem:[#allocation3 + $0x129] sm:$0xff] %vm676, %v669
      %703 = vst.msk [vmem:[#allocation3 + $0x139] sm:$0xff] %vm676, %v670
      %704 = vst.msk [vmem:[#allocation3 + $0x141] sm:$0xff] %vm676, %v671
      %705 = vst.msk [vmem:[#allocation3 + $0x151] sm:$0xff] %vm676, %v672
      %706 = vst.msk [vmem:[#allocation3 + $0x159] sm:$0xff] %vm676, %v673
      %707 = vst.msk [vmem:[#allocation3 + $0x169] sm:$0xff] %vm676, %v674
      %708 = vst.msk [vmem:[#allocation3 + $0x171] sm:$0xff] %vm676, %v675
      %s709 = smul.u32 %s28, 16
      %s710 = smul.u32 %s709, 24
      %s711 = scalar_lea.vmem [#allocation2], %s710
      %v712 = vld [vmem:[%s711] sm:$0xff]
      %v713 = vld [vmem:[%s711 + $0x8] sm:$0xff]
      %v714 = vld [vmem:[%s711 + $0x10] sm:$0xff]
      %v715 = vld [vmem:[%s711 + $0x18] sm:$0xff]
      %v716 = vld [vmem:[%s711 + $0x20] sm:$0xff]
      %v717 = vld [vmem:[%s711 + $0x28] sm:$0xff]
      %v718 = vld [vmem:[%s711 + $0x30] sm:$0xff]
      %v719 = vld [vmem:[%s711 + $0x38] sm:$0xff]
      %v720 = vld [vmem:[%s711 + $0x40] sm:$0xff]
      %v721 = vld [vmem:[%s711 + $0x48] sm:$0xff]
      %v722 = vld [vmem:[%s711 + $0x50] sm:$0xff]
      %v723 = vld [vmem:[%s711 + $0x58] sm:$0xff]
      %v724 = vld [vmem:[%s711 + $0x60] sm:$0xff]
      %v725 = vld [vmem:[%s711 + $0x68] sm:$0xff]
      %v726 = vld [vmem:[%s711 + $0x70] sm:$0xff]
      %v727 = vld [vmem:[%s711 + $0x78] sm:$0xff]
      %v728 = vld [vmem:[%s711 + $0x80] sm:$0xff]
      %v729 = vld [vmem:[%s711 + $0x88] sm:$0xff]
      %v730 = vld [vmem:[%s711 + $0x90] sm:$0xff]
      %v731 = vld [vmem:[%s711 + $0x98] sm:$0xff]
      %v732 = vld [vmem:[%s711 + $0xa0] sm:$0xff]
      %v733 = vld [vmem:[%s711 + $0xa8] sm:$0xff]
      %v734 = vld [vmem:[%s711 + $0xb0] sm:$0xff]
      %v735 = vld [vmem:[%s711 + $0xb8] sm:$0xff]
      %v736 = vld [vmem:[%s711 + $0xc0] sm:$0xff]
      %v737 = vld [vmem:[%s711 + $0xc8] sm:$0xff]
      %v738 = vld [vmem:[%s711 + $0xd0] sm:$0xff]
      %v739 = vld [vmem:[%s711 + $0xd8] sm:$0xff]
      %v740 = vld [vmem:[%s711 + $0xe0] sm:$0xff]
      %v741 = vld [vmem:[%s711 + $0xe8] sm:$0xff]
      %v742 = vld [vmem:[%s711 + $0xf0] sm:$0xff]
      %v743 = vld [vmem:[%s711 + $0xf8] sm:$0xff]
      %v744 = vld [vmem:[%s711 + $0x100] sm:$0xff]
      %v745 = vld [vmem:[%s711 + $0x108] sm:$0xff]
      %v746 = vld [vmem:[%s711 + $0x110] sm:$0xff]
      %v747 = vld [vmem:[%s711 + $0x118] sm:$0xff]
      %v748 = vld [vmem:[%s711 + $0x120] sm:$0xff]
      %v749 = vld [vmem:[%s711 + $0x128] sm:$0xff]
      %v750 = vld [vmem:[%s711 + $0x130] sm:$0xff]
      %v751 = vld [vmem:[%s711 + $0x138] sm:$0xff]
      %v752 = vld [vmem:[%s711 + $0x140] sm:$0xff]
      %v753 = vld [vmem:[%s711 + $0x148] sm:$0xff]
      %v754 = vld [vmem:[%s711 + $0x150] sm:$0xff]
      %v755 = vld [vmem:[%s711 + $0x158] sm:$0xff]
      %v756 = vld [vmem:[%s711 + $0x160] sm:$0xff]
      %v757 = vld [vmem:[%s711 + $0x168] sm:$0xff]
      %v758 = vld [vmem:[%s711 + $0x170] sm:$0xff]
      %v759 = vld [vmem:[%s711 + $0x178] sm:$0xff]
      %v760 = vld [vmem:[#allocation3] sm:$0xff]
      %v761 = vld [vmem:[#allocation3 + $0x8] sm:$0xff]
      %v762 = vld [vmem:[#allocation3 + $0x18] sm:$0xff]
      %v763 = vld [vmem:[#allocation3 + $0x20] sm:$0xff]
      %v764 = vld [vmem:[#allocation3 + $0x30] sm:$0xff]
      %v765 = vld [vmem:[#allocation3 + $0x38] sm:$0xff]
      %v766 = vld [vmem:[#allocation3 + $0x48] sm:$0xff]
      %v767 = vld [vmem:[#allocation3 + $0x50] sm:$0xff]
      %v768 = vld [vmem:[#allocation3 + $0x60] sm:$0xff]
      %v769 = vld [vmem:[#allocation3 + $0x68] sm:$0xff]
      %v770 = vld [vmem:[#allocation3 + $0x78] sm:$0xff]
      %v771 = vld [vmem:[#allocation3 + $0x80] sm:$0xff]
      %v772 = vld [vmem:[#allocation3 + $0x90] sm:$0xff]
      %v773 = vld [vmem:[#allocation3 + $0x98] sm:$0xff]
      %v774 = vld [vmem:[#allocation3 + $0xa8] sm:$0xff]
      %v775 = vld [vmem:[#allocation3 + $0xb0] sm:$0xff]
      %v776 = vld [vmem:[#allocation3 + $0xc0] sm:$0xff]
      %v777 = vld [vmem:[#allocation3 + $0xc8] sm:$0xff]
      %v778 = vld [vmem:[#allocation3 + $0xd8] sm:$0xff]
      %v779 = vld [vmem:[#allocation3 + $0xe0] sm:$0xff]
      %v780 = vld [vmem:[#allocation3 + $0xf0] sm:$0xff]
      %v781 = vld [vmem:[#allocation3 + $0xf8] sm:$0xff]
      %v782 = vld [vmem:[#allocation3 + $0x108] sm:$0xff]
      %v783 = vld [vmem:[#allocation3 + $0x110] sm:$0xff]
      %v784 = vld [vmem:[#allocation3 + $0x120] sm:$0xff]
      %v785 = vld [vmem:[#allocation3 + $0x128] sm:$0xff]
      %v786 = vld [vmem:[#allocation3 + $0x138] sm:$0xff]
      %v787 = vld [vmem:[#allocation3 + $0x140] sm:$0xff]
      %v788 = vld [vmem:[#allocation3 + $0x150] sm:$0xff]
      %v789 = vld [vmem:[#allocation3 + $0x158] sm:$0xff]
      %v790 = vld [vmem:[#allocation3 + $0x168] sm:$0xff]
      %v791 = vld [vmem:[#allocation3 + $0x170] sm:$0xff]
      %vm840 = vcmask 1046528
      %v841 = vrot.slane %v712, 1
      %v842 = vrot.slane %v713, 1
      %v843 = vsel %vm840, %v841, %v842
      %v844 = vrot.slane %v714, 1
      %v845 = vsel %vm840, %v842, %v844
      %v846 = vrot.slane %v715, 1
      %v847 = vrot.slane %v716, 1
      %v848 = vsel %vm840, %v846, %v847
      %v849 = vrot.slane %v717, 1
      %v850 = vsel %vm840, %v847, %v849
      %v851 = vrot.slane %v718, 1
      %v852 = vrot.slane %v719, 1
      %v853 = vsel %vm840, %v851, %v852
      %v854 = vrot.slane %v720, 1
      %v855 = vsel %vm840, %v852, %v854
      %v856 = vrot.slane %v721, 1
      %v857 = vrot.slane %v722, 1
      %v858 = vsel %vm840, %v856, %v857
      %v859 = vrot.slane %v723, 1
      %v860 = vsel %vm840, %v857, %v859
      %v861 = vrot.slane %v724, 1
      %v862 = vrot.slane %v725, 1
      %v863 = vsel %vm840, %v861, %v862
      %v864 = vrot.slane %v726, 1
      %v865 = vsel %vm840, %v862, %v864
      %v866 = vrot.slane %v727, 1
      %v867 = vrot.slane %v728, 1
      %v868 = vsel %vm840, %v866, %v867
      %v869 = vrot.slane %v729, 1
      %v870 = vsel %vm840, %v867, %v869
      %v871 = vrot.slane %v730, 1
      %v872 = vrot.slane %v731, 1
      %v873 = vsel %vm840, %v871, %v872
      %v874 = vrot.slane %v732, 1
      %v875 = vsel %vm840, %v872, %v874
      %v876 = vrot.slane %v733, 1
      %v877 = vrot.slane %v734, 1
      %v878 = vsel %vm840, %v876, %v877
      %v879 = vrot.slane %v735, 1
      %v880 = vsel %vm840, %v877, %v879
      %v881 = vrot.slane %v736, 1
      %v882 = vrot.slane %v737, 1
      %v883 = vsel %vm840, %v881, %v882
      %v884 = vrot.slane %v738, 1
      %v885 = vsel %vm840, %v882, %v884
      %v886 = vrot.slane %v739, 1
      %v887 = vrot.slane %v740, 1
      %v888 = vsel %vm840, %v886, %v887
      %v889 = vrot.slane %v741, 1
      %v890 = vsel %vm840, %v887, %v889
      %v891 = vrot.slane %v742, 1
      %v892 = vrot.slane %v743, 1
      %v893 = vsel %vm840, %v891, %v892
      %v894 = vrot.slane %v744, 1
      %v895 = vsel %vm840, %v892, %v894
      %v896 = vrot.slane %v745, 1
      %v897 = vrot.slane %v746, 1
      %v898 = vsel %vm840, %v896, %v897
      %v899 = vrot.slane %v747, 1
      %v900 = vsel %vm840, %v897, %v899
      %v901 = vrot.slane %v748, 1
      %v902 = vrot.slane %v749, 1
      %v903 = vsel %vm840, %v901, %v902
      %v904 = vrot.slane %v750, 1
      %v905 = vsel %vm840, %v902, %v904
      %v906 = vrot.slane %v751, 1
      %v907 = vrot.slane %v752, 1
      %v908 = vsel %vm840, %v906, %v907
      %v909 = vrot.slane %v753, 1
      %v910 = vsel %vm840, %v907, %v909
      %v911 = vrot.slane %v754, 1
      %v912 = vrot.slane %v755, 1
      %v913 = vsel %vm840, %v911, %v912
      %v914 = vrot.slane %v756, 1
      %v915 = vsel %vm840, %v912, %v914
      %v916 = vrot.slane %v757, 1
      %v917 = vrot.slane %v758, 1
      %v918 = vsel %vm840, %v916, %v917
      %v919 = vrot.slane %v759, 1
      %v920 = vsel %vm840, %v917, %v919
      %vm921 = vcmask 1045504
      %v922 = vrot.slane %v712, 2
      %v923 = vrot.slane %v713, 2
      %v924 = vsel %vm921, %v922, %v923
      %v925 = vrot.slane %v714, 2
      %v926 = vsel %vm921, %v923, %v925
      %v927 = vrot.slane %v715, 2
      %v928 = vrot.slane %v716, 2
      %v929 = vsel %vm921, %v927, %v928
      %v930 = vrot.slane %v717, 2
      %v931 = vsel %vm921, %v928, %v930
      %v932 = vrot.slane %v718, 2
      %v933 = vrot.slane %v719, 2
      %v934 = vsel %vm921, %v932, %v933
      %v935 = vrot.slane %v720, 2
      %v936 = vsel %vm921, %v933, %v935
      %v937 = vrot.slane %v721, 2
      %v938 = vrot.slane %v722, 2
      %v939 = vsel %vm921, %v937, %v938
      %v940 = vrot.slane %v723, 2
      %v941 = vsel %vm921, %v938, %v940
      %v942 = vrot.slane %v724, 2
      %v943 = vrot.slane %v725, 2
      %v944 = vsel %vm921, %v942, %v943
      %v945 = vrot.slane %v726, 2
      %v946 = vsel %vm921, %v943, %v945
      %v947 = vrot.slane %v727, 2
      %v948 = vrot.slane %v728, 2
      %v949 = vsel %vm921, %v947, %v948
      %v950 = vrot.slane %v729, 2
      %v951 = vsel %vm921, %v948, %v950
      %v952 = vrot.slane %v730, 2
      %v953 = vrot.slane %v731, 2
      %v954 = vsel %vm921, %v952, %v953
      %v955 = vrot.slane %v732, 2
      %v956 = vsel %vm921, %v953, %v955
      %v957 = vrot.slane %v733, 2
      %v958 = vrot.slane %v734, 2
      %v959 = vsel %vm921, %v957, %v958
      %v960 = vrot.slane %v735, 2
      %v961 = vsel %vm921, %v958, %v960
      %v962 = vrot.slane %v736, 2
      %v963 = vrot.slane %v737, 2
      %v964 = vsel %vm921, %v962, %v963
      %v965 = vrot.slane %v738, 2
      %v966 = vsel %vm921, %v963, %v965
      %v967 = vrot.slane %v739, 2
      %v968 = vrot.slane %v740, 2
      %v969 = vsel %vm921, %v967, %v968
      %v970 = vrot.slane %v741, 2
      %v971 = vsel %vm921, %v968, %v970
      %v972 = vrot.slane %v742, 2
      %v973 = vrot.slane %v743, 2
      %v974 = vsel %vm921, %v972, %v973
      %v975 = vrot.slane %v744, 2
      %v976 = vsel %vm921, %v973, %v975
      %v977 = vrot.slane %v745, 2
      %v978 = vrot.slane %v746, 2
      %v979 = vsel %vm921, %v977, %v978
      %v980 = vrot.slane %v747, 2
      %v981 = vsel %vm921, %v978, %v980
      %v982 = vrot.slane %v748, 2
      %v983 = vrot.slane %v749, 2
      %v984 = vsel %vm921, %v982, %v983
      %v985 = vrot.slane %v750, 2
      %v986 = vsel %vm921, %v983, %v985
      %v987 = vrot.slane %v751, 2
      %v988 = vrot.slane %v752, 2
      %v989 = vsel %vm921, %v987, %v988
      %v990 = vrot.slane %v753, 2
      %v991 = vsel %vm921, %v988, %v990
      %v992 = vrot.slane %v754, 2
      %v993 = vrot.slane %v755, 2
      %v994 = vsel %vm921, %v992, %v993
      %v995 = vrot.slane %v756, 2
      %v996 = vsel %vm921, %v993, %v995
      %v997 = vrot.slane %v757, 2
      %v998 = vrot.slane %v758, 2
      %v999 = vsel %vm921, %v997, %v998
      %v1000 = vrot.slane %v759, 2
      %v1001 = vsel %vm921, %v998, %v1000
      %1002 = vrot.lane.b32.xlu0 %v843, 4
      %v1003 = vpop.permute.xlu0 %1002
      %1004 = vrot.lane.b32.xlu0 %v845, 4
      %v1005 = vpop.permute.xlu0 %1004
      %1006 = vrot.lane.b32.xlu0 %v848, 4
      %v1007 = vpop.permute.xlu0 %1006
      %1008 = vrot.lane.b32.xlu0 %v850, 4
      %v1009 = vpop.permute.xlu0 %1008
      %1010 = vrot.lane.b32.xlu0 %v853, 4
      %v1011 = vpop.permute.xlu0 %1010
      %1012 = vrot.lane.b32.xlu0 %v855, 4
      %v1013 = vpop.permute.xlu0 %1012
      %1014 = vrot.lane.b32.xlu0 %v858, 4
      %v1015 = vpop.permute.xlu0 %1014
      %1016 = vrot.lane.b32.xlu0 %v860, 4
      %v1017 = vpop.permute.xlu0 %1016
      %1018 = vrot.lane.b32.xlu0 %v863, 4
      %v1019 = vpop.permute.xlu0 %1018
      %1020 = vrot.lane.b32.xlu0 %v865, 4
      %v1021 = vpop.permute.xlu0 %1020
      %1022 = vrot.lane.b32.xlu0 %v868, 4
      %v1023 = vpop.permute.xlu0 %1022
      %1024 = vrot.lane.b32.xlu0 %v870, 4
      %v1025 = vpop.permute.xlu0 %1024
      %1026 = vrot.lane.b32.xlu0 %v873, 4
      %v1027 = vpop.permute.xlu0 %1026
      %1028 = vrot.lane.b32.xlu0 %v875, 4
      %v1029 = vpop.permute.xlu0 %1028
      %1030 = vrot.lane.b32.xlu0 %v878, 4
      %v1031 = vpop.permute.xlu0 %1030
      %1032 = vrot.lane.b32.xlu0 %v880, 4
      %v1033 = vpop.permute.xlu0 %1032
      %1034 = vrot.lane.b32.xlu0 %v883, 4
      %v1035 = vpop.permute.xlu0 %1034
      %1036 = vrot.lane.b32.xlu0 %v885, 4
      %v1037 = vpop.permute.xlu0 %1036
      %1038 = vrot.lane.b32.xlu0 %v888, 4
      %v1039 = vpop.permute.xlu0 %1038
      %1040 = vrot.lane.b32.xlu0 %v890, 4
      %v1041 = vpop.permute.xlu0 %1040
      %1042 = vrot.lane.b32.xlu0 %v893, 4
      %v1043 = vpop.permute.xlu0 %1042
      %1044 = vrot.lane.b32.xlu0 %v895, 4
      %v1045 = vpop.permute.xlu0 %1044
      %1046 = vrot.lane.b32.xlu0 %v898, 4
      %v1047 = vpop.permute.xlu0 %1046
      %1048 = vrot.lane.b32.xlu0 %v900, 4
      %v1049 = vpop.permute.xlu0 %1048
      %1050 = vrot.lane.b32.xlu0 %v903, 4
      %v1051 = vpop.permute.xlu0 %1050
      %1052 = vrot.lane.b32.xlu0 %v905, 4
      %v1053 = vpop.permute.xlu0 %1052
      %1054 = vrot.lane.b32.xlu0 %v908, 4
      %v1055 = vpop.permute.xlu0 %1054
      %1056 = vrot.lane.b32.xlu0 %v910, 4
      %v1057 = vpop.permute.xlu0 %1056
      %1058 = vrot.lane.b32.xlu0 %v913, 4
      %v1059 = vpop.permute.xlu0 %1058
      %1060 = vrot.lane.b32.xlu0 %v915, 4
      %v1061 = vpop.permute.xlu0 %1060
      %1062 = vrot.lane.b32.xlu0 %v918, 4
      %v1063 = vpop.permute.xlu0 %1062
      %1064 = vrot.lane.b32.xlu0 %v920, 4
      %v1065 = vpop.permute.xlu0 %1064
      %1098 = vrot.lane.b32.xlu0 %v924, 8
      %v1099 = vpop.permute.xlu0 %1098
      %1100 = vrot.lane.b32.xlu0 %v926, 8
      %v1101 = vpop.permute.xlu0 %1100
      %1102 = vrot.lane.b32.xlu0 %v929, 8
      %v1103 = vpop.permute.xlu0 %1102
      %1104 = vrot.lane.b32.xlu0 %v931, 8
      %v1105 = vpop.permute.xlu0 %1104
      %1106 = vrot.lane.b32.xlu0 %v934, 8
      %v1107 = vpop.permute.xlu0 %1106
      %1108 = vrot.lane.b32.xlu0 %v936, 8
      %v1109 = vpop.permute.xlu0 %1108
      %1110 = vrot.lane.b32.xlu0 %v939, 8
      %v1111 = vpop.permute.xlu0 %1110
      %1112 = vrot.lane.b32.xlu0 %v941, 8
      %v1113 = vpop.permute.xlu0 %1112
      %1114 = vrot.lane.b32.xlu0 %v944, 8
      %v1115 = vpop.permute.xlu0 %1114
      %1116 = vrot.lane.b32.xlu0 %v946, 8
      %v1117 = vpop.permute.xlu0 %1116
      %1118 = vrot.lane.b32.xlu0 %v949, 8
      %v1119 = vpop.permute.xlu0 %1118
      %1120 = vrot.lane.b32.xlu0 %v951, 8
      %v1121 = vpop.permute.xlu0 %1120
      %1122 = vrot.lane.b32.xlu0 %v954, 8
      %v1123 = vpop.permute.xlu0 %1122
      %1124 = vrot.lane.b32.xlu0 %v956, 8
      %v1125 = vpop.permute.xlu0 %1124
      %1126 = vrot.lane.b32.xlu0 %v959, 8
      %v1127 = vpop.permute.xlu0 %1126
      %1128 = vrot.lane.b32.xlu0 %v961, 8
      %v1129 = vpop.permute.xlu0 %1128
      %1130 = vrot.lane.b32.xlu0 %v964, 8
      %v1131 = vpop.permute.xlu0 %1130
      %1132 = vrot.lane.b32.xlu0 %v966, 8
      %v1133 = vpop.permute.xlu0 %1132
      %1134 = vrot.lane.b32.xlu0 %v969, 8
      %v1135 = vpop.permute.xlu0 %1134
      %1136 = vrot.lane.b32.xlu0 %v971, 8
      %v1137 = vpop.permute.xlu0 %1136
      %1138 = vrot.lane.b32.xlu0 %v974, 8
      %v1139 = vpop.permute.xlu0 %1138
      %1140 = vrot.lane.b32.xlu0 %v976, 8
      %v1141 = vpop.permute.xlu0 %1140
      %1142 = vrot.lane.b32.xlu0 %v979, 8
      %v1143 = vpop.permute.xlu0 %1142
      %1144 = vrot.lane.b32.xlu0 %v981, 8
      %v1145 = vpop.permute.xlu0 %1144
      %1146 = vrot.lane.b32.xlu0 %v984, 8
      %v1147 = vpop.permute.xlu0 %1146
      %1148 = vrot.lane.b32.xlu0 %v986, 8
      %v1149 = vpop.permute.xlu0 %1148
      %1150 = vrot.lane.b32.xlu0 %v989, 8
      %v1151 = vpop.permute.xlu0 %1150
      %1152 = vrot.lane.b32.xlu0 %v991, 8
      %v1153 = vpop.permute.xlu0 %1152
      %1154 = vrot.lane.b32.xlu0 %v994, 8
      %v1155 = vpop.permute.xlu0 %1154
      %1156 = vrot.lane.b32.xlu0 %v996, 8
      %v1157 = vpop.permute.xlu0 %1156
      %1158 = vrot.lane.b32.xlu0 %v999, 8
      %v1159 = vpop.permute.xlu0 %1158
      %1160 = vrot.lane.b32.xlu0 %v1001, 8
      %v1161 = vpop.permute.xlu0 %1160
      %v1194 = vsel %vm676, %v712, %v1003
      %v1195 = vsel %vm676, %v713, %v1005
      %v1196 = vsel %vm676, %v715, %v1007
      %v1197 = vsel %vm676, %v716, %v1009
      %v1198 = vsel %vm676, %v718, %v1011
      %v1199 = vsel %vm676, %v719, %v1013
      %v1200 = vsel %vm676, %v721, %v1015
      %v1201 = vsel %vm676, %v722, %v1017
      %v1202 = vsel %vm676, %v724, %v1019
      %v1203 = vsel %vm676, %v725, %v1021
      %v1204 = vsel %vm676, %v727, %v1023
      %v1205 = vsel %vm676, %v728, %v1025
      %v1206 = vsel %vm676, %v730, %v1027
      %v1207 = vsel %vm676, %v731, %v1029
      %v1208 = vsel %vm676, %v733, %v1031
      %v1209 = vsel %vm676, %v734, %v1033
      %v1210 = vsel %vm676, %v736, %v1035
      %v1211 = vsel %vm676, %v737, %v1037
      %v1212 = vsel %vm676, %v739, %v1039
      %v1213 = vsel %vm676, %v740, %v1041
      %v1214 = vsel %vm676, %v742, %v1043
      %v1215 = vsel %vm676, %v743, %v1045
      %v1216 = vsel %vm676, %v745, %v1047
      %v1217 = vsel %vm676, %v746, %v1049
      %v1218 = vsel %vm676, %v748, %v1051
      %v1219 = vsel %vm676, %v749, %v1053
      %v1220 = vsel %vm676, %v751, %v1055
      %v1221 = vsel %vm676, %v752, %v1057
      %v1222 = vsel %vm676, %v754, %v1059
      %v1223 = vsel %vm676, %v755, %v1061
      %v1224 = vsel %vm676, %v757, %v1063
      %v1225 = vsel %vm676, %v758, %v1065
      %vm1226 = vcmask 64512
      %v1227 = vsel %vm1226, %v1194, %v1099
      %v1228 = vsel %vm1226, %v1195, %v1101
      %v1229 = vsel %vm1226, %v1196, %v1103
      %v1230 = vsel %vm1226, %v1197, %v1105
      %v1231 = vsel %vm1226, %v1198, %v1107
      %v1232 = vsel %vm1226, %v1199, %v1109
      %v1233 = vsel %vm1226, %v1200, %v1111
      %v1234 = vsel %vm1226, %v1201, %v1113
      %v1235 = vsel %vm1226, %v1202, %v1115
      %v1236 = vsel %vm1226, %v1203, %v1117
      %v1237 = vsel %vm1226, %v1204, %v1119
      %v1238 = vsel %vm1226, %v1205, %v1121
      %v1239 = vsel %vm1226, %v1206, %v1123
      %v1240 = vsel %vm1226, %v1207, %v1125
      %v1241 = vsel %vm1226, %v1208, %v1127
      %v1242 = vsel %vm1226, %v1209, %v1129
      %v1243 = vsel %vm1226, %v1210, %v1131
      %v1244 = vsel %vm1226, %v1211, %v1133
      %v1245 = vsel %vm1226, %v1212, %v1135
      %v1246 = vsel %vm1226, %v1213, %v1137
      %v1247 = vsel %vm1226, %v1214, %v1139
      %v1248 = vsel %vm1226, %v1215, %v1141
      %v1249 = vsel %vm1226, %v1216, %v1143
      %v1250 = vsel %vm1226, %v1217, %v1145
      %v1251 = vsel %vm1226, %v1218, %v1147
      %v1252 = vsel %vm1226, %v1219, %v1149
      %v1253 = vsel %vm1226, %v1220, %v1151
      %v1254 = vsel %vm1226, %v1221, %v1153
      %v1255 = vsel %vm1226, %v1222, %v1155
      %v1256 = vsel %vm1226, %v1223, %v1157
      %v1257 = vsel %vm1226, %v1224, %v1159
      %v1258 = vsel %vm1226, %v1225, %v1161
      %v1259 = vld [vmem:[%s4] sm:$0xff]
      %v1260 = vld [vmem:[%s4 + $0x8] sm:$0xf]
      %vm1261 = vcmask 97280
      %v1263 = vsel %vm1261, %v1227, 0
      %v1266 = vsel %vm1261, %v1228, 0
      %v1269 = vsel %vm1261, %v1229, 0
      %v1272 = vsel %vm1261, %v1230, 0
      %v1275 = vsel %vm1261, %v1231, 0
      %v1278 = vsel %vm1261, %v1232, 0
      %v1281 = vsel %vm1261, %v1233, 0
      %v1284 = vsel %vm1261, %v1234, 0
      %v1287 = vsel %vm1261, %v1235, 0
      %v1290 = vsel %vm1261, %v1236, 0
      %v1293 = vsel %vm1261, %v1237, 0
      %v1296 = vsel %vm1261, %v1238, 0
      %v1299 = vsel %vm1261, %v1239, 0
      %v1302 = vsel %vm1261, %v1240, 0
      %v1305 = vsel %vm1261, %v1241, 0
      %v1308 = vsel %vm1261, %v1242, 0
      %v1311 = vsel %vm1261, %v1243, 0
      %v1314 = vsel %vm1261, %v1244, 0
      %v1317 = vsel %vm1261, %v1245, 0
      %v1320 = vsel %vm1261, %v1246, 0
      %v1323 = vsel %vm1261, %v1247, 0
      %v1326 = vsel %vm1261, %v1248, 0
      %v1329 = vsel %vm1261, %v1249, 0
      %v1332 = vsel %vm1261, %v1250, 0
      %v1335 = vsel %vm1261, %v1251, 0
      %v1338 = vsel %vm1261, %v1252, 0
      %v1341 = vsel %vm1261, %v1253, 0
      %v1344 = vsel %vm1261, %v1254, 0
      %v1347 = vsel %vm1261, %v1255, 0
      %v1350 = vsel %vm1261, %v1256, 0
      %v1353 = vsel %vm1261, %v1257, 0
      %v1356 = vsel %vm1261, %v1258, 0
      %vm1358 = vcmask 1043456
      %v1360 = vsel %vm1358, %v1260, 0
      %1362 = vmatprep.subr.mxu0 0.0
      %1363 = vmatpush1.msra.mxu0 %v1259
      %1364 = vmatprep.subr.mxu0 0.0
      %1365 = vmatpush1.msra.mxu0 %v1360
      %1366 = vmatprep.subr.mxu0 0.0
      %1367 = vmatpush1.msra.mxu0 0.0
      %1368 = vmatprep.subr.mxu0 0.0
      %1369 = vmatpush1.msra.mxu0 0.0
      %1370 = vmatprep.subr.mxu0 0.0
      %1371 = vmatpush1.msra.mxu0 0.0
      %1372 = vmatprep.subr.mxu0 0.0
      %1373 = vmatpush1.msra.mxu0 0.0
      %1374 = vmatprep.subr.mxu0 0.0
      %1375 = vmatpush1.msra.mxu0 0.0
      %1376 = vmatprep.subr.mxu0 0.0
      %1377 = vmatpush1.msra.mxu0 0.0
      %1378 = vmatprep.subr.mxu0 0.0
      %1379 = vmatpush1.msra.mxu0 0.0
      %1380 = vmatprep.subr.mxu0 0.0
      %1381 = vmatpush1.msra.mxu0 0.0
      %1382 = vmatprep.subr.mxu0 0.0
      %1383 = vmatpush1.msra.mxu0 0.0
      %1384 = vmatprep.subr.mxu0 0.0
      %1385 = vmatpush1.msra.mxu0 0.0
      %1386 = vmatprep.subr.mxu0 0.0
      %1387 = vmatpush1.msra.mxu0 0.0
      %1388 = vmatprep.subr.mxu0 0.0
      %1389 = vmatpush1.msra.mxu0 0.0
      %1390 = vmatprep.subr.mxu0 0.0
      %1391 = vmatpush1.msra.mxu0 0.0
      %1392 = vmatprep.subr.mxu0 0.0
      %1393 = vmatpush1.msra.mxu0 0.0
      %1394 = vmatprep.subr.mxu0 0.0
      %1395 = vmatpush1.msra.mxu0 0.0
      %1396 = vmatprep.subr.mxu0 0.0
      %1397 = vmatpush1.msra.mxu0 0.0
      %1398 = vmatprep.subr.mxu0 0.0
      %1399 = vmatpush1.msra.mxu0 0.0
      %1400 = vmatprep.subr.mxu0 0.0
      %1401 = vmatpush1.msra.mxu0 0.0
      %1402 = vmatprep.subr.mxu0 0.0
      %1403 = vmatpush1.msra.mxu0 0.0
      %1404 = vmatprep.subr.mxu0 0.0
      %1405 = vmatpush1.msra.mxu0 0.0
      %1406 = vmatprep.subr.mxu0 0.0
      %1407 = vmatpush1.msra.mxu0 0.0
      %1408 = vmatprep.subr.mxu0 0.0
      %1409 = vmatpush1.msra.mxu0 0.0
      %1410 = vmatprep.subr.mxu0 0.0
      %1411 = vmatpush1.msra.mxu0 0.0
      %1412 = vmatprep.subr.mxu0 0.0
      %1413 = vmatpush1.msra.mxu0 0.0
      %1414 = vmatprep.subr.mxu0 0.0
      %1415 = vmatpush1.msra.mxu0 0.0
      %1416 = vmatprep.subr.mxu0 0.0
      %1417 = vmatpush1.msra.mxu0 0.0
      %1418 = vmatprep.subr.mxu0 0.0
      %1419 = vmatpush1.msra.mxu0 0.0
      %1420 = vmatprep.subr.mxu0 0.0
      %1421 = vmatpush1.msra.mxu0 0.0
      %1422 = vmatprep.subr.mxu0 0.0
      %1423 = vmatpush1.msra.mxu0 0.0
      %1424 = vmatprep.subr.mxu0 0.0
      %1425 = vmatpush1.msra.mxu0 0.0
      %1426 = vmatprep.mubr.f32.mxu0 0.0
      %1427 = vmatmul.mubr.f32.gmra.mrb[0].mxu0 %v1263
      %v1428 = vpop.f32.mrb[0].mxu0
      %v1429 = vadd.f32 0.0, %v1428
      %v1430 = vpop.f32.mrb[0].mxu0
      %1431 = vmatprep.mubr.f32.mxu0 0.0
      %1432 = vmatmul.mubr.f32.gmra.mrb[0].mxu0 %v1266
      %v1433 = vpop.f32.mrb[0].mxu0
      %v1434 = vadd.f32 0.0, %v1433
      %v1435 = vpop.f32.mrb[0].mxu0
      %1436 = vmatprep.mubr.f32.mxu0 0.0
      %1437 = vmatmul.mubr.f32.gmra.mrb[0].mxu0 %v1269
      %v1438 = vpop.f32.mrb[0].mxu0
      %v1439 = vadd.f32 0.0, %v1438
      %v1440 = vpop.f32.mrb[0].mxu0
      %1441 = vmatprep.mubr.f32.mxu0 0.0
      %1442 = vmatmul.mubr.f32.gmra.mrb[0].mxu0 %v1272
      %v1443 = vpop.f32.mrb[0].mxu0
      %v1444 = vadd.f32 0.0, %v1443
      %v1445 = vpop.f32.mrb[0].mxu0
      %1446 = vmatprep.mubr.f32.mxu0 0.0
      %1447 = vmatmul.mubr.f32.gmra.mrb[0].mxu0 %v1275
      %v1448 = vpop.f32.mrb[0].mxu0
      %v1449 = vadd.f32 0.0, %v1448
      %v1450 = vpop.f32.mrb[0].mxu0
      %1451 = vmatprep.mubr.f32.mxu0 0.0
      %1452 = vmatmul.mubr.f32.gmra.mrb[0].mxu0 %v1278
      %v1453 = vpop.f32.mrb[0].mxu0
      %v1454 = vadd.f32 0.0, %v1453
      %v1455 = vpop.f32.mrb[0].mxu0
      %1456 = vmatprep.mubr.f32.mxu0 0.0
      %1457 = vmatmul.mubr.f32.gmra.mrb[0].mxu0 %v1281
      %v1458 = vpop.f32.mrb[0].mxu0
      %v1459 = vadd.f32 0.0, %v1458
      %v1460 = vpop.f32.mrb[0].mxu0
      %1461 = vmatprep.mubr.f32.mxu0 0.0
      %1462 = vmatmul.mubr.f32.gmra.mrb[0].mxu0 %v1284
      %v1463 = vpop.f32.mrb[0].mxu0
      %v1464 = vadd.f32 0.0, %v1463
      %v1465 = vpop.f32.mrb[0].mxu0
      %1466 = vmatprep.mubr.f32.mxu0 0.0
      %1467 = vmatmul.mubr.f32.gmra.mrb[0].mxu0 %v1287
      %v1468 = vpop.f32.mrb[0].mxu0
      %v1469 = vadd.f32 0.0, %v1468
      %v1470 = vpop.f32.mrb[0].mxu0
      %1471 = vmatprep.mubr.f32.mxu0 0.0
      %1472 = vmatmul.mubr.f32.gmra.mrb[0].mxu0 %v1290
      %v1473 = vpop.f32.mrb[0].mxu0
      %v1474 = vadd.f32 0.0, %v1473
      %v1475 = vpop.f32.mrb[0].mxu0
      %1476 = vmatprep.mubr.f32.mxu0 0.0
      %1477 = vmatmul.mubr.f32.gmra.mrb[0].mxu0 %v1293
      %v1478 = vpop.f32.mrb[0].mxu0
      %v1479 = vadd.f32 0.0, %v1478
      %v1480 = vpop.f32.mrb[0].mxu0
      %1481 = vmatprep.mubr.f32.mxu0 0.0
      %1482 = vmatmul.mubr.f32.gmra.mrb[0].mxu0 %v1296
      %v1483 = vpop.f32.mrb[0].mxu0
      %v1484 = vadd.f32 0.0, %v1483
      %v1485 = vpop.f32.mrb[0].mxu0
      %1486 = vmatprep.mubr.f32.mxu0 0.0
      %1487 = vmatmul.mubr.f32.gmra.mrb[0].mxu0 %v1299
      %v1488 = vpop.f32.mrb[0].mxu0
      %v1489 = vadd.f32 0.0, %v1488
      %v1490 = vpop.f32.mrb[0].mxu0
      %1491 = vmatprep.mubr.f32.mxu0 0.0
      %1492 = vmatmul.mubr.f32.gmra.mrb[0].mxu0 %v1302
      %v1493 = vpop.f32.mrb[0].mxu0
      %v1494 = vadd.f32 0.0, %v1493
      %v1495 = vpop.f32.mrb[0].mxu0
      %1496 = vmatprep.mubr.f32.mxu0 0.0
      %1497 = vmatmul.mubr.f32.gmra.mrb[0].mxu0 %v1305
      %v1498 = vpop.f32.mrb[0].mxu0
      %v1499 = vadd.f32 0.0, %v1498
      %v1500 = vpop.f32.mrb[0].mxu0
      %1501 = vmatprep.mubr.f32.mxu0 0.0
      %1502 = vmatmul.mubr.f32.gmra.mrb[0].mxu0 %v1308
      %v1503 = vpop.f32.mrb[0].mxu0
      %v1504 = vadd.f32 0.0, %v1503
      %v1505 = vpop.f32.mrb[0].mxu0
      %1506 = vmatprep.mubr.f32.mxu0 0.0
      %1507 = vmatmul.mubr.f32.gmra.mrb[0].mxu0 %v1311
      %v1508 = vpop.f32.mrb[0].mxu0
      %v1509 = vadd.f32 0.0, %v1508
      %v1510 = vpop.f32.mrb[0].mxu0
      %1511 = vmatprep.mubr.f32.mxu0 0.0
      %1512 = vmatmul.mubr.f32.gmra.mrb[0].mxu0 %v1314
      %v1513 = vpop.f32.mrb[0].mxu0
      %v1514 = vadd.f32 0.0, %v1513
      %v1515 = vpop.f32.mrb[0].mxu0
      %1516 = vmatprep.mubr.f32.mxu0 0.0
      %1517 = vmatmul.mubr.f32.gmra.mrb[0].mxu0 %v1317
      %v1518 = vpop.f32.mrb[0].mxu0
      %v1519 = vadd.f32 0.0, %v1518
      %v1520 = vpop.f32.mrb[0].mxu0
      %1521 = vmatprep.mubr.f32.mxu0 0.0
      %1522 = vmatmul.mubr.f32.gmra.mrb[0].mxu0 %v1320
      %v1523 = vpop.f32.mrb[0].mxu0
      %v1524 = vadd.f32 0.0, %v1523
      %v1525 = vpop.f32.mrb[0].mxu0
      %1526 = vmatprep.mubr.f32.mxu0 0.0
      %1527 = vmatmul.mubr.f32.gmra.mrb[0].mxu0 %v1323
      %v1528 = vpop.f32.mrb[0].mxu0
      %v1529 = vadd.f32 0.0, %v1528
      %v1530 = vpop.f32.mrb[0].mxu0
      %1531 = vmatprep.mubr.f32.mxu0 0.0
      %1532 = vmatmul.mubr.f32.gmra.mrb[0].mxu0 %v1326
      %v1533 = vpop.f32.mrb[0].mxu0
      %v1534 = vadd.f32 0.0, %v1533
      %v1535 = vpop.f32.mrb[0].mxu0
      %1536 = vmatprep.mubr.f32.mxu0 0.0
      %1537 = vmatmul.mubr.f32.gmra.mrb[0].mxu0 %v1329
      %v1538 = vpop.f32.mrb[0].mxu0
      %v1539 = vadd.f32 0.0, %v1538
      %v1540 = vpop.f32.mrb[0].mxu0
      %1541 = vmatprep.mubr.f32.mxu0 0.0
      %1542 = vmatmul.mubr.f32.gmra.mrb[0].mxu0 %v1332
      %v1543 = vpop.f32.mrb[0].mxu0
      %v1544 = vadd.f32 0.0, %v1543
      %v1545 = vpop.f32.mrb[0].mxu0
      %1546 = vmatprep.mubr.f32.mxu0 0.0
      %1547 = vmatmul.mubr.f32.gmra.mrb[0].mxu0 %v1335
      %v1548 = vpop.f32.mrb[0].mxu0
      %v1549 = vadd.f32 0.0, %v1548
      %v1550 = vpop.f32.mrb[0].mxu0
      %1551 = vmatprep.mubr.f32.mxu0 0.0
      %1552 = vmatmul.mubr.f32.gmra.mrb[0].mxu0 %v1338
      %v1553 = vpop.f32.mrb[0].mxu0
      %v1554 = vadd.f32 0.0, %v1553
      %v1555 = vpop.f32.mrb[0].mxu0
      %1556 = vmatprep.mubr.f32.mxu0 0.0
      %1557 = vmatmul.mubr.f32.gmra.mrb[0].mxu0 %v1341
      %v1558 = vpop.f32.mrb[0].mxu0
      %v1559 = vadd.f32 0.0, %v1558
      %v1560 = vpop.f32.mrb[0].mxu0
      %1561 = vmatprep.mubr.f32.mxu0 0.0
      %1562 = vmatmul.mubr.f32.gmra.mrb[0].mxu0 %v1344
      %v1563 = vpop.f32.mrb[0].mxu0
      %v1564 = vadd.f32 0.0, %v1563
      %v1565 = vpop.f32.mrb[0].mxu0
      %1566 = vmatprep.mubr.f32.mxu0 0.0
      %1567 = vmatmul.mubr.f32.gmra.mrb[0].mxu0 %v1347
      %v1568 = vpop.f32.mrb[0].mxu0
      %v1569 = vadd.f32 0.0, %v1568
      %v1570 = vpop.f32.mrb[0].mxu0
      %1571 = vmatprep.mubr.f32.mxu0 0.0
      %1572 = vmatmul.mubr.f32.gmra.mrb[0].mxu0 %v1350
      %v1573 = vpop.f32.mrb[0].mxu0
      %v1574 = vadd.f32 0.0, %v1573
      %v1575 = vpop.f32.mrb[0].mxu0
      %1576 = vmatprep.mubr.f32.mxu0 0.0
      %1577 = vmatmul.mubr.f32.gmra.mrb[0].mxu0 %v1353
      %v1578 = vpop.f32.mrb[0].mxu0
      %v1579 = vadd.f32 0.0, %v1578
      %v1580 = vpop.f32.mrb[0].mxu0
      %1581 = vmatprep.mubr.f32.mxu0 0.0
      %1582 = vmatmul.mubr.f32.gmra.mrb[0].mxu0 %v1356
      %v1583 = vpop.f32.mrb[0].mxu0
      %v1584 = vadd.f32 0.0, %v1583
      %v1585 = vpop.f32.mrb[0].mxu0
      %1586 = vdwg.mxu0
      %v1587 = vld [vmem:[%s5] sm:$0xf]
      %v1589 = vsel %vm676, %v760, 0
      %v1592 = vsel %vm676, %v761, 0
      %v1595 = vsel %vm676, %v762, 0
      %v1598 = vsel %vm676, %v763, 0
      %v1601 = vsel %vm676, %v764, 0
      %v1604 = vsel %vm676, %v765, 0
      %v1607 = vsel %vm676, %v766, 0
      %v1610 = vsel %vm676, %v767, 0
      %v1613 = vsel %vm676, %v768, 0
      %v1616 = vsel %vm676, %v769, 0
      %v1619 = vsel %vm676, %v770, 0
      %v1622 = vsel %vm676, %v771, 0
      %v1625 = vsel %vm676, %v772, 0
      %v1628 = vsel %vm676, %v773, 0
      %v1631 = vsel %vm676, %v774, 0
      %v1634 = vsel %vm676, %v775, 0
      %v1637 = vsel %vm676, %v776, 0
      %v1640 = vsel %vm676, %v777, 0
      %v1643 = vsel %vm676, %v778, 0
      %v1646 = vsel %vm676, %v779, 0
      %v1649 = vsel %vm676, %v780, 0
      %v1652 = vsel %vm676, %v781, 0
      %v1655 = vsel %vm676, %v782, 0
      %v1658 = vsel %vm676, %v783, 0
      %v1661 = vsel %vm676, %v784, 0
      %v1664 = vsel %vm676, %v785, 0
      %v1667 = vsel %vm676, %v786, 0
      %v1670 = vsel %vm676, %v787, 0
      %v1673 = vsel %vm676, %v788, 0
      %v1676 = vsel %vm676, %v789, 0
      %v1679 = vsel %vm676, %v790, 0
      %v1682 = vsel %vm676, %v791, 0
      %v1685 = vsel %vm1358, %v1587, 0
      %1687 = vmatprep.subr.mxu0 0.0
      %1688 = vmatpush1.msra.mxu0 %v1685
      %1689 = vmatprep.subr.mxu0 0.0
      %1690 = vmatpush1.msra.mxu0 0.0
      %1691 = vmatprep.subr.mxu0 0.0
      %1692 = vmatpush1.msra.mxu0 0.0
      %1693 = vmatprep.subr.mxu0 0.0
      %1694 = vmatpush1.msra.mxu0 0.0
      %1695 = vmatprep.subr.mxu0 0.0
      %1696 = vmatpush1.msra.mxu0 0.0
      %1697 = vmatprep.subr.mxu0 0.0
      %1698 = vmatpush1.msra.mxu0 0.0
      %1699 = vmatprep.subr.mxu0 0.0
      %1700 = vmatpush1.msra.mxu0 0.0
      %1701 = vmatprep.subr.mxu0 0.0
      %1702 = vmatpush1.msra.mxu0 0.0
      %1703 = vmatprep.subr.mxu0 0.0
      %1704 = vmatpush1.msra.mxu0 0.0
      %1705 = vmatprep.subr.mxu0 0.0
      %1706 = vmatpush1.msra.mxu0 0.0
      %1707 = vmatprep.subr.mxu0 0.0
      %1708 = vmatpush1.msra.mxu0 0.0
      %1709 = vmatprep.subr.mxu0 0.0
      %1710 = vmatpush1.msra.mxu0 0.0
      %1711 = vmatprep.subr.mxu0 0.0
      %1712 = vmatpush1.msra.mxu0 0.0
      %1713 = vmatprep.subr.mxu0 0.0
      %1714 = vmatpush1.msra.mxu0 0.0
      %1715 = vmatprep.subr.mxu0 0.0
      %1716 = vmatpush1.msra.mxu0 0.0
      %1717 = vmatprep.subr.mxu0 0.0
      %1718 = vmatpush1.msra.mxu0 0.0
      %1719 = vmatprep.subr.mxu0 0.0
      %1720 = vmatpush1.msra.mxu0 0.0
      %1721 = vmatprep.subr.mxu0 0.0
      %1722 = vmatpush1.msra.mxu0 0.0
      %1723 = vmatprep.subr.mxu0 0.0
      %1724 = vmatpush1.msra.mxu0 0.0
      %1725 = vmatprep.subr.mxu0 0.0
      %1726 = vmatpush1.msra.mxu0 0.0
      %1727 = vmatprep.subr.mxu0 0.0
      %1728 = vmatpush1.msra.mxu0 0.0
      %1729 = vmatprep.subr.mxu0 0.0
      %1730 = vmatpush1.msra.mxu0 0.0
      %1731 = vmatprep.subr.mxu0 0.0
      %1732 = vmatpush1.msra.mxu0 0.0
      %1733 = vmatprep.subr.mxu0 0.0
      %1734 = vmatpush1.msra.mxu0 0.0
      %1735 = vmatprep.subr.mxu0 0.0
      %1736 = vmatpush1.msra.mxu0 0.0
      %1737 = vmatprep.subr.mxu0 0.0
      %1738 = vmatpush1.msra.mxu0 0.0
      %1739 = vmatprep.subr.mxu0 0.0
      %1740 = vmatpush1.msra.mxu0 0.0
      %1741 = vmatprep.subr.mxu0 0.0
      %1742 = vmatpush1.msra.mxu0 0.0
      %1743 = vmatprep.subr.mxu0 0.0
      %1744 = vmatpush1.msra.mxu0 0.0
      %1745 = vmatprep.subr.mxu0 0.0
      %1746 = vmatpush1.msra.mxu0 0.0
      %1747 = vmatprep.subr.mxu0 0.0
      %1748 = vmatpush1.msra.mxu0 0.0
      %1749 = vmatprep.subr.mxu0 0.0
      %1750 = vmatpush1.msra.mxu0 0.0
      %1751 = vmatprep.mubr.f32.mxu0 0.0
      %1752 = vmatmul.mubr.f32.gmra.mrb[0].mxu0 %v1589
      %v1753 = vpop.f32.mrb[0].mxu0
      %v1754 = vadd.f32 0.0, %v1753
      %v1755 = vpop.f32.mrb[0].mxu0
      %1756 = vmatprep.mubr.f32.mxu0 0.0
      %1757 = vmatmul.mubr.f32.gmra.mrb[0].mxu0 %v1592
      %v1758 = vpop.f32.mrb[0].mxu0
      %v1759 = vadd.f32 0.0, %v1758
      %v1760 = vpop.f32.mrb[0].mxu0
      %1761 = vmatprep.mubr.f32.mxu0 0.0
      %1762 = vmatmul.mubr.f32.gmra.mrb[0].mxu0 %v1595
      %v1763 = vpop.f32.mrb[0].mxu0
      %v1764 = vadd.f32 0.0, %v1763
      %v1765 = vpop.f32.mrb[0].mxu0
      %1766 = vmatprep.mubr.f32.mxu0 0.0
      %1767 = vmatmul.mubr.f32.gmra.mrb[0].mxu0 %v1598
      %v1768 = vpop.f32.mrb[0].mxu0
      %v1769 = vadd.f32 0.0, %v1768
      %v1770 = vpop.f32.mrb[0].mxu0
      %1771 = vmatprep.mubr.f32.mxu0 0.0
      %1772 = vmatmul.mubr.f32.gmra.mrb[0].mxu0 %v1601
      %v1773 = vpop.f32.mrb[0].mxu0
      %v1774 = vadd.f32 0.0, %v1773
      %v1775 = vpop.f32.mrb[0].mxu0
      %1776 = vmatprep.mubr.f32.mxu0 0.0
      %1777 = vmatmul.mubr.f32.gmra.mrb[0].mxu0 %v1604
      %v1778 = vpop.f32.mrb[0].mxu0
      %v1779 = vadd.f32 0.0, %v1778
      %v1780 = vpop.f32.mrb[0].mxu0
      %1781 = vmatprep.mubr.f32.mxu0 0.0
      %1782 = vmatmul.mubr.f32.gmra.mrb[0].mxu0 %v1607
      %v1783 = vpop.f32.mrb[0].mxu0
      %v1784 = vadd.f32 0.0, %v1783
      %v1785 = vpop.f32.mrb[0].mxu0
      %1786 = vmatprep.mubr.f32.mxu0 0.0
      %1787 = vmatmul.mubr.f32.gmra.mrb[0].mxu0 %v1610
      %v1788 = vpop.f32.mrb[0].mxu0
      %v1789 = vadd.f32 0.0, %v1788
      %v1790 = vpop.f32.mrb[0].mxu0
      %1791 = vmatprep.mubr.f32.mxu0 0.0
      %1792 = vmatmul.mubr.f32.gmra.mrb[0].mxu0 %v1613
      %v1793 = vpop.f32.mrb[0].mxu0
      %v1794 = vadd.f32 0.0, %v1793
      %v1795 = vpop.f32.mrb[0].mxu0
      %1796 = vmatprep.mubr.f32.mxu0 0.0
      %1797 = vmatmul.mubr.f32.gmra.mrb[0].mxu0 %v1616
      %v1798 = vpop.f32.mrb[0].mxu0
      %v1799 = vadd.f32 0.0, %v1798
      %v1800 = vpop.f32.mrb[0].mxu0
      %1801 = vmatprep.mubr.f32.mxu0 0.0
      %1802 = vmatmul.mubr.f32.gmra.mrb[0].mxu0 %v1619
      %v1803 = vpop.f32.mrb[0].mxu0
      %v1804 = vadd.f32 0.0, %v1803
      %v1805 = vpop.f32.mrb[0].mxu0
      %1806 = vmatprep.mubr.f32.mxu0 0.0
      %1807 = vmatmul.mubr.f32.gmra.mrb[0].mxu0 %v1622
      %v1808 = vpop.f32.mrb[0].mxu0
      %v1809 = vadd.f32 0.0, %v1808
      %v1810 = vpop.f32.mrb[0].mxu0
      %1811 = vmatprep.mubr.f32.mxu0 0.0
      %1812 = vmatmul.mubr.f32.gmra.mrb[0].mxu0 %v1625
      %v1813 = vpop.f32.mrb[0].mxu0
      %v1814 = vadd.f32 0.0, %v1813
      %v1815 = vpop.f32.mrb[0].mxu0
      %1816 = vmatprep.mubr.f32.mxu0 0.0
      %1817 = vmatmul.mubr.f32.gmra.mrb[0].mxu0 %v1628
      %v1818 = vpop.f32.mrb[0].mxu0
      %v1819 = vadd.f32 0.0, %v1818
      %v1820 = vpop.f32.mrb[0].mxu0
      %1821 = vmatprep.mubr.f32.mxu0 0.0
      %1822 = vmatmul.mubr.f32.gmra.mrb[0].mxu0 %v1631
      %v1823 = vpop.f32.mrb[0].mxu0
      %v1824 = vadd.f32 0.0, %v1823
      %v1825 = vpop.f32.mrb[0].mxu0
      %1826 = vmatprep.mubr.f32.mxu0 0.0
      %1827 = vmatmul.mubr.f32.gmra.mrb[0].mxu0 %v1634
      %v1828 = vpop.f32.mrb[0].mxu0
      %v1829 = vadd.f32 0.0, %v1828
      %v1830 = vpop.f32.mrb[0].mxu0
      %1831 = vmatprep.mubr.f32.mxu0 0.0
      %1832 = vmatmul.mubr.f32.gmra.mrb[0].mxu0 %v1637
      %v1833 = vpop.f32.mrb[0].mxu0
      %v1834 = vadd.f32 0.0, %v1833
      %v1835 = vpop.f32.mrb[0].mxu0
      %1836 = vmatprep.mubr.f32.mxu0 0.0
      %1837 = vmatmul.mubr.f32.gmra.mrb[0].mxu0 %v1640
      %v1838 = vpop.f32.mrb[0].mxu0
      %v1839 = vadd.f32 0.0, %v1838
      %v1840 = vpop.f32.mrb[0].mxu0
      %1841 = vmatprep.mubr.f32.mxu0 0.0
      %1842 = vmatmul.mubr.f32.gmra.mrb[0].mxu0 %v1643
      %v1843 = vpop.f32.mrb[0].mxu0
      %v1844 = vadd.f32 0.0, %v1843
      %v1845 = vpop.f32.mrb[0].mxu0
      %1846 = vmatprep.mubr.f32.mxu0 0.0
      %1847 = vmatmul.mubr.f32.gmra.mrb[0].mxu0 %v1646
      %v1848 = vpop.f32.mrb[0].mxu0
      %v1849 = vadd.f32 0.0, %v1848
      %v1850 = vpop.f32.mrb[0].mxu0
      %1851 = vmatprep.mubr.f32.mxu0 0.0
      %1852 = vmatmul.mubr.f32.gmra.mrb[0].mxu0 %v1649
      %v1853 = vpop.f32.mrb[0].mxu0
      %v1854 = vadd.f32 0.0, %v1853
      %v1855 = vpop.f32.mrb[0].mxu0
      %1856 = vmatprep.mubr.f32.mxu0 0.0
      %1857 = vmatmul.mubr.f32.gmra.mrb[0].mxu0 %v1652
      %v1858 = vpop.f32.mrb[0].mxu0
      %v1859 = vadd.f32 0.0, %v1858
      %v1860 = vpop.f32.mrb[0].mxu0
      %1861 = vmatprep.mubr.f32.mxu0 0.0
      %1862 = vmatmul.mubr.f32.gmra.mrb[0].mxu0 %v1655
      %v1863 = vpop.f32.mrb[0].mxu0
      %v1864 = vadd.f32 0.0, %v1863
      %v1865 = vpop.f32.mrb[0].mxu0
      %1866 = vmatprep.mubr.f32.mxu0 0.0
      %1867 = vmatmul.mubr.f32.gmra.mrb[0].mxu0 %v1658
      %v1868 = vpop.f32.mrb[0].mxu0
      %v1869 = vadd.f32 0.0, %v1868
      %v1870 = vpop.f32.mrb[0].mxu0
      %1871 = vmatprep.mubr.f32.mxu0 0.0
      %1872 = vmatmul.mubr.f32.gmra.mrb[0].mxu0 %v1661
      %v1873 = vpop.f32.mrb[0].mxu0
      %v1874 = vadd.f32 0.0, %v1873
      %v1875 = vpop.f32.mrb[0].mxu0
      %1876 = vmatprep.mubr.f32.mxu0 0.0
      %1877 = vmatmul.mubr.f32.gmra.mrb[0].mxu0 %v1664
      %v1878 = vpop.f32.mrb[0].mxu0
      %v1879 = vadd.f32 0.0, %v1878
      %v1880 = vpop.f32.mrb[0].mxu0
      %1881 = vmatprep.mubr.f32.mxu0 0.0
      %1882 = vmatmul.mubr.f32.gmra.mrb[0].mxu0 %v1667
      %v1883 = vpop.f32.mrb[0].mxu0
      %v1884 = vadd.f32 0.0, %v1883
      %v1885 = vpop.f32.mrb[0].mxu0
      %1886 = vmatprep.mubr.f32.mxu0 0.0
      %1887 = vmatmul.mubr.f32.gmra.mrb[0].mxu0 %v1670
      %v1888 = vpop.f32.mrb[0].mxu0
      %v1889 = vadd.f32 0.0, %v1888
      %v1890 = vpop.f32.mrb[0].mxu0
      %1891 = vmatprep.mubr.f32.mxu0 0.0
      %1892 = vmatmul.mubr.f32.gmra.mrb[0].mxu0 %v1673
      %v1893 = vpop.f32.mrb[0].mxu0
      %v1894 = vadd.f32 0.0, %v1893
      %v1895 = vpop.f32.mrb[0].mxu0
      %1896 = vmatprep.mubr.f32.mxu0 0.0
      %1897 = vmatmul.mubr.f32.gmra.mrb[0].mxu0 %v1676
      %v1898 = vpop.f32.mrb[0].mxu0
      %v1899 = vadd.f32 0.0, %v1898
      %v1900 = vpop.f32.mrb[0].mxu0
      %1901 = vmatprep.mubr.f32.mxu0 0.0
      %1902 = vmatmul.mubr.f32.gmra.mrb[0].mxu0 %v1679
      %v1903 = vpop.f32.mrb[0].mxu0
      %v1904 = vadd.f32 0.0, %v1903
      %v1905 = vpop.f32.mrb[0].mxu0
      %1906 = vmatprep.mubr.f32.mxu0 0.0
      %1907 = vmatmul.mubr.f32.gmra.mrb[0].mxu0 %v1682
      %v1908 = vpop.f32.mrb[0].mxu0
      %v1909 = vadd.f32 0.0, %v1908
      %v1910 = vpop.f32.mrb[0].mxu0
      %1911 = vdwg.mxu0
      %v1912 = vld [vmem:[%s479] sm:$0x1]
      %v1913 = vld [vmem:[%s482] sm:$0x1]
      %v1915 = vlaneseq
      %v1916 = vshrl.u32 %v1915, 7
      %v1917 = vsub.s32 0, %v1916
      %v1918 = vrot.slane %v1912, %v1917
      %v1920 = vadd.f32 %v1429, %v1918
      %v1921 = vadd.f32 %v1434, %v1918
      %v1922 = vadd.f32 %v1439, %v1918
      %v1923 = vadd.f32 %v1444, %v1918
      %v1924 = vadd.f32 %v1449, %v1918
      %v1925 = vadd.f32 %v1454, %v1918
      %v1926 = vadd.f32 %v1459, %v1918
      %v1927 = vadd.f32 %v1464, %v1918
      %v1928 = vadd.f32 %v1469, %v1918
      %v1929 = vadd.f32 %v1474, %v1918
      %v1930 = vadd.f32 %v1479, %v1918
      %v1931 = vadd.f32 %v1484, %v1918
      %v1932 = vadd.f32 %v1489, %v1918
      %v1933 = vadd.f32 %v1494, %v1918
      %v1934 = vadd.f32 %v1499, %v1918
      %v1935 = vadd.f32 %v1504, %v1918
      %v1936 = vadd.f32 %v1509, %v1918
      %v1937 = vadd.f32 %v1514, %v1918
      %v1938 = vadd.f32 %v1519, %v1918
      %v1939 = vadd.f32 %v1524, %v1918
      %v1940 = vadd.f32 %v1529, %v1918
      %v1941 = vadd.f32 %v1534, %v1918
      %v1942 = vadd.f32 %v1539, %v1918
      %v1943 = vadd.f32 %v1544, %v1918
      %v1944 = vadd.f32 %v1549, %v1918
      %v1945 = vadd.f32 %v1554, %v1918
      %v1946 = vadd.f32 %v1559, %v1918
      %v1947 = vadd.f32 %v1564, %v1918
      %v1948 = vadd.f32 %v1569, %v1918
      %v1949 = vadd.f32 %v1574, %v1918
      %v1950 = vadd.f32 %v1579, %v1918
      %v1951 = vadd.f32 %v1584, %v1918
      %v1952 = vtanh.pop %v1920
      %v1953 = vtanh.pop %v1921
      %v1954 = vtanh.pop %v1922
      %v1955 = vtanh.pop %v1923
      %v1956 = vtanh.pop %v1924
      %v1957 = vtanh.pop %v1925
      %v1958 = vtanh.pop %v1926
      %v1959 = vtanh.pop %v1927
      %v1960 = vtanh.pop %v1928
      %v1961 = vtanh.pop %v1929
      %v1962 = vtanh.pop %v1930
      %v1963 = vtanh.pop %v1931
      %v1964 = vtanh.pop %v1932
      %v1965 = vtanh.pop %v1933
      %v1966 = vtanh.pop %v1934
      %v1967 = vtanh.pop %v1935
      %v1968 = vtanh.pop %v1936
      %v1969 = vtanh.pop %v1937
      %v1970 = vtanh.pop %v1938
      %v1971 = vtanh.pop %v1939
      %v1972 = vtanh.pop %v1940
      %v1973 = vtanh.pop %v1941
      %v1974 = vtanh.pop %v1942
      %v1975 = vtanh.pop %v1943
      %v1976 = vtanh.pop %v1944
      %v1977 = vtanh.pop %v1945
      %v1978 = vtanh.pop %v1946
      %v1979 = vtanh.pop %v1947
      %v1980 = vtanh.pop %v1948
      %v1981 = vtanh.pop %v1949
      %v1982 = vtanh.pop %v1950
      %v1983 = vtanh.pop %v1951
      %v1984 = vmul.f32 %v1920, 0.5
      %v1985 = vmul.f32 %v1921, 0.5
      %v1986 = vmul.f32 %v1922, 0.5
      %v1987 = vmul.f32 %v1923, 0.5
      %v1988 = vmul.f32 %v1924, 0.5
      %v1989 = vmul.f32 %v1925, 0.5
      %v1990 = vmul.f32 %v1926, 0.5
      %v1991 = vmul.f32 %v1927, 0.5
      %v1992 = vmul.f32 %v1928, 0.5
      %v1993 = vmul.f32 %v1929, 0.5
      %v1994 = vmul.f32 %v1930, 0.5
      %v1995 = vmul.f32 %v1931, 0.5
      %v1996 = vmul.f32 %v1932, 0.5
      %v1997 = vmul.f32 %v1933, 0.5
      %v1998 = vmul.f32 %v1934, 0.5
      %v1999 = vmul.f32 %v1935, 0.5
      %v2000 = vmul.f32 %v1936, 0.5
      %v2001 = vmul.f32 %v1937, 0.5
      %v2002 = vmul.f32 %v1938, 0.5
      %v2003 = vmul.f32 %v1939, 0.5
      %v2004 = vmul.f32 %v1940, 0.5
      %v2005 = vmul.f32 %v1941, 0.5
      %v2006 = vmul.f32 %v1942, 0.5
      %v2007 = vmul.f32 %v1943, 0.5
      %v2008 = vmul.f32 %v1944, 0.5
      %v2009 = vmul.f32 %v1945, 0.5
      %v2010 = vmul.f32 %v1946, 0.5
      %v2011 = vmul.f32 %v1947, 0.5
      %v2012 = vmul.f32 %v1948, 0.5
      %v2013 = vmul.f32 %v1949, 0.5
      %v2014 = vmul.f32 %v1950, 0.5
      %v2015 = vmul.f32 %v1951, 0.5
      %v2016 = vtanh.pop %v1984
      %v2017 = vtanh.pop %v1985
      %v2018 = vtanh.pop %v1986
      %v2019 = vtanh.pop %v1987
      %v2020 = vtanh.pop %v1988
      %v2021 = vtanh.pop %v1989
      %v2022 = vtanh.pop %v1990
      %v2023 = vtanh.pop %v1991
      %v2024 = vtanh.pop %v1992
      %v2025 = vtanh.pop %v1993
      %v2026 = vtanh.pop %v1994
      %v2027 = vtanh.pop %v1995
      %v2028 = vtanh.pop %v1996
      %v2029 = vtanh.pop %v1997
      %v2030 = vtanh.pop %v1998
      %v2031 = vtanh.pop %v1999
      %v2032 = vtanh.pop %v2000
      %v2033 = vtanh.pop %v2001
      %v2034 = vtanh.pop %v2002
      %v2035 = vtanh.pop %v2003
      %v2036 = vtanh.pop %v2004
      %v2037 = vtanh.pop %v2005
      %v2038 = vtanh.pop %v2006
      %v2039 = vtanh.pop %v2007
      %v2040 = vtanh.pop %v2008
      %v2041 = vtanh.pop %v2009
      %v2042 = vtanh.pop %v2010
      %v2043 = vtanh.pop %v2011
      %v2044 = vtanh.pop %v2012
      %v2045 = vtanh.pop %v2013
      %v2046 = vtanh.pop %v2014
      %v2047 = vtanh.pop %v2015
      %v2048 = vmul.f32 %v2016, 0.5
      %v2049 = vmul.f32 %v2017, 0.5
      %v2050 = vmul.f32 %v2018, 0.5
      %v2051 = vmul.f32 %v2019, 0.5
      %v2052 = vmul.f32 %v2020, 0.5
      %v2053 = vmul.f32 %v2021, 0.5
      %v2054 = vmul.f32 %v2022, 0.5
      %v2055 = vmul.f32 %v2023, 0.5
      %v2056 = vmul.f32 %v2024, 0.5
      %v2057 = vmul.f32 %v2025, 0.5
      %v2058 = vmul.f32 %v2026, 0.5
      %v2059 = vmul.f32 %v2027, 0.5
      %v2060 = vmul.f32 %v2028, 0.5
      %v2061 = vmul.f32 %v2029, 0.5
      %v2062 = vmul.f32 %v2030, 0.5
      %v2063 = vmul.f32 %v2031, 0.5
      %v2064 = vmul.f32 %v2032, 0.5
      %v2065 = vmul.f32 %v2033, 0.5
      %v2066 = vmul.f32 %v2034, 0.5
      %v2067 = vmul.f32 %v2035, 0.5
      %v2068 = vmul.f32 %v2036, 0.5
      %v2069 = vmul.f32 %v2037, 0.5
      %v2070 = vmul.f32 %v2038, 0.5
      %v2071 = vmul.f32 %v2039, 0.5
      %v2072 = vmul.f32 %v2040, 0.5
      %v2073 = vmul.f32 %v2041, 0.5
      %v2074 = vmul.f32 %v2042, 0.5
      %v2075 = vmul.f32 %v2043, 0.5
      %v2076 = vmul.f32 %v2044, 0.5
      %v2077 = vmul.f32 %v2045, 0.5
      %v2078 = vmul.f32 %v2046, 0.5
      %v2079 = vmul.f32 %v2047, 0.5
      %v2080 = vadd.f32 %v2048, 0.5
      %v2081 = vadd.f32 %v2049, 0.5
      %v2082 = vadd.f32 %v2050, 0.5
      %v2083 = vadd.f32 %v2051, 0.5
      %v2084 = vadd.f32 %v2052, 0.5
      %v2085 = vadd.f32 %v2053, 0.5
      %v2086 = vadd.f32 %v2054, 0.5
      %v2087 = vadd.f32 %v2055, 0.5
      %v2088 = vadd.f32 %v2056, 0.5
      %v2089 = vadd.f32 %v2057, 0.5
      %v2090 = vadd.f32 %v2058, 0.5
      %v2091 = vadd.f32 %v2059, 0.5
      %v2092 = vadd.f32 %v2060, 0.5
      %v2093 = vadd.f32 %v2061, 0.5
      %v2094 = vadd.f32 %v2062, 0.5
      %v2095 = vadd.f32 %v2063, 0.5
      %v2096 = vadd.f32 %v2064, 0.5
      %v2097 = vadd.f32 %v2065, 0.5
      %v2098 = vadd.f32 %v2066, 0.5
      %v2099 = vadd.f32 %v2067, 0.5
      %v2100 = vadd.f32 %v2068, 0.5
      %v2101 = vadd.f32 %v2069, 0.5
      %v2102 = vadd.f32 %v2070, 0.5
      %v2103 = vadd.f32 %v2071, 0.5
      %v2104 = vadd.f32 %v2072, 0.5
      %v2105 = vadd.f32 %v2073, 0.5
      %v2106 = vadd.f32 %v2074, 0.5
      %v2107 = vadd.f32 %v2075, 0.5
      %v2108 = vadd.f32 %v2076, 0.5
      %v2109 = vadd.f32 %v2077, 0.5
      %v2110 = vadd.f32 %v2078, 0.5
      %v2111 = vadd.f32 %v2079, 0.5
      %2144 = vrot.lane.b32.xlu0 %v2080, 124
      %v2145 = vpop.permute.xlu0 %2144
      %2146 = vrot.lane.b32.xlu0 %v2081, 124
      %v2147 = vpop.permute.xlu0 %2146
      %2148 = vrot.lane.b32.xlu0 %v2082, 124
      %v2149 = vpop.permute.xlu0 %2148
      %2150 = vrot.lane.b32.xlu0 %v2083, 124
      %v2151 = vpop.permute.xlu0 %2150
      %2152 = vrot.lane.b32.xlu0 %v2084, 124
      %v2153 = vpop.permute.xlu0 %2152
      %2154 = vrot.lane.b32.xlu0 %v2085, 124
      %v2155 = vpop.permute.xlu0 %2154
      %2156 = vrot.lane.b32.xlu0 %v2086, 124
      %v2157 = vpop.permute.xlu0 %2156
      %2158 = vrot.lane.b32.xlu0 %v2087, 124
      %v2159 = vpop.permute.xlu0 %2158
      %2160 = vrot.lane.b32.xlu0 %v2088, 124
      %v2161 = vpop.permute.xlu0 %2160
      %2162 = vrot.lane.b32.xlu0 %v2089, 124
      %v2163 = vpop.permute.xlu0 %2162
      %2164 = vrot.lane.b32.xlu0 %v2090, 124
      %v2165 = vpop.permute.xlu0 %2164
      %2166 = vrot.lane.b32.xlu0 %v2091, 124
      %v2167 = vpop.permute.xlu0 %2166
      %2168 = vrot.lane.b32.xlu0 %v2092, 124
      %v2169 = vpop.permute.xlu0 %2168
      %2170 = vrot.lane.b32.xlu0 %v2093, 124
      %v2171 = vpop.permute.xlu0 %2170
      %2172 = vrot.lane.b32.xlu0 %v2094, 124
      %v2173 = vpop.permute.xlu0 %2172
      %2174 = vrot.lane.b32.xlu0 %v2095, 124
      %v2175 = vpop.permute.xlu0 %2174
      %2176 = vrot.lane.b32.xlu0 %v2096, 124
      %v2177 = vpop.permute.xlu0 %2176
      %2178 = vrot.lane.b32.xlu0 %v2097, 124
      %v2179 = vpop.permute.xlu0 %2178
      %2180 = vrot.lane.b32.xlu0 %v2098, 124
      %v2181 = vpop.permute.xlu0 %2180
      %2182 = vrot.lane.b32.xlu0 %v2099, 124
      %v2183 = vpop.permute.xlu0 %2182
      %2184 = vrot.lane.b32.xlu0 %v2100, 124
      %v2185 = vpop.permute.xlu0 %2184
      %2186 = vrot.lane.b32.xlu0 %v2101, 124
      %v2187 = vpop.permute.xlu0 %2186
      %2188 = vrot.lane.b32.xlu0 %v2102, 124
      %v2189 = vpop.permute.xlu0 %2188
      %2190 = vrot.lane.b32.xlu0 %v2103, 124
      %v2191 = vpop.permute.xlu0 %2190
      %2192 = vrot.lane.b32.xlu0 %v2104, 124
      %v2193 = vpop.permute.xlu0 %2192
      %2194 = vrot.lane.b32.xlu0 %v2105, 124
      %v2195 = vpop.permute.xlu0 %2194
      %2196 = vrot.lane.b32.xlu0 %v2106, 124
      %v2197 = vpop.permute.xlu0 %2196
      %2198 = vrot.lane.b32.xlu0 %v2107, 124
      %v2199 = vpop.permute.xlu0 %2198
      %2200 = vrot.lane.b32.xlu0 %v2108, 124
      %v2201 = vpop.permute.xlu0 %2200
      %2202 = vrot.lane.b32.xlu0 %v2109, 124
      %v2203 = vpop.permute.xlu0 %2202
      %2204 = vrot.lane.b32.xlu0 %v2110, 124
      %v2205 = vpop.permute.xlu0 %2204
      %2206 = vrot.lane.b32.xlu0 %v2111, 124
      %v2207 = vpop.permute.xlu0 %2206
      %v2240 = vmul.f32 %v1952, %v2145
      %v2241 = vmul.f32 %v1953, %v2147
      %v2242 = vmul.f32 %v1954, %v2149
      %v2243 = vmul.f32 %v1955, %v2151
      %v2244 = vmul.f32 %v1956, %v2153
      %v2245 = vmul.f32 %v1957, %v2155
      %v2246 = vmul.f32 %v1958, %v2157
      %v2247 = vmul.f32 %v1959, %v2159
      %v2248 = vmul.f32 %v1960, %v2161
      %v2249 = vmul.f32 %v1961, %v2163
      %v2250 = vmul.f32 %v1962, %v2165
      %v2251 = vmul.f32 %v1963, %v2167
      %v2252 = vmul.f32 %v1964, %v2169
      %v2253 = vmul.f32 %v1965, %v2171
      %v2254 = vmul.f32 %v1966, %v2173
      %v2255 = vmul.f32 %v1967, %v2175
      %v2256 = vmul.f32 %v1968, %v2177
      %v2257 = vmul.f32 %v1969, %v2179
      %v2258 = vmul.f32 %v1970, %v2181
      %v2259 = vmul.f32 %v1971, %v2183
      %v2260 = vmul.f32 %v1972, %v2185
      %v2261 = vmul.f32 %v1973, %v2187
      %v2262 = vmul.f32 %v1974, %v2189
      %v2263 = vmul.f32 %v1975, %v2191
      %v2264 = vmul.f32 %v1976, %v2193
      %v2265 = vmul.f32 %v1977, %v2195
      %v2266 = vmul.f32 %v1978, %v2197
      %v2267 = vmul.f32 %v1979, %v2199
      %v2268 = vmul.f32 %v1980, %v2201
      %v2269 = vmul.f32 %v1981, %v2203
      %v2270 = vmul.f32 %v1982, %v2205
      %v2271 = vmul.f32 %v1983, %v2207
      %v2272 = vld [vmem:[%s6] sm:$0xff]
      %v2273 = vld [vmem:[%s8] sm:$0x1]
      %v2275 = vlaneseq
      %v2276 = vshrl.u32 %v2275, 7
      %v2277 = vsub.s32 0, %v2276
      %v2278 = vrot.slane %v2273, %v2277
      %v2281 = vsel %vm1226, %v1429, 0
      %v2284 = vsel %vm1226, %v1434, 0
      %v2287 = vsel %vm1226, %v1439, 0
      %v2290 = vsel %vm1226, %v1444, 0
      %v2293 = vsel %vm1226, %v1449, 0
      %v2296 = vsel %vm1226, %v1454, 0
      %v2299 = vsel %vm1226, %v1459, 0
      %v2302 = vsel %vm1226, %v1464, 0
      %v2305 = vsel %vm1226, %v1469, 0
      %v2308 = vsel %vm1226, %v1474, 0
      %v2311 = vsel %vm1226, %v1479, 0
      %v2314 = vsel %vm1226, %v1484, 0
      %v2317 = vsel %vm1226, %v1489, 0
      %v2320 = vsel %vm1226, %v1494, 0
      %v2323 = vsel %vm1226, %v1499, 0
      %v2326 = vsel %vm1226, %v1504, 0
      %v2329 = vsel %vm1226, %v1509, 0
      %v2332 = vsel %vm1226, %v1514, 0
      %v2335 = vsel %vm1226, %v1519, 0
      %v2338 = vsel %vm1226, %v1524, 0
      %v2341 = vsel %vm1226, %v1529, 0
      %v2344 = vsel %vm1226, %v1534, 0
      %v2347 = vsel %vm1226, %v1539, 0
      %v2350 = vsel %vm1226, %v1544, 0
      %v2353 = vsel %vm1226, %v1549, 0
      %v2356 = vsel %vm1226, %v1554, 0
      %v2359 = vsel %vm1226, %v1559, 0
      %v2362 = vsel %vm1226, %v1564, 0
      %v2365 = vsel %vm1226, %v1569, 0
      %v2368 = vsel %vm1226, %v1574, 0
      %v2371 = vsel %vm1226, %v1579, 0
      %v2374 = vsel %vm1226, %v1584, 0
      %2376 = vmatprep.subr.mxu0 0.0
      %2377 = vmatpush1.msra.mxu0 %v2272
      %2378 = vmatprep.subr.mxu0 0.0
      %2379 = vmatpush1.msra.mxu0 0.0
      %2380 = vmatprep.subr.mxu0 0.0
      %2381 = vmatpush1.msra.mxu0 0.0
      %2382 = vmatprep.subr.mxu0 0.0
      %2383 = vmatpush1.msra.mxu0 0.0
      %2384 = vmatprep.subr.mxu0 0.0
      %2385 = vmatpush1.msra.mxu0 0.0
      %2386 = vmatprep.subr.mxu0 0.0
      %2387 = vmatpush1.msra.mxu0 0.0
      %2388 = vmatprep.subr.mxu0 0.0
      %2389 = vmatpush1.msra.mxu0 0.0
      %2390 = vmatprep.subr.mxu0 0.0
      %2391 = vmatpush1.msra.mxu0 0.0
      %2392 = vmatprep.subr.mxu0 0.0
      %2393 = vmatpush1.msra.mxu0 0.0
      %2394 = vmatprep.subr.mxu0 0.0
      %2395 = vmatpush1.msra.mxu0 0.0
      %2396 = vmatprep.subr.mxu0 0.0
      %2397 = vmatpush1.msra.mxu0 0.0
      %2398 = vmatprep.subr.mxu0 0.0
      %2399 = vmatpush1.msra.mxu0 0.0
      %2400 = vmatprep.subr.mxu0 0.0
      %2401 = vmatpush1.msra.mxu0 0.0
      %2402 = vmatprep.subr.mxu0 0.0
      %2403 = vmatpush1.msra.mxu0 0.0
      %2404 = vmatprep.subr.mxu0 0.0
      %2405 = vmatpush1.msra.mxu0 0.0
      %2406 = vmatprep.subr.mxu0 0.0
      %2407 = vmatpush1.msra.mxu0 0.0
      %2408 = vmatprep.subr.mxu0 0.0
      %2409 = vmatpush1.msra.mxu0 0.0
      %2410 = vmatprep.subr.mxu0 0.0
      %2411 = vmatpush1.msra.mxu0 0.0
      %2412 = vmatprep.subr.mxu0 0.0
      %2413 = vmatpush1.msra.mxu0 0.0
      %2414 = vmatprep.subr.mxu0 0.0
      %2415 = vmatpush1.msra.mxu0 0.0
      %2416 = vmatprep.subr.mxu0 0.0
      %2417 = vmatpush1.msra.mxu0 0.0
      %2418 = vmatprep.subr.mxu0 0.0
      %2419 = vmatpush1.msra.mxu0 0.0
      %2420 = vmatprep.subr.mxu0 0.0
      %2421 = vmatpush1.msra.mxu0 0.0
      %2422 = vmatprep.subr.mxu0 0.0
      %2423 = vmatpush1.msra.mxu0 0.0
      %2424 = vmatprep.subr.mxu0 0.0
      %2425 = vmatpush1.msra.mxu0 0.0
      %2426 = vmatprep.subr.mxu0 0.0
      %2427 = vmatpush1.msra.mxu0 0.0
      %2428 = vmatprep.subr.mxu0 0.0
      %2429 = vmatpush1.msra.mxu0 0.0
      %2430 = vmatprep.subr.mxu0 0.0
      %2431 = vmatpush1.msra.mxu0 0.0
      %2432 = vmatprep.subr.mxu0 0.0
      %2433 = vmatpush1.msra.mxu0 0.0
      %2434 = vmatprep.subr.mxu0 0.0
      %2435 = vmatpush1.msra.mxu0 0.0
      %2436 = vmatprep.subr.mxu0 0.0
      %2437 = vmatpush1.msra.mxu0 0.0
      %2438 = vmatprep.subr.mxu0 0.0
      %2439 = vmatpush1.msra.mxu0 0.0
      %2440 = vmatprep.mubr.f32.mxu0 0.0
      %2441 = vmatmul.mubr.f32.gmra.mrb[0].mxu0 %v2281
      %v2442 = vpop.f32.mrb[0].mxu0
      %v2443 = vadd.f32 %v2278, %v2442
      %v2444 = vpop.f32.mrb[0].mxu0
      %2445 = vmatprep.mubr.f32.mxu0 0.0
      %2446 = vmatmul.mubr.f32.gmra.mrb[0].mxu0 %v2284
      %v2447 = vpop.f32.mrb[0].mxu0
      %v2448 = vadd.f32 %v2278, %v2447
      %v2449 = vpop.f32.mrb[0].mxu0
      %2450 = vmatprep.mubr.f32.mxu0 0.0
      %2451 = vmatmul.mubr.f32.gmra.mrb[0].mxu0 %v2287
      %v2452 = vpop.f32.mrb[0].mxu0
      %v2453 = vadd.f32 %v2278, %v2452
      %v2454 = vpop.f32.mrb[0].mxu0
      %2455 = vmatprep.mubr.f32.mxu0 0.0
      %2456 = vmatmul.mubr.f32.gmra.mrb[0].mxu0 %v2290
      %v2457 = vpop.f32.mrb[0].mxu0
      %v2458 = vadd.f32 %v2278, %v2457
      %v2459 = vpop.f32.mrb[0].mxu0
      %2460 = vmatprep.mubr.f32.mxu0 0.0
      %2461 = vmatmul.mubr.f32.gmra.mrb[0].mxu0 %v2293
      %v2462 = vpop.f32.mrb[0].mxu0
      %v2463 = vadd.f32 %v2278, %v2462
      %v2464 = vpop.f32.mrb[0].mxu0
      %2465 = vmatprep.mubr.f32.mxu0 0.0
      %2466 = vmatmul.mubr.f32.gmra.mrb[0].mxu0 %v2296
      %v2467 = vpop.f32.mrb[0].mxu0
      %v2468 = vadd.f32 %v2278, %v2467
      %v2469 = vpop.f32.mrb[0].mxu0
      %2470 = vmatprep.mubr.f32.mxu0 0.0
      %2471 = vmatmul.mubr.f32.gmra.mrb[0].mxu0 %v2299
      %v2472 = vpop.f32.mrb[0].mxu0
      %v2473 = vadd.f32 %v2278, %v2472
      %v2474 = vpop.f32.mrb[0].mxu0
      %2475 = vmatprep.mubr.f32.mxu0 0.0
      %2476 = vmatmul.mubr.f32.gmra.mrb[0].mxu0 %v2302
      %v2477 = vpop.f32.mrb[0].mxu0
      %v2478 = vadd.f32 %v2278, %v2477
      %v2479 = vpop.f32.mrb[0].mxu0
      %2480 = vmatprep.mubr.f32.mxu0 0.0
      %2481 = vmatmul.mubr.f32.gmra.mrb[0].mxu0 %v2305
      %v2482 = vpop.f32.mrb[0].mxu0
      %v2483 = vadd.f32 %v2278, %v2482
      %v2484 = vpop.f32.mrb[0].mxu0
      %2485 = vmatprep.mubr.f32.mxu0 0.0
      %2486 = vmatmul.mubr.f32.gmra.mrb[0].mxu0 %v2308
      %v2487 = vpop.f32.mrb[0].mxu0
      %v2488 = vadd.f32 %v2278, %v2487
      %v2489 = vpop.f32.mrb[0].mxu0
      %2490 = vmatprep.mubr.f32.mxu0 0.0
      %2491 = vmatmul.mubr.f32.gmra.mrb[0].mxu0 %v2311
      %v2492 = vpop.f32.mrb[0].mxu0
      %v2493 = vadd.f32 %v2278, %v2492
      %v2494 = vpop.f32.mrb[0].mxu0
      %2495 = vmatprep.mubr.f32.mxu0 0.0
      %2496 = vmatmul.mubr.f32.gmra.mrb[0].mxu0 %v2314
      %v2497 = vpop.f32.mrb[0].mxu0
      %v2498 = vadd.f32 %v2278, %v2497
      %v2499 = vpop.f32.mrb[0].mxu0
      %2500 = vmatprep.mubr.f32.mxu0 0.0
      %2501 = vmatmul.mubr.f32.gmra.mrb[0].mxu0 %v2317
      %v2502 = vpop.f32.mrb[0].mxu0
      %v2503 = vadd.f32 %v2278, %v2502
      %v2504 = vpop.f32.mrb[0].mxu0
      %2505 = vmatprep.mubr.f32.mxu0 0.0
      %2506 = vmatmul.mubr.f32.gmra.mrb[0].mxu0 %v2320
      %v2507 = vpop.f32.mrb[0].mxu0
      %v2508 = vadd.f32 %v2278, %v2507
      %v2509 = vpop.f32.mrb[0].mxu0
      %2510 = vmatprep.mubr.f32.mxu0 0.0
      %2511 = vmatmul.mubr.f32.gmra.mrb[0].mxu0 %v2323
      %v2512 = vpop.f32.mrb[0].mxu0
      %v2513 = vadd.f32 %v2278, %v2512
      %v2514 = vpop.f32.mrb[0].mxu0
      %2515 = vmatprep.mubr.f32.mxu0 0.0
      %2516 = vmatmul.mubr.f32.gmra.mrb[0].mxu0 %v2326
      %v2517 = vpop.f32.mrb[0].mxu0
      %v2518 = vadd.f32 %v2278, %v2517
      %v2519 = vpop.f32.mrb[0].mxu0
      %2520 = vmatprep.mubr.f32.mxu0 0.0
      %2521 = vmatmul.mubr.f32.gmra.mrb[0].mxu0 %v2329
      %v2522 = vpop.f32.mrb[0].mxu0
      %v2523 = vadd.f32 %v2278, %v2522
      %v2524 = vpop.f32.mrb[0].mxu0
      %2525 = vmatprep.mubr.f32.mxu0 0.0
      %2526 = vmatmul.mubr.f32.gmra.mrb[0].mxu0 %v2332
      %v2527 = vpop.f32.mrb[0].mxu0
      %v2528 = vadd.f32 %v2278, %v2527
      %v2529 = vpop.f32.mrb[0].mxu0
      %2530 = vmatprep.mubr.f32.mxu0 0.0
      %2531 = vmatmul.mubr.f32.gmra.mrb[0].mxu0 %v2335
      %v2532 = vpop.f32.mrb[0].mxu0
      %v2533 = vadd.f32 %v2278, %v2532
      %v2534 = vpop.f32.mrb[0].mxu0
      %2535 = vmatprep.mubr.f32.mxu0 0.0
      %2536 = vmatmul.mubr.f32.gmra.mrb[0].mxu0 %v2338
      %v2537 = vpop.f32.mrb[0].mxu0
      %v2538 = vadd.f32 %v2278, %v2537
      %v2539 = vpop.f32.mrb[0].mxu0
      %2540 = vmatprep.mubr.f32.mxu0 0.0
      %2541 = vmatmul.mubr.f32.gmra.mrb[0].mxu0 %v2341
      %v2542 = vpop.f32.mrb[0].mxu0
      %v2543 = vadd.f32 %v2278, %v2542
      %v2544 = vpop.f32.mrb[0].mxu0
      %2545 = vmatprep.mubr.f32.mxu0 0.0
      %2546 = vmatmul.mubr.f32.gmra.mrb[0].mxu0 %v2344
      %v2547 = vpop.f32.mrb[0].mxu0
      %v2548 = vadd.f32 %v2278, %v2547
      %v2549 = vpop.f32.mrb[0].mxu0
      %2550 = vmatprep.mubr.f32.mxu0 0.0
      %2551 = vmatmul.mubr.f32.gmra.mrb[0].mxu0 %v2347
      %v2552 = vpop.f32.mrb[0].mxu0
      %v2553 = vadd.f32 %v2278, %v2552
      %v2554 = vpop.f32.mrb[0].mxu0
      %2555 = vmatprep.mubr.f32.mxu0 0.0
      %2556 = vmatmul.mubr.f32.gmra.mrb[0].mxu0 %v2350
      %v2557 = vpop.f32.mrb[0].mxu0
      %v2558 = vadd.f32 %v2278, %v2557
      %v2559 = vpop.f32.mrb[0].mxu0
      %2560 = vmatprep.mubr.f32.mxu0 0.0
      %2561 = vmatmul.mubr.f32.gmra.mrb[0].mxu0 %v2353
      %v2562 = vpop.f32.mrb[0].mxu0
      %v2563 = vadd.f32 %v2278, %v2562
      %v2564 = vpop.f32.mrb[0].mxu0
      %2565 = vmatprep.mubr.f32.mxu0 0.0
      %2566 = vmatmul.mubr.f32.gmra.mrb[0].mxu0 %v2356
      %v2567 = vpop.f32.mrb[0].mxu0
      %v2568 = vadd.f32 %v2278, %v2567
      %v2569 = vpop.f32.mrb[0].mxu0
      %2570 = vmatprep.mubr.f32.mxu0 0.0
      %2571 = vmatmul.mubr.f32.gmra.mrb[0].mxu0 %v2359
      %v2572 = vpop.f32.mrb[0].mxu0
      %v2573 = vadd.f32 %v2278, %v2572
      %v2574 = vpop.f32.mrb[0].mxu0
      %2575 = vmatprep.mubr.f32.mxu0 0.0
      %2576 = vmatmul.mubr.f32.gmra.mrb[0].mxu0 %v2362
      %v2577 = vpop.f32.mrb[0].mxu0
      %v2578 = vadd.f32 %v2278, %v2577
      %v2579 = vpop.f32.mrb[0].mxu0
      %2580 = vmatprep.mubr.f32.mxu0 0.0
      %2581 = vmatmul.mubr.f32.gmra.mrb[0].mxu0 %v2365
      %v2582 = vpop.f32.mrb[0].mxu0
      %v2583 = vadd.f32 %v2278, %v2582
      %v2584 = vpop.f32.mrb[0].mxu0
      %2585 = vmatprep.mubr.f32.mxu0 0.0
      %2586 = vmatmul.mubr.f32.gmra.mrb[0].mxu0 %v2368
      %v2587 = vpop.f32.mrb[0].mxu0
      %v2588 = vadd.f32 %v2278, %v2587
      %v2589 = vpop.f32.mrb[0].mxu0
      %2590 = vmatprep.mubr.f32.mxu0 0.0
      %2591 = vmatmul.mubr.f32.gmra.mrb[0].mxu0 %v2371
      %v2592 = vpop.f32.mrb[0].mxu0
      %v2593 = vadd.f32 %v2278, %v2592
      %v2594 = vpop.f32.mrb[0].mxu0
      %2595 = vmatprep.mubr.f32.mxu0 0.0
      %2596 = vmatmul.mubr.f32.gmra.mrb[0].mxu0 %v2374
      %v2597 = vpop.f32.mrb[0].mxu0
      %v2598 = vadd.f32 %v2278, %v2597
      %v2599 = vpop.f32.mrb[0].mxu0
      %2600 = vdwg.mxu0
      %v2601 = vadd.f32 %v2443, %v1754
      %v2602 = vadd.f32 %v2448, %v1759
      %v2603 = vadd.f32 %v2453, %v1764
      %v2604 = vadd.f32 %v2458, %v1769
      %v2605 = vadd.f32 %v2463, %v1774
      %v2606 = vadd.f32 %v2468, %v1779
      %v2607 = vadd.f32 %v2473, %v1784
      %v2608 = vadd.f32 %v2478, %v1789
      %v2609 = vadd.f32 %v2483, %v1794
      %v2610 = vadd.f32 %v2488, %v1799
      %v2611 = vadd.f32 %v2493, %v1804
      %v2612 = vadd.f32 %v2498, %v1809
      %v2613 = vadd.f32 %v2503, %v1814
      %v2614 = vadd.f32 %v2508, %v1819
      %v2615 = vadd.f32 %v2513, %v1824
      %v2616 = vadd.f32 %v2518, %v1829
      %v2617 = vadd.f32 %v2523, %v1834
      %v2618 = vadd.f32 %v2528, %v1839
      %v2619 = vadd.f32 %v2533, %v1844
      %v2620 = vadd.f32 %v2538, %v1849
      %v2621 = vadd.f32 %v2543, %v1854
      %v2622 = vadd.f32 %v2548, %v1859
      %v2623 = vadd.f32 %v2553, %v1864
      %v2624 = vadd.f32 %v2558, %v1869
      %v2625 = vadd.f32 %v2563, %v1874
      %v2626 = vadd.f32 %v2568, %v1879
      %v2627 = vadd.f32 %v2573, %v1884
      %v2628 = vadd.f32 %v2578, %v1889
      %v2629 = vadd.f32 %v2583, %v1894
      %v2630 = vadd.f32 %v2588, %v1899
      %v2631 = vadd.f32 %v2593, %v1904
      %v2632 = vadd.f32 %v2598, %v1909
      %v2634 = vlaneseq
      %v2635 = vshrl.u32 %v2634, 7
      %v2636 = vsub.s32 0, %v2635
      %v2637 = vrot.slane %v1913, %v2636
      %v2639 = vadd.f32 %v2601, %v2637
      %v2640 = vadd.f32 %v2602, %v2637
      %v2641 = vadd.f32 %v2603, %v2637
      %v2642 = vadd.f32 %v2604, %v2637
      %v2643 = vadd.f32 %v2605, %v2637
      %v2644 = vadd.f32 %v2606, %v2637
      %v2645 = vadd.f32 %v2607, %v2637
      %v2646 = vadd.f32 %v2608, %v2637
      %v2647 = vadd.f32 %v2609, %v2637
      %v2648 = vadd.f32 %v2610, %v2637
      %v2649 = vadd.f32 %v2611, %v2637
      %v2650 = vadd.f32 %v2612, %v2637
      %v2651 = vadd.f32 %v2613, %v2637
      %v2652 = vadd.f32 %v2614, %v2637
      %v2653 = vadd.f32 %v2615, %v2637
      %v2654 = vadd.f32 %v2616, %v2637
      %v2655 = vadd.f32 %v2617, %v2637
      %v2656 = vadd.f32 %v2618, %v2637
      %v2657 = vadd.f32 %v2619, %v2637
      %v2658 = vadd.f32 %v2620, %v2637
      %v2659 = vadd.f32 %v2621, %v2637
      %v2660 = vadd.f32 %v2622, %v2637
      %v2661 = vadd.f32 %v2623, %v2637
      %v2662 = vadd.f32 %v2624, %v2637
      %v2663 = vadd.f32 %v2625, %v2637
      %v2664 = vadd.f32 %v2626, %v2637
      %v2665 = vadd.f32 %v2627, %v2637
      %v2666 = vadd.f32 %v2628, %v2637
      %v2667 = vadd.f32 %v2629, %v2637
      %v2668 = vadd.f32 %v2630, %v2637
      %v2669 = vadd.f32 %v2631, %v2637
      %v2670 = vadd.f32 %v2632, %v2637
      %v2671 = vtanh.pop %v2639
      %v2672 = vtanh.pop %v2640
      %v2673 = vtanh.pop %v2641
      %v2674 = vtanh.pop %v2642
      %v2675 = vtanh.pop %v2643
      %v2676 = vtanh.pop %v2644
      %v2677 = vtanh.pop %v2645
      %v2678 = vtanh.pop %v2646
      %v2679 = vtanh.pop %v2647
      %v2680 = vtanh.pop %v2648
      %v2681 = vtanh.pop %v2649
      %v2682 = vtanh.pop %v2650
      %v2683 = vtanh.pop %v2651
      %v2684 = vtanh.pop %v2652
      %v2685 = vtanh.pop %v2653
      %v2686 = vtanh.pop %v2654
      %v2687 = vtanh.pop %v2655
      %v2688 = vtanh.pop %v2656
      %v2689 = vtanh.pop %v2657
      %v2690 = vtanh.pop %v2658
      %v2691 = vtanh.pop %v2659
      %v2692 = vtanh.pop %v2660
      %v2693 = vtanh.pop %v2661
      %v2694 = vtanh.pop %v2662
      %v2695 = vtanh.pop %v2663
      %v2696 = vtanh.pop %v2664
      %v2697 = vtanh.pop %v2665
      %v2698 = vtanh.pop %v2666
      %v2699 = vtanh.pop %v2667
      %v2700 = vtanh.pop %v2668
      %v2701 = vtanh.pop %v2669
      %v2702 = vtanh.pop %v2670
      %v2703 = vmul.f32 %v2639, 0.5
      %v2704 = vmul.f32 %v2640, 0.5
      %v2705 = vmul.f32 %v2641, 0.5
      %v2706 = vmul.f32 %v2642, 0.5
      %v2707 = vmul.f32 %v2643, 0.5
      %v2708 = vmul.f32 %v2644, 0.5
      %v2709 = vmul.f32 %v2645, 0.5
      %v2710 = vmul.f32 %v2646, 0.5
      %v2711 = vmul.f32 %v2647, 0.5
      %v2712 = vmul.f32 %v2648, 0.5
      %v2713 = vmul.f32 %v2649, 0.5
      %v2714 = vmul.f32 %v2650, 0.5
      %v2715 = vmul.f32 %v2651, 0.5
      %v2716 = vmul.f32 %v2652, 0.5
      %v2717 = vmul.f32 %v2653, 0.5
      %v2718 = vmul.f32 %v2654, 0.5
      %v2719 = vmul.f32 %v2655, 0.5
      %v2720 = vmul.f32 %v2656, 0.5
      %v2721 = vmul.f32 %v2657, 0.5
      %v2722 = vmul.f32 %v2658, 0.5
      %v2723 = vmul.f32 %v2659, 0.5
      %v2724 = vmul.f32 %v2660, 0.5
      %v2725 = vmul.f32 %v2661, 0.5
      %v2726 = vmul.f32 %v2662, 0.5
      %v2727 = vmul.f32 %v2663, 0.5
      %v2728 = vmul.f32 %v2664, 0.5
      %v2729 = vmul.f32 %v2665, 0.5
      %v2730 = vmul.f32 %v2666, 0.5
      %v2731 = vmul.f32 %v2667, 0.5
      %v2732 = vmul.f32 %v2668, 0.5
      %v2733 = vmul.f32 %v2669, 0.5
      %v2734 = vmul.f32 %v2670, 0.5
      %v2735 = vtanh.pop %v2703
      %v2736 = vtanh.pop %v2704
      %v2737 = vtanh.pop %v2705
      %v2738 = vtanh.pop %v2706
      %v2739 = vtanh.pop %v2707
      %v2740 = vtanh.pop %v2708
      %v2741 = vtanh.pop %v2709
      %v2742 = vtanh.pop %v2710
      %v2743 = vtanh.pop %v2711
      %v2744 = vtanh.pop %v2712
      %v2745 = vtanh.pop %v2713
      %v2746 = vtanh.pop %v2714
      %v2747 = vtanh.pop %v2715
      %v2748 = vtanh.pop %v2716
      %v2749 = vtanh.pop %v2717
      %v2750 = vtanh.pop %v2718
      %v2751 = vtanh.pop %v2719
      %v2752 = vtanh.pop %v2720
      %v2753 = vtanh.pop %v2721
      %v2754 = vtanh.pop %v2722
      %v2755 = vtanh.pop %v2723
      %v2756 = vtanh.pop %v2724
      %v2757 = vtanh.pop %v2725
      %v2758 = vtanh.pop %v2726
      %v2759 = vtanh.pop %v2727
      %v2760 = vtanh.pop %v2728
      %v2761 = vtanh.pop %v2729
      %v2762 = vtanh.pop %v2730
      %v2763 = vtanh.pop %v2731
      %v2764 = vtanh.pop %v2732
      %v2765 = vtanh.pop %v2733
      %v2766 = vtanh.pop %v2734
      %v2767 = vmul.f32 %v2735, 0.5
      %v2768 = vmul.f32 %v2736, 0.5
      %v2769 = vmul.f32 %v2737, 0.5
      %v2770 = vmul.f32 %v2738, 0.5
      %v2771 = vmul.f32 %v2739, 0.5
      %v2772 = vmul.f32 %v2740, 0.5
      %v2773 = vmul.f32 %v2741, 0.5
      %v2774 = vmul.f32 %v2742, 0.5
      %v2775 = vmul.f32 %v2743, 0.5
      %v2776 = vmul.f32 %v2744, 0.5
      %v2777 = vmul.f32 %v2745, 0.5
      %v2778 = vmul.f32 %v2746, 0.5
      %v2779 = vmul.f32 %v2747, 0.5
      %v2780 = vmul.f32 %v2748, 0.5
      %v2781 = vmul.f32 %v2749, 0.5
      %v2782 = vmul.f32 %v2750, 0.5
      %v2783 = vmul.f32 %v2751, 0.5
      %v2784 = vmul.f32 %v2752, 0.5
      %v2785 = vmul.f32 %v2753, 0.5
      %v2786 = vmul.f32 %v2754, 0.5
      %v2787 = vmul.f32 %v2755, 0.5
      %v2788 = vmul.f32 %v2756, 0.5
      %v2789 = vmul.f32 %v2757, 0.5
      %v2790 = vmul.f32 %v2758, 0.5
      %v2791 = vmul.f32 %v2759, 0.5
      %v2792 = vmul.f32 %v2760, 0.5
      %v2793 = vmul.f32 %v2761, 0.5
      %v2794 = vmul.f32 %v2762, 0.5
      %v2795 = vmul.f32 %v2763, 0.5
      %v2796 = vmul.f32 %v2764, 0.5
      %v2797 = vmul.f32 %v2765, 0.5
      %v2798 = vmul.f32 %v2766, 0.5
      %v2799 = vadd.f32 %v2767, 0.5
      %v2800 = vadd.f32 %v2768, 0.5
      %v2801 = vadd.f32 %v2769, 0.5
      %v2802 = vadd.f32 %v2770, 0.5
      %v2803 = vadd.f32 %v2771, 0.5
      %v2804 = vadd.f32 %v2772, 0.5
      %v2805 = vadd.f32 %v2773, 0.5
      %v2806 = vadd.f32 %v2774, 0.5
      %v2807 = vadd.f32 %v2775, 0.5
      %v2808 = vadd.f32 %v2776, 0.5
      %v2809 = vadd.f32 %v2777, 0.5
      %v2810 = vadd.f32 %v2778, 0.5
      %v2811 = vadd.f32 %v2779, 0.5
      %v2812 = vadd.f32 %v2780, 0.5
      %v2813 = vadd.f32 %v2781, 0.5
      %v2814 = vadd.f32 %v2782, 0.5
      %v2815 = vadd.f32 %v2783, 0.5
      %v2816 = vadd.f32 %v2784, 0.5
      %v2817 = vadd.f32 %v2785, 0.5
      %v2818 = vadd.f32 %v2786, 0.5
      %v2819 = vadd.f32 %v2787, 0.5
      %v2820 = vadd.f32 %v2788, 0.5
      %v2821 = vadd.f32 %v2789, 0.5
      %v2822 = vadd.f32 %v2790, 0.5
      %v2823 = vadd.f32 %v2791, 0.5
      %v2824 = vadd.f32 %v2792, 0.5
      %v2825 = vadd.f32 %v2793, 0.5
      %v2826 = vadd.f32 %v2794, 0.5
      %v2827 = vadd.f32 %v2795, 0.5
      %v2828 = vadd.f32 %v2796, 0.5
      %v2829 = vadd.f32 %v2797, 0.5
      %v2830 = vadd.f32 %v2798, 0.5
      %2863 = vrot.lane.b32.xlu0 %v2799, 124
      %v2864 = vpop.permute.xlu0 %2863
      %2865 = vrot.lane.b32.xlu0 %v2800, 124
      %v2866 = vpop.permute.xlu0 %2865
      %2867 = vrot.lane.b32.xlu0 %v2801, 124
      %v2868 = vpop.permute.xlu0 %2867
      %2869 = vrot.lane.b32.xlu0 %v2802, 124
      %v2870 = vpop.permute.xlu0 %2869
      %2871 = vrot.lane.b32.xlu0 %v2803, 124
      %v2872 = vpop.permute.xlu0 %2871
      %2873 = vrot.lane.b32.xlu0 %v2804, 124
      %v2874 = vpop.permute.xlu0 %2873
      %2875 = vrot.lane.b32.xlu0 %v2805, 124
      %v2876 = vpop.permute.xlu0 %2875
      %2877 = vrot.lane.b32.xlu0 %v2806, 124
      %v2878 = vpop.permute.xlu0 %2877
      %2879 = vrot.lane.b32.xlu0 %v2807, 124
      %v2880 = vpop.permute.xlu0 %2879
      %2881 = vrot.lane.b32.xlu0 %v2808, 124
      %v2882 = vpop.permute.xlu0 %2881
      %2883 = vrot.lane.b32.xlu0 %v2809, 124
      %v2884 = vpop.permute.xlu0 %2883
      %2885 = vrot.lane.b32.xlu0 %v2810, 124
      %v2886 = vpop.permute.xlu0 %2885
      %2887 = vrot.lane.b32.xlu0 %v2811, 124
      %v2888 = vpop.permute.xlu0 %2887
      %2889 = vrot.lane.b32.xlu0 %v2812, 124
      %v2890 = vpop.permute.xlu0 %2889
      %2891 = vrot.lane.b32.xlu0 %v2813, 124
      %v2892 = vpop.permute.xlu0 %2891
      %2893 = vrot.lane.b32.xlu0 %v2814, 124
      %v2894 = vpop.permute.xlu0 %2893
      %2895 = vrot.lane.b32.xlu0 %v2815, 124
      %v2896 = vpop.permute.xlu0 %2895
      %2897 = vrot.lane.b32.xlu0 %v2816, 124
      %v2898 = vpop.permute.xlu0 %2897
      %2899 = vrot.lane.b32.xlu0 %v2817, 124
      %v2900 = vpop.permute.xlu0 %2899
      %2901 = vrot.lane.b32.xlu0 %v2818, 124
      %v2902 = vpop.permute.xlu0 %2901
      %2903 = vrot.lane.b32.xlu0 %v2819, 124
      %v2904 = vpop.permute.xlu0 %2903
      %2905 = vrot.lane.b32.xlu0 %v2820, 124
      %v2906 = vpop.permute.xlu0 %2905
      %2907 = vrot.lane.b32.xlu0 %v2821, 124
      %v2908 = vpop.permute.xlu0 %2907
      %2909 = vrot.lane.b32.xlu0 %v2822, 124
      %v2910 = vpop.permute.xlu0 %2909
      %2911 = vrot.lane.b32.xlu0 %v2823, 124
      %v2912 = vpop.permute.xlu0 %2911
      %2913 = vrot.lane.b32.xlu0 %v2824, 124
      %v2914 = vpop.permute.xlu0 %2913
      %2915 = vrot.lane.b32.xlu0 %v2825, 124
      %v2916 = vpop.permute.xlu0 %2915
      %2917 = vrot.lane.b32.xlu0 %v2826, 124
      %v2918 = vpop.permute.xlu0 %2917
      %2919 = vrot.lane.b32.xlu0 %v2827, 124
      %v2920 = vpop.permute.xlu0 %2919
      %2921 = vrot.lane.b32.xlu0 %v2828, 124
      %v2922 = vpop.permute.xlu0 %2921
      %2923 = vrot.lane.b32.xlu0 %v2829, 124
      %v2924 = vpop.permute.xlu0 %2923
      %2925 = vrot.lane.b32.xlu0 %v2830, 124
      %v2926 = vpop.permute.xlu0 %2925
      %v2959 = vmul.f32 %v2671, %v2864
      %v2960 = vmul.f32 %v2672, %v2866
      %v2961 = vmul.f32 %v2673, %v2868
      %v2962 = vmul.f32 %v2674, %v2870
      %v2963 = vmul.f32 %v2675, %v2872
      %v2964 = vmul.f32 %v2676, %v2874
      %v2965 = vmul.f32 %v2677, %v2876
      %v2966 = vmul.f32 %v2678, %v2878
      %v2967 = vmul.f32 %v2679, %v2880
      %v2968 = vmul.f32 %v2680, %v2882
      %v2969 = vmul.f32 %v2681, %v2884
      %v2970 = vmul.f32 %v2682, %v2886
      %v2971 = vmul.f32 %v2683, %v2888
      %v2972 = vmul.f32 %v2684, %v2890
      %v2973 = vmul.f32 %v2685, %v2892
      %v2974 = vmul.f32 %v2686, %v2894
      %v2975 = vmul.f32 %v2687, %v2896
      %v2976 = vmul.f32 %v2688, %v2898
      %v2977 = vmul.f32 %v2689, %v2900
      %v2978 = vmul.f32 %v2690, %v2902
      %v2979 = vmul.f32 %v2691, %v2904
      %v2980 = vmul.f32 %v2692, %v2906
      %v2981 = vmul.f32 %v2693, %v2908
      %v2982 = vmul.f32 %v2694, %v2910
      %v2983 = vmul.f32 %v2695, %v2912
      %v2984 = vmul.f32 %v2696, %v2914
      %v2985 = vmul.f32 %v2697, %v2916
      %v2986 = vmul.f32 %v2698, %v2918
      %v2987 = vmul.f32 %v2699, %v2920
      %v2988 = vmul.f32 %v2700, %v2922
      %v2989 = vmul.f32 %v2701, %v2924
      %v2990 = vmul.f32 %v2702, %v2926
      %v2991 = vld [vmem:[%s7] sm:$0xf]
      %v2992 = vld [vmem:[%s9] sm:$0x1]
      %v2994 = vlaneseq
      %v2995 = vshrl.u32 %v2994, 7
      %v2996 = vsub.s32 0, %v2995
      %v2997 = vrot.slane %v2992, %v2996
      %v3000 = vsel %vm676, %v2959, 0
      %v3003 = vsel %vm676, %v2960, 0
      %v3006 = vsel %vm676, %v2961, 0
      %v3009 = vsel %vm676, %v2962, 0
      %v3012 = vsel %vm676, %v2963, 0
      %v3015 = vsel %vm676, %v2964, 0
      %v3018 = vsel %vm676, %v2965, 0
      %v3021 = vsel %vm676, %v2966, 0
      %v3024 = vsel %vm676, %v2967, 0
      %v3027 = vsel %vm676, %v2968, 0
      %v3030 = vsel %vm676, %v2969, 0
      %v3033 = vsel %vm676, %v2970, 0
      %v3036 = vsel %vm676, %v2971, 0
      %v3039 = vsel %vm676, %v2972, 0
      %v3042 = vsel %vm676, %v2973, 0
      %v3045 = vsel %vm676, %v2974, 0
      %v3048 = vsel %vm676, %v2975, 0
      %v3051 = vsel %vm676, %v2976, 0
      %v3054 = vsel %vm676, %v2977, 0
      %v3057 = vsel %vm676, %v2978, 0
      %v3060 = vsel %vm676, %v2979, 0
      %v3063 = vsel %vm676, %v2980, 0
      %v3066 = vsel %vm676, %v2981, 0
      %v3069 = vsel %vm676, %v2982, 0
      %v3072 = vsel %vm676, %v2983, 0
      %v3075 = vsel %vm676, %v2984, 0
      %v3078 = vsel %vm676, %v2985, 0
      %v3081 = vsel %vm676, %v2986, 0
      %v3084 = vsel %vm676, %v2987, 0
      %v3087 = vsel %vm676, %v2988, 0
      %v3090 = vsel %vm676, %v2989, 0
      %v3093 = vsel %vm676, %v2990, 0
      %v3096 = vsel %vm1358, %v2991, 0
      %3098 = vmatprep.subr.mxu0 0.0
      %3099 = vmatpush1.msra.mxu0 %v3096
      %3100 = vmatprep.subr.mxu0 0.0
      %3101 = vmatpush1.msra.mxu0 0.0
      %3102 = vmatprep.subr.mxu0 0.0
      %3103 = vmatpush1.msra.mxu0 0.0
      %3104 = vmatprep.subr.mxu0 0.0
      %3105 = vmatpush1.msra.mxu0 0.0
      %3106 = vmatprep.subr.mxu0 0.0
      %3107 = vmatpush1.msra.mxu0 0.0
      %3108 = vmatprep.subr.mxu0 0.0
      %3109 = vmatpush1.msra.mxu0 0.0
      %3110 = vmatprep.subr.mxu0 0.0
      %3111 = vmatpush1.msra.mxu0 0.0
      %3112 = vmatprep.subr.mxu0 0.0
      %3113 = vmatpush1.msra.mxu0 0.0
      %3114 = vmatprep.subr.mxu0 0.0
      %3115 = vmatpush1.msra.mxu0 0.0
      %3116 = vmatprep.subr.mxu0 0.0
      %3117 = vmatpush1.msra.mxu0 0.0
      %3118 = vmatprep.subr.mxu0 0.0
      %3119 = vmatpush1.msra.mxu0 0.0
      %3120 = vmatprep.subr.mxu0 0.0
      %3121 = vmatpush1.msra.mxu0 0.0
      %3122 = vmatprep.subr.mxu0 0.0
      %3123 = vmatpush1.msra.mxu0 0.0
      %3124 = vmatprep.subr.mxu0 0.0
      %3125 = vmatpush1.msra.mxu0 0.0
      %3126 = vmatprep.subr.mxu0 0.0
      %3127 = vmatpush1.msra.mxu0 0.0
      %3128 = vmatprep.subr.mxu0 0.0
      %3129 = vmatpush1.msra.mxu0 0.0
      %3130 = vmatprep.subr.mxu0 0.0
      %3131 = vmatpush1.msra.mxu0 0.0
      %3132 = vmatprep.subr.mxu0 0.0
      %3133 = vmatpush1.msra.mxu0 0.0
      %3134 = vmatprep.subr.mxu0 0.0
      %3135 = vmatpush1.msra.mxu0 0.0
      %3136 = vmatprep.subr.mxu0 0.0
      %3137 = vmatpush1.msra.mxu0 0.0
      %3138 = vmatprep.subr.mxu0 0.0
      %3139 = vmatpush1.msra.mxu0 0.0
      %3140 = vmatprep.subr.mxu0 0.0
      %3141 = vmatpush1.msra.mxu0 0.0
      %3142 = vmatprep.subr.mxu0 0.0
      %3143 = vmatpush1.msra.mxu0 0.0
      %3144 = vmatprep.subr.mxu0 0.0
      %3145 = vmatpush1.msra.mxu0 0.0
      %3146 = vmatprep.subr.mxu0 0.0
      %3147 = vmatpush1.msra.mxu0 0.0
      %3148 = vmatprep.subr.mxu0 0.0
      %3149 = vmatpush1.msra.mxu0 0.0
      %3150 = vmatprep.subr.mxu0 0.0
      %3151 = vmatpush1.msra.mxu0 0.0
      %3152 = vmatprep.subr.mxu0 0.0
      %3153 = vmatpush1.msra.mxu0 0.0
      %3154 = vmatprep.subr.mxu0 0.0
      %3155 = vmatpush1.msra.mxu0 0.0
      %3156 = vmatprep.subr.mxu0 0.0
      %3157 = vmatpush1.msra.mxu0 0.0
      %3158 = vmatprep.subr.mxu0 0.0
      %3159 = vmatpush1.msra.mxu0 0.0
      %3160 = vmatprep.subr.mxu0 0.0
      %3161 = vmatpush1.msra.mxu0 0.0
      %3162 = vmatprep.mubr.f32.mxu0 0.0
      %3163 = vmatmul.mubr.f32.gmra.mrb[0].mxu0 %v3000
      %v3164 = vpop.f32.mrb[0].mxu0
      %v3165 = vadd.f32 %v2997, %v3164
      %v3166 = vpop.f32.mrb[0].mxu0
      %3167 = vmatprep.mubr.f32.mxu0 0.0
      %3168 = vmatmul.mubr.f32.gmra.mrb[0].mxu0 %v3003
      %v3169 = vpop.f32.mrb[0].mxu0
      %v3170 = vadd.f32 %v2997, %v3169
      %v3171 = vpop.f32.mrb[0].mxu0
      %3172 = vmatprep.mubr.f32.mxu0 0.0
      %3173 = vmatmul.mubr.f32.gmra.mrb[0].mxu0 %v3006
      %v3174 = vpop.f32.mrb[0].mxu0
      %v3175 = vadd.f32 %v2997, %v3174
      %v3176 = vpop.f32.mrb[0].mxu0
      %3177 = vmatprep.mubr.f32.mxu0 0.0
      %3178 = vmatmul.mubr.f32.gmra.mrb[0].mxu0 %v3009
      %v3179 = vpop.f32.mrb[0].mxu0
      %v3180 = vadd.f32 %v2997, %v3179
      %v3181 = vpop.f32.mrb[0].mxu0
      %3182 = vmatprep.mubr.f32.mxu0 0.0
      %3183 = vmatmul.mubr.f32.gmra.mrb[0].mxu0 %v3012
      %v3184 = vpop.f32.mrb[0].mxu0
      %v3185 = vadd.f32 %v2997, %v3184
      %v3186 = vpop.f32.mrb[0].mxu0
      %3187 = vmatprep.mubr.f32.mxu0 0.0
      %3188 = vmatmul.mubr.f32.gmra.mrb[0].mxu0 %v3015
      %v3189 = vpop.f32.mrb[0].mxu0
      %v3190 = vadd.f32 %v2997, %v3189
      %v3191 = vpop.f32.mrb[0].mxu0
      %3192 = vmatprep.mubr.f32.mxu0 0.0
      %3193 = vmatmul.mubr.f32.gmra.mrb[0].mxu0 %v3018
      %v3194 = vpop.f32.mrb[0].mxu0
      %v3195 = vadd.f32 %v2997, %v3194
      %v3196 = vpop.f32.mrb[0].mxu0
      %3197 = vmatprep.mubr.f32.mxu0 0.0
      %3198 = vmatmul.mubr.f32.gmra.mrb[0].mxu0 %v3021
      %v3199 = vpop.f32.mrb[0].mxu0
      %v3200 = vadd.f32 %v2997, %v3199
      %v3201 = vpop.f32.mrb[0].mxu0
      %3202 = vmatprep.mubr.f32.mxu0 0.0
      %3203 = vmatmul.mubr.f32.gmra.mrb[0].mxu0 %v3024
      %v3204 = vpop.f32.mrb[0].mxu0
      %v3205 = vadd.f32 %v2997, %v3204
      %v3206 = vpop.f32.mrb[0].mxu0
      %3207 = vmatprep.mubr.f32.mxu0 0.0
      %3208 = vmatmul.mubr.f32.gmra.mrb[0].mxu0 %v3027
      %v3209 = vpop.f32.mrb[0].mxu0
      %v3210 = vadd.f32 %v2997, %v3209
      %v3211 = vpop.f32.mrb[0].mxu0
      %3212 = vmatprep.mubr.f32.mxu0 0.0
      %3213 = vmatmul.mubr.f32.gmra.mrb[0].mxu0 %v3030
      %v3214 = vpop.f32.mrb[0].mxu0
      %v3215 = vadd.f32 %v2997, %v3214
      %v3216 = vpop.f32.mrb[0].mxu0
      %3217 = vmatprep.mubr.f32.mxu0 0.0
      %3218 = vmatmul.mubr.f32.gmra.mrb[0].mxu0 %v3033
      %v3219 = vpop.f32.mrb[0].mxu0
      %v3220 = vadd.f32 %v2997, %v3219
      %v3221 = vpop.f32.mrb[0].mxu0
      %3222 = vmatprep.mubr.f32.mxu0 0.0
      %3223 = vmatmul.mubr.f32.gmra.mrb[0].mxu0 %v3036
      %v3224 = vpop.f32.mrb[0].mxu0
      %v3225 = vadd.f32 %v2997, %v3224
      %v3226 = vpop.f32.mrb[0].mxu0
      %3227 = vmatprep.mubr.f32.mxu0 0.0
      %3228 = vmatmul.mubr.f32.gmra.mrb[0].mxu0 %v3039
      %v3229 = vpop.f32.mrb[0].mxu0
      %v3230 = vadd.f32 %v2997, %v3229
      %v3231 = vpop.f32.mrb[0].mxu0
      %3232 = vmatprep.mubr.f32.mxu0 0.0
      %3233 = vmatmul.mubr.f32.gmra.mrb[0].mxu0 %v3042
      %v3234 = vpop.f32.mrb[0].mxu0
      %v3235 = vadd.f32 %v2997, %v3234
      %v3236 = vpop.f32.mrb[0].mxu0
      %3237 = vmatprep.mubr.f32.mxu0 0.0
      %3238 = vmatmul.mubr.f32.gmra.mrb[0].mxu0 %v3045
      %v3239 = vpop.f32.mrb[0].mxu0
      %v3240 = vadd.f32 %v2997, %v3239
      %v3241 = vpop.f32.mrb[0].mxu0
      %3242 = vmatprep.mubr.f32.mxu0 0.0
      %3243 = vmatmul.mubr.f32.gmra.mrb[0].mxu0 %v3048
      %v3244 = vpop.f32.mrb[0].mxu0
      %v3245 = vadd.f32 %v2997, %v3244
      %v3246 = vpop.f32.mrb[0].mxu0
      %3247 = vmatprep.mubr.f32.mxu0 0.0
      %3248 = vmatmul.mubr.f32.gmra.mrb[0].mxu0 %v3051
      %v3249 = vpop.f32.mrb[0].mxu0
      %v3250 = vadd.f32 %v2997, %v3249
      %v3251 = vpop.f32.mrb[0].mxu0
      %3252 = vmatprep.mubr.f32.mxu0 0.0
      %3253 = vmatmul.mubr.f32.gmra.mrb[0].mxu0 %v3054
      %v3254 = vpop.f32.mrb[0].mxu0
      %v3255 = vadd.f32 %v2997, %v3254
      %v3256 = vpop.f32.mrb[0].mxu0
      %3257 = vmatprep.mubr.f32.mxu0 0.0
      %3258 = vmatmul.mubr.f32.gmra.mrb[0].mxu0 %v3057
      %v3259 = vpop.f32.mrb[0].mxu0
      %v3260 = vadd.f32 %v2997, %v3259
      %v3261 = vpop.f32.mrb[0].mxu0
      %3262 = vmatprep.mubr.f32.mxu0 0.0
      %3263 = vmatmul.mubr.f32.gmra.mrb[0].mxu0 %v3060
      %v3264 = vpop.f32.mrb[0].mxu0
      %v3265 = vadd.f32 %v2997, %v3264
      %v3266 = vpop.f32.mrb[0].mxu0
      %3267 = vmatprep.mubr.f32.mxu0 0.0
      %3268 = vmatmul.mubr.f32.gmra.mrb[0].mxu0 %v3063
      %v3269 = vpop.f32.mrb[0].mxu0
      %v3270 = vadd.f32 %v2997, %v3269
      %v3271 = vpop.f32.mrb[0].mxu0
      %3272 = vmatprep.mubr.f32.mxu0 0.0
      %3273 = vmatmul.mubr.f32.gmra.mrb[0].mxu0 %v3066
      %v3274 = vpop.f32.mrb[0].mxu0
      %v3275 = vadd.f32 %v2997, %v3274
      %v3276 = vpop.f32.mrb[0].mxu0
      %3277 = vmatprep.mubr.f32.mxu0 0.0
      %3278 = vmatmul.mubr.f32.gmra.mrb[0].mxu0 %v3069
      %v3279 = vpop.f32.mrb[0].mxu0
      %v3280 = vadd.f32 %v2997, %v3279
      %v3281 = vpop.f32.mrb[0].mxu0
      %3282 = vmatprep.mubr.f32.mxu0 0.0
      %3283 = vmatmul.mubr.f32.gmra.mrb[0].mxu0 %v3072
      %v3284 = vpop.f32.mrb[0].mxu0
      %v3285 = vadd.f32 %v2997, %v3284
      %v3286 = vpop.f32.mrb[0].mxu0
      %3287 = vmatprep.mubr.f32.mxu0 0.0
      %3288 = vmatmul.mubr.f32.gmra.mrb[0].mxu0 %v3075
      %v3289 = vpop.f32.mrb[0].mxu0
      %v3290 = vadd.f32 %v2997, %v3289
      %v3291 = vpop.f32.mrb[0].mxu0
      %3292 = vmatprep.mubr.f32.mxu0 0.0
      %3293 = vmatmul.mubr.f32.gmra.mrb[0].mxu0 %v3078
      %v3294 = vpop.f32.mrb[0].mxu0
      %v3295 = vadd.f32 %v2997, %v3294
      %v3296 = vpop.f32.mrb[0].mxu0
      %3297 = vmatprep.mubr.f32.mxu0 0.0
      %3298 = vmatmul.mubr.f32.gmra.mrb[0].mxu0 %v3081
      %v3299 = vpop.f32.mrb[0].mxu0
      %v3300 = vadd.f32 %v2997, %v3299
      %v3301 = vpop.f32.mrb[0].mxu0
      %3302 = vmatprep.mubr.f32.mxu0 0.0
      %3303 = vmatmul.mubr.f32.gmra.mrb[0].mxu0 %v3084
      %v3304 = vpop.f32.mrb[0].mxu0
      %v3305 = vadd.f32 %v2997, %v3304
      %v3306 = vpop.f32.mrb[0].mxu0
      %3307 = vmatprep.mubr.f32.mxu0 0.0
      %3308 = vmatmul.mubr.f32.gmra.mrb[0].mxu0 %v3087
      %v3309 = vpop.f32.mrb[0].mxu0
      %v3310 = vadd.f32 %v2997, %v3309
      %v3311 = vpop.f32.mrb[0].mxu0
      %3312 = vmatprep.mubr.f32.mxu0 0.0
      %3313 = vmatmul.mubr.f32.gmra.mrb[0].mxu0 %v3090
      %v3314 = vpop.f32.mrb[0].mxu0
      %v3315 = vadd.f32 %v2997, %v3314
      %v3316 = vpop.f32.mrb[0].mxu0
      %3317 = vmatprep.mubr.f32.mxu0 0.0
      %3318 = vmatmul.mubr.f32.gmra.mrb[0].mxu0 %v3093
      %v3319 = vpop.f32.mrb[0].mxu0
      %v3320 = vadd.f32 %v2997, %v3319
      %v3321 = vpop.f32.mrb[0].mxu0
      %3322 = vdwg.mxu0
      %v3323 = vld [vmem:[%s475] sm:$0xff]
      %v3324 = vld [vmem:[%s475 + $0x8] sm:$0xff]
      %v3325 = vld [vmem:[%s475 + $0x10] sm:$0xff]
      %v3326 = vld [vmem:[%s475 + $0x18] sm:$0xff]
      %v3327 = vld [vmem:[%s475 + $0x20] sm:$0xff]
      %v3328 = vld [vmem:[%s475 + $0x28] sm:$0xff]
      %v3329 = vld [vmem:[%s475 + $0x30] sm:$0xff]
      %v3330 = vld [vmem:[%s475 + $0x38] sm:$0xff]
      %v3331 = vld [vmem:[%s475 + $0x40] sm:$0xff]
      %v3332 = vld [vmem:[%s475 + $0x48] sm:$0xff]
      %v3333 = vld [vmem:[%s475 + $0x50] sm:$0xff]
      %v3334 = vld [vmem:[%s475 + $0x58] sm:$0xff]
      %v3335 = vld [vmem:[%s475 + $0x60] sm:$0xff]
      %v3336 = vld [vmem:[%s475 + $0x68] sm:$0xff]
      %v3337 = vld [vmem:[%s475 + $0x70] sm:$0xff]
      %v3338 = vld [vmem:[%s475 + $0x78] sm:$0xff]
      %v3339 = vld [vmem:[%s475 + $0x80] sm:$0xff]
      %v3340 = vld [vmem:[%s475 + $0x88] sm:$0xff]
      %v3341 = vld [vmem:[%s475 + $0x90] sm:$0xff]
      %v3342 = vld [vmem:[%s475 + $0x98] sm:$0xff]
      %v3343 = vld [vmem:[%s475 + $0xa0] sm:$0xff]
      %v3344 = vld [vmem:[%s475 + $0xa8] sm:$0xff]
      %v3345 = vld [vmem:[%s475 + $0xb0] sm:$0xff]
      %v3346 = vld [vmem:[%s475 + $0xb8] sm:$0xff]
      %v3347 = vld [vmem:[%s475 + $0xc0] sm:$0xff]
      %v3348 = vld [vmem:[%s475 + $0xc8] sm:$0xff]
      %v3349 = vld [vmem:[%s475 + $0xd0] sm:$0xff]
      %v3350 = vld [vmem:[%s475 + $0xd8] sm:$0xff]
      %v3351 = vld [vmem:[%s475 + $0xe0] sm:$0xff]
      %v3352 = vld [vmem:[%s475 + $0xe8] sm:$0xff]
      %v3353 = vld [vmem:[%s475 + $0xf0] sm:$0xff]
      %v3354 = vld [vmem:[%s475 + $0xf8] sm:$0xff]
      %v3355 = vadd.f32 %v3165, %v3323
      %v3356 = vadd.f32 %v3170, %v3324
      %v3357 = vadd.f32 %v3175, %v3325
      %v3358 = vadd.f32 %v3180, %v3326
      %v3359 = vadd.f32 %v3185, %v3327
      %v3360 = vadd.f32 %v3190, %v3328
      %v3361 = vadd.f32 %v3195, %v3329
      %v3362 = vadd.f32 %v3200, %v3330
      %v3363 = vadd.f32 %v3205, %v3331
      %v3364 = vadd.f32 %v3210, %v3332
      %v3365 = vadd.f32 %v3215, %v3333
      %v3366 = vadd.f32 %v3220, %v3334
      %v3367 = vadd.f32 %v3225, %v3335
      %v3368 = vadd.f32 %v3230, %v3336
      %v3369 = vadd.f32 %v3235, %v3337
      %v3370 = vadd.f32 %v3240, %v3338
      %v3371 = vadd.f32 %v3245, %v3339
      %v3372 = vadd.f32 %v3250, %v3340
      %v3373 = vadd.f32 %v3255, %v3341
      %v3374 = vadd.f32 %v3260, %v3342
      %v3375 = vadd.f32 %v3265, %v3343
      %v3376 = vadd.f32 %v3270, %v3344
      %v3377 = vadd.f32 %v3275, %v3345
      %v3378 = vadd.f32 %v3280, %v3346
      %v3379 = vadd.f32 %v3285, %v3347
      %v3380 = vadd.f32 %v3290, %v3348
      %v3381 = vadd.f32 %v3295, %v3349
      %v3382 = vadd.f32 %v3300, %v3350
      %v3383 = vadd.f32 %v3305, %v3351
      %v3384 = vadd.f32 %v3310, %v3352
      %v3385 = vadd.f32 %v3315, %v3353
      %v3386 = vadd.f32 %v3320, %v3354
      %3387 = vst.msk [vmem:[%s492] sm:$0xff] %vm676, %v2240
      %3388 = vst.msk [vmem:[%s492 + $0x8] sm:$0xff] %vm676, %v2241
      %3389 = vst.msk [vmem:[%s492 + $0x10] sm:$0xff] %vm676, %v2242
      %3390 = vst.msk [vmem:[%s492 + $0x18] sm:$0xff] %vm676, %v2243
      %3391 = vst.msk [vmem:[%s492 + $0x20] sm:$0xff] %vm676, %v2244
      %3392 = vst.msk [vmem:[%s492 + $0x28] sm:$0xff] %vm676, %v2245
      %3393 = vst.msk [vmem:[%s492 + $0x30] sm:$0xff] %vm676, %v2246
      %3394 = vst.msk [vmem:[%s492 + $0x38] sm:$0xff] %vm676, %v2247
      %3395 = vst.msk [vmem:[%s492 + $0x40] sm:$0xff] %vm676, %v2248
      %3396 = vst.msk [vmem:[%s492 + $0x48] sm:$0xff] %vm676, %v2249
      %3397 = vst.msk [vmem:[%s492 + $0x50] sm:$0xff] %vm676, %v2250
      %3398 = vst.msk [vmem:[%s492 + $0x58] sm:$0xff] %vm676, %v2251
      %3399 = vst.msk [vmem:[%s492 + $0x60] sm:$0xff] %vm676, %v2252
      %3400 = vst.msk [vmem:[%s492 + $0x68] sm:$0xff] %vm676, %v2253
      %3401 = vst.msk [vmem:[%s492 + $0x70] sm:$0xff] %vm676, %v2254
      %3402 = vst.msk [vmem:[%s492 + $0x78] sm:$0xff] %vm676, %v2255
      %3403 = vst.msk [vmem:[%s492 + $0x80] sm:$0xff] %vm676, %v2256
      %3404 = vst.msk [vmem:[%s492 + $0x88] sm:$0xff] %vm676, %v2257
      %3405 = vst.msk [vmem:[%s492 + $0x90] sm:$0xff] %vm676, %v2258
      %3406 = vst.msk [vmem:[%s492 + $0x98] sm:$0xff] %vm676, %v2259
      %3407 = vst.msk [vmem:[%s492 + $0xa0] sm:$0xff] %vm676, %v2260
      %3408 = vst.msk [vmem:[%s492 + $0xa8] sm:$0xff] %vm676, %v2261
      %3409 = vst.msk [vmem:[%s492 + $0xb0] sm:$0xff] %vm676, %v2262
      %3410 = vst.msk [vmem:[%s492 + $0xb8] sm:$0xff] %vm676, %v2263
      %3411 = vst.msk [vmem:[%s492 + $0xc0] sm:$0xff] %vm676, %v2264
      %3412 = vst.msk [vmem:[%s492 + $0xc8] sm:$0xff] %vm676, %v2265
      %3413 = vst.msk [vmem:[%s492 + $0xd0] sm:$0xff] %vm676, %v2266
      %3414 = vst.msk [vmem:[%s492 + $0xd8] sm:$0xff] %vm676, %v2267
      %3415 = vst.msk [vmem:[%s492 + $0xe0] sm:$0xff] %vm676, %v2268
      %3416 = vst.msk [vmem:[%s492 + $0xe8] sm:$0xff] %vm676, %v2269
      %3417 = vst.msk [vmem:[%s492 + $0xf0] sm:$0xff] %vm676, %v2270
      %3418 = vst.msk [vmem:[%s492 + $0xf8] sm:$0xff] %vm676, %v2271
      %3419 = vst.msk [vmem:[%s503] sm:$0xff] %vm676, %v3355
      %3420 = vst.msk [vmem:[%s503 + $0x8] sm:$0xff] %vm676, %v3356
      %3421 = vst.msk [vmem:[%s503 + $0x10] sm:$0xff] %vm676, %v3357
      %3422 = vst.msk [vmem:[%s503 + $0x18] sm:$0xff] %vm676, %v3358
      %3423 = vst.msk [vmem:[%s503 + $0x20] sm:$0xff] %vm676, %v3359
      %3424 = vst.msk [vmem:[%s503 + $0x28] sm:$0xff] %vm676, %v3360
      %3425 = vst.msk [vmem:[%s503 + $0x30] sm:$0xff] %vm676, %v3361
      %3426 = vst.msk [vmem:[%s503 + $0x38] sm:$0xff] %vm676, %v3362
      %3427 = vst.msk [vmem:[%s503 + $0x40] sm:$0xff] %vm676, %v3363
      %3428 = vst.msk [vmem:[%s503 + $0x48] sm:$0xff] %vm676, %v3364
      %3429 = vst.msk [vmem:[%s503 + $0x50] sm:$0xff] %vm676, %v3365
      %3430 = vst.msk [vmem:[%s503 + $0x58] sm:$0xff] %vm676, %v3366
      %3431 = vst.msk [vmem:[%s503 + $0x60] sm:$0xff] %vm676, %v3367
      %3432 = vst.msk [vmem:[%s503 + $0x68] sm:$0xff] %vm676, %v3368
      %3433 = vst.msk [vmem:[%s503 + $0x70] sm:$0xff] %vm676, %v3369
      %3434 = vst.msk [vmem:[%s503 + $0x78] sm:$0xff] %vm676, %v3370
      %3435 = vst.msk [vmem:[%s503 + $0x80] sm:$0xff] %vm676, %v3371
      %3436 = vst.msk [vmem:[%s503 + $0x88] sm:$0xff] %vm676, %v3372
      %3437 = vst.msk [vmem:[%s503 + $0x90] sm:$0xff] %vm676, %v3373
      %3438 = vst.msk [vmem:[%s503 + $0x98] sm:$0xff] %vm676, %v3374
      %3439 = vst.msk [vmem:[%s503 + $0xa0] sm:$0xff] %vm676, %v3375
      %3440 = vst.msk [vmem:[%s503 + $0xa8] sm:$0xff] %vm676, %v3376
      %3441 = vst.msk [vmem:[%s503 + $0xb0] sm:$0xff] %vm676, %v3377
      %3442 = vst.msk [vmem:[%s503 + $0xb8] sm:$0xff] %vm676, %v3378
      %3443 = vst.msk [vmem:[%s503 + $0xc0] sm:$0xff] %vm676, %v3379
      %3444 = vst.msk [vmem:[%s503 + $0xc8] sm:$0xff] %vm676, %v3380
      %3445 = vst.msk [vmem:[%s503 + $0xd0] sm:$0xff] %vm676, %v3381
      %3446 = vst.msk [vmem:[%s503 + $0xd8] sm:$0xff] %vm676, %v3382
      %3447 = vst.msk [vmem:[%s503 + $0xe0] sm:$0xff] %vm676, %v3383
      %3448 = vst.msk [vmem:[%s503 + $0xe8] sm:$0xff] %vm676, %v3384
      %3449 = vst.msk [vmem:[%s503 + $0xf0] sm:$0xff] %vm676, %v3385
      %3450 = vst.msk [vmem:[%s503 + $0xf8] sm:$0xff] %vm676, %v3386
      %s3451 = smul.u32 16, %s28
      %p3452 = scmp.lt.s32.totalorder %s27, 1
      %s3453 = scalar_select %p3452, %s27, 1
      %p3454 = scmp.lt.s32.totalorder %s3451, 15
      %s3455 = scalar_select %p3454, %s3451, 15
      %s3456 = smul.addr %s3455, 2
      %s3457 = smul.addr %s3453, 32
      %s3458 = sadd.s32 %s3456, %s3457
      %s3459 = smul.addr %s3458, 8
      %s3460 = scalar_lea.vmem %s10, %s3459
      %s3461 = smul.u32 16, %s28
      %p3462 = scmp.lt.s32.totalorder %s27, 1
      %s3463 = scalar_select %p3462, %s27, 1
      %p3464 = scmp.lt.s32.totalorder %s3461, 15
      %s3465 = scalar_select %p3464, %s3461, 15
      %s3466 = smul.addr %s3465, 2
      %s3467 = smul.addr %s3463, 32
      %s3468 = sadd.s32 %s3466, %s3467
      %s3469 = smul.addr %s3468, 8
      %s3470 = scalar_lea.vmem %s11, %s3469
      // Predicated region
      $region65: #{tpu_custom_call.1} parent=59 // pred_check
        %p3471 = pneg %p287
      $region66: #{tpu_custom_call.1} parent=59 // pred_check_branch
        %3473 = sbr.rel (%p3471) target = $region68
      $region67: #{tpu_custom_call.1} parent=59 // pred_region
        %s3474 = smul.u32 16, %s28
      $region68: #{tpu_custom_call.1} parent=59 // pred_fallthru
        _
      // Predicated region
      $region69: #{tpu_custom_call.1} parent=59 // pred_check
        %p3475 = pneg %p315
      $region70: #{tpu_custom_call.1} parent=59 // pred_check_branch
        %3477 = sbr.rel (%p3475) target = $region72
      $region71: #{tpu_custom_call.1} parent=59 // pred_region
        %s3478 = smul.u32 16, %s28
      $region72: #{tpu_custom_call.1} parent=59 // pred_fallthru
        _
    $region60: #{tpu_custom_call.1} parent=5 // pred_fallthru
      _
    %p3479 = scmp.le.s32.totalorder 2, %s18
    // Predicated region
    $region73: #{tpu_custom_call.1} parent=5 // pred_check
      %p3480 = pneg %p3479
    $region74: #{tpu_custom_call.1} parent=5 // pred_check_branch
      %3482 = sbr.rel (%p3480) target = $region76
    $region75: #{tpu_custom_call.1} parent=5 // pred_region
      %s3483 = ssub.s32 %s18, 2
      // Predicated region
      $region77: #{tpu_custom_call.1} parent=75 // pred_check
        %p3484 = pneg %p293
      $region78: #{tpu_custom_call.1} parent=75 // pred_check_branch
        %3486 = sbr.rel (%p3484) target = $region80
      $region79: #{tpu_custom_call.1} parent=75 // pred_region
        %s3487 = smul.u32 16, %s30
        %p3488 = scmp.lt.s32.totalorder %s29, 1
        %s3489 = scalar_select %p3488, %s29, 1
        %p3490 = scmp.lt.s32.totalorder %s3487, 15
        %s3491 = scalar_select %p3490, %s3487, 15
        %s3492 = smul.addr %s3491, 2
        %s3493 = smul.addr %s3489, 32
        %s3494 = sadd.s32 %s3492, %s3493
        %s3495 = smul.addr %s3494, 8
        %s3496 = scalar_lea.vmem %s10, %s3495
      $region80: #{tpu_custom_call.1} parent=75 // pred_fallthru
        _
      // Predicated region
      $region81: #{tpu_custom_call.1} parent=75 // pred_check
        %p3497 = pneg %p321
      $region82: #{tpu_custom_call.1} parent=75 // pred_check_branch
        %3499 = sbr.rel (%p3497) target = $region84
      $region83: #{tpu_custom_call.1} parent=75 // pred_region
        %s3500 = smul.u32 16, %s30
        %p3501 = scmp.lt.s32.totalorder %s29, 1
        %s3502 = scalar_select %p3501, %s29, 1
        %p3503 = scmp.lt.s32.totalorder %s3500, 15
        %s3504 = scalar_select %p3503, %s3500, 15
        %s3505 = smul.addr %s3504, 2
        %s3506 = smul.addr %s3502, 32
        %s3507 = sadd.s32 %s3505, %s3506
        %s3508 = smul.addr %s3507, 8
        %s3509 = scalar_lea.vmem %s11, %s3508
      $region84: #{tpu_custom_call.1} parent=75 // pred_fallthru
        _
    $region76: #{tpu_custom_call.1} parent=5 // pred_fallthru
      _
  $region6: #{tpu_custom_call.1} parent=0 // loop_footer
    %s22 = sadd.s32 1, %s18
  $region7: #{tpu_custom_call.1} parent=0 // loop_footer_branch
    %17 = sbr.rel target = $region3
  $region8: #{tpu_custom_call.1} parent=0 // loop_exit
    _

</llo_original>
